<compile_context>
chip_gen: v5e
topology: v5e:2x2
jax: 0.10.0
libtpu: 0.0.40
codegen_flags: <defaults>
</compile_context>

<pallas_src>
import math

import jax
import jax.numpy as jnp
import numpy as np
from jax import lax
from jax.experimental import pallas as pl
from jax.experimental.pallas import tpu as pltpu

# ---------------- config (small, consistent with the module) ----------------
N_LAYERS = 2
D_MODEL  = 128
N_HEADS  = 4
D_K      = D_MODEL // N_HEADS
D_FF     = 256
BATCH    = 2
SEQ      = 8      # target sequence length
MEM_SEQ  = 8      # memory (encoder) sequence length
EPS      = 1e-5   # nn.LayerNorm default eps
NEG      = -1.0e9 # masked_fill value used by the module

BF16 = jnp.bfloat16
F32  = jnp.float32


# ---------------------------- in-kernel helpers -----------------------------
def _bdot(a, b):
    """MXU matmul: bf16 operands, f32 accumulation."""
    return jnp.dot(a.astype(BF16), b.astype(BF16), preferred_element_type=F32)


def _layernorm(x, g, b):
    mu = jnp.mean(x, axis=-1, keepdims=True)
    var = jnp.mean(jnp.square(x - mu), axis=-1, keepdims=True)
    return (x - mu) * lax.rsqrt(var + EPS) * g + b


def _mha(xq3, xkv3, bias, wq, bq, wk, bk, wv, bv, wo, bo):
    """Multi-head attention on a (B, S, D) block.

    xq3: (B, Sq, D) f32, xkv3: (B, Sk, D) f32, bias: (Sq, Sk) additive mask.
    Weights are bf16 stored (in, out); biases are f32 (1, D).
    Head outputs are folded into the output projection (no concatenate):
        out = sum_h softmax(q_h k_h^T / sqrt(dk) + bias) v_h @ Wo[h*dk:(h+1)*dk]
    so every MXU output is lane-dense (*, D).
    """
    B, Sq, D = xq3.shape
    Sk = xkv3.shape[1]
    dk = D // N_HEADS
    scale = 1.0 / math.sqrt(dk)

    xq2  = xq3.reshape(B * Sq, D)
    xkv2 = xkv3.reshape(B * Sk, D)
    q = _bdot(xq2, wq) + bq                 # (B*Sq, D) f32
    k = _bdot(xkv2, wk) + bk                # (B*Sk, D) f32
    v = _bdot(xkv2, wv) + bv                # (B*Sk, D) f32

    q3 = q.reshape(B, Sq, D)
    k3 = k.reshape(B, Sk, D)
    v3 = v.reshape(B, Sk, D)

    out = jnp.zeros((B * Sq, D), F32)
    for h in range(N_HEADS):
        sl = slice(h * dk, (h + 1) * dk)
        qh = q3[..., sl].astype(BF16)       # (B, Sq, dk)
        kh = k3[..., sl].astype(BF16)
        vh = v3[..., sl].astype(BF16)
        s = jnp.einsum("bqd,bkd->bqk", qh, kh,
                       preferred_element_type=F32) * scale + bias
        s = s - jnp.max(s, axis=-1, keepdims=True)
        p = jnp.exp(s)
        p = p / jnp.sum(p, axis=-1, keepdims=True)   # exact softmax denom
        oh = jnp.einsum("bqk,bkd->bqd", p.astype(BF16), vh,
                        preferred_element_type=F32)             # (B, Sq, dk)
        out = out + _bdot(oh.reshape(B * Sq, dk), wo[sl, :])     # lane-dense
    return out + bo


# --------------------------------- kernel -----------------------------------
def decoder_stack_kernel(
    # inputs
    y_ref, mem_ref, tgt_bias_ref, src_bias_ref,
    ln1_g, ln1_b, ln2_g, ln2_b, ln3_g, ln3_b,
    sa_wq, sa_bq, sa_wk, sa_bk, sa_wv, sa_bv, sa_wo, sa_bo,
    ca_wq, ca_bq, ca_wk, ca_bk, ca_wv, ca_bv, ca_wo, ca_bo,
    ff_w1, ff_b1, ff_w2, ff_b2,
    fn_g, fn_b,
    # output (also the VMEM-resident layer carry: block index constant over l)
    out_ref,
):
    layer = pl.program_id(0)
    last = pl.num_programs(0) - 1
    B, S, D = y_ref.shape

    @pl.when(layer == 0)
    def _():
        out_ref[...] = y_ref[...]

    y2 = out_ref[...].reshape(B * S, D)        # (B*S, D) f32 running activation
    mem3 = mem_ref[...]
    tgt_bias = tgt_bias_ref[...]
    src_bias = src_bias_ref[...]

    # ---- self-attention block (residual adds the *normed* y, per module) ----
    yn = _layernorm(y2, ln1_g[0], ln1_b[0])
    yn3 = yn.reshape(B, S, D)
    attn = _mha(yn3, yn3, tgt_bias,
                sa_wq[0], sa_bq[0], sa_wk[0], sa_bk[0],
                sa_wv[0], sa_bv[0], sa_wo[0], sa_bo[0])
    y2 = yn + attn                              # dropout_1 (p=0.0) -> identity

    # ---- cross-attention block ----
    yn = _layernorm(y2, ln2_g[0], ln2_b[0])
    attn = _mha(yn.reshape(B, S, D), mem3, src_bias,
                ca_wq[0], ca_bq[0], ca_wk[0], ca_bk[0],
                ca_wv[0], ca_bv[0], ca_wo[0], ca_bo[0])
    y2 = yn + attn                              # dropout_2 -> identity

    # ---- position-wise feed-forward ----
    yn = _layernorm(y2, ln3_g[0], ln3_b[0])
    h = jnp.maximum(_bdot(yn, ff_w1[0]) + ff_b1[0], 0.0)
    y2 = yn + _bdot(h, ff_w2[0]) + ff_b2[0]     # dropout_3 -> identity

    @pl.when(layer != last)
    def _():
        out_ref[...] = y2.reshape(B, S, D)

    @pl.when(layer == last)
    def _():
        out_ref[...] = _layernorm(y2, fn_g[...], fn_b[...]).reshape(B, S, D)


_PER_LAYER = [
    "ln1_g", "ln1_b", "ln2_g", "ln2_b", "ln3_g", "ln3_b",
    "sa_wq", "sa_bq", "sa_wk", "sa_bk", "sa_wv", "sa_bv", "sa_wo", "sa_bo",
    "ca_wq", "ca_bq", "ca_wk", "ca_bk", "ca_wv", "ca_bv", "ca_wo", "ca_bo",
    "ff_w1", "ff_b1", "ff_w2", "ff_b2",
]


# -------------------------------- wrapper -----------------------------------
def transformer_decoder(y, memory, tgt_mask, src_mask, params):
    B, S, D = y.shape
    SM = memory.shape[1]
    L = params["ln1_g"].shape[0]

    # Additive mask bias computed once (hoisted out of the per-head loop).
    tgt_bias = jnp.where(tgt_mask == 0, NEG, 0.0).astype(F32)
    src_bias = jnp.where(src_mask == 0, NEG, 0.0).astype(F32)

    def stacked_spec(name):
        shp = params[name].shape                        # (L, a, b)
        return pl.BlockSpec((1,) + shp[1:], lambda l: (l, 0, 0))

    in_specs = (
        [pl.BlockSpec((B, S, D), lambda l: (0, 0, 0)),   # y         (resident)
         pl.BlockSpec((B, SM, D), lambda l: (0, 0, 0)),  # memory    (resident)
         pl.BlockSpec((S, S), lambda l: (0, 0)),         # tgt bias  (resident)
         pl.BlockSpec((S, SM), lambda l: (0, 0))]        # src bias  (resident)
        + [stacked_spec(n) for n in _PER_LAYER]          # per-layer params
        + [pl.BlockSpec((1, D), lambda l: (0, 0)),        # final norm gamma
           pl.BlockSpec((1, D), lambda l: (0, 0))]        # final norm beta
    )
    out_spec = pl.BlockSpec((B, S, D), lambda l: (0, 0, 0))

    operands = ([y, memory, tgt_bias, src_bias]
                + [params[n] for n in _PER_LAYER]
                + [params["fn_g"], params["fn_b"]])

    return pl.pallas_call(
        decoder_stack_kernel,
        out_shape=jax.ShapeDtypeStruct((B, S, D), F32),
        grid_spec=pltpu.PrefetchScalarGridSpec(
            num_scalar_prefetch=0,
            grid=(L,),                       # layer carry only; batch is in-block
            in_specs=in_specs,
            out_specs=out_spec,
        ),
        compiler_params=pltpu.CompilerParams(
            dimension_semantics=("arbitrary",)),
    )(*operands)


# ----------------------- deterministic parameter init -----------------------
def init_params(key):
    L, D, F = N_LAYERS, D_MODEL, D_FF
    keys = iter(jax.random.split(key, 64))
    nrm = lambda k, shape, s: s * jax.random.normal(k, shape, F32)
    xav = math.sqrt(2.0 / (D + D))          # xavier_normal_ for attention weights
    p = {}
    for nm in ("ln1", "ln2", "ln3"):
        p[nm + "_g"] = jnp.ones((L, 1, D), F32) + nrm(next(keys), (L, 1, D), 0.02)
        p[nm + "_b"] = nrm(next(keys), (L, 1, D), 0.02)
    for pre in ("sa", "ca"):
        for wn in ("wq", "wk", "wv", "wo"):
            p[f"{pre}_{wn}"] = nrm(next(keys), (L, D, D), xav).astype(BF16)
        for bn in ("bq", "bk", "bv", "bo"):
            p[f"{pre}_{bn}"] = nrm(next(keys), (L, 1, D), 1.0 / math.sqrt(D))
    p["ff_w1"] = nrm(next(keys), (L, D, F), 1.0 / math.sqrt(D)).astype(BF16)
    p["ff_b1"] = nrm(next(keys), (L, 1, F), 1.0 / math.sqrt(D))
    p["ff_w2"] = nrm(next(keys), (L, F, D), 1.0 / math.sqrt(F)).astype(BF16)
    p["ff_b2"] = nrm(next(keys), (L, 1, D), 1.0 / math.sqrt(F))
    p["fn_g"] = jnp.ones((1, D), F32)
    p["fn_b"] = jnp.zeros((1, D), F32)
    return p


# ----------------------------- pure-JAX reference ----------------------------
def reference_decoder(y, memory, tgt_mask, src_mask, params):
    """Faithful decoder forward (standard head reshape + concat pathway).
    Matmul operands are cast to bf16 with f32 accumulation, matching the
    kernel's MXU-native precision."""
    H, DK = N_HEADS, D_K

    def bmm(a, b, eq):
        return jnp.einsum(eq, a.astype(BF16), b.astype(BF16),
                          preferred_element_type=F32)

    def layernorm(x, g, b):
        mu = jnp.mean(x, -1, keepdims=True)
        var = jnp.mean(jnp.square(x - mu), -1, keepdims=True)
        return (x - mu) * lax.rsqrt(var + EPS) * g + b

    def mha(xq, xkv, mask, wq, bq, wk, bk, wv, bv, wo, bo):
        B, Sq, D = xq.shape
        Sk = xkv.shape[1]
        q = (bmm(xq, wq, "bsd,de->bse") + bq).reshape(B, Sq, H, DK).transpose(0, 2, 1, 3)
        k = (bmm(xkv, wk, "bsd,de->bse") + bk).reshape(B, Sk, H, DK).transpose(0, 2, 1, 3)
        v = (bmm(xkv, wv, "bsd,de->bse") + bv).reshape(B, Sk, H, DK).transpose(0, 2, 1, 3)
        scores = bmm(q, k, "bhqd,bhkd->bhqk") / math.sqrt(DK)
        scores = jnp.where(mask[None, None] == 0, NEG, scores)
        p = jax.nn.softmax(scores, axis=-1)
        o = bmm(p, v, "bhqk,bhkd->bhqd").transpose(0, 2, 1, 3).reshape(B, Sq, D)
        return bmm(o, wo, "bsd,de->bse") + bo

    for l in range(N_LAYERS):
        g = lambda n: params[n][l]
        y = layernorm(y, g("ln1_g")[0], g("ln1_b")[0])
        y = y + mha(y, y, tgt_mask,
                    g("sa_wq"), g("sa_bq")[0], g("sa_wk"), g("sa_bk")[0],
                    g("sa_wv"), g("sa_bv")[0], g("sa_wo"), g("sa_bo")[0])
        y = layernorm(y, g("ln2_g")[0], g("ln2_b")[0])
        y = y + mha(y, memory, src_mask,
                    g("ca_wq"), g("ca_bq")[0], g("ca_wk"), g("ca_bk")[0],
                    g("ca_wv"), g("ca_bv")[0], g("ca_wo"), g("ca_bo")[0])
        y = layernorm(y, g("ln3_g")[0], g("ln3_b")[0])
        h = jnp.maximum(bmm(y, g("ff_w1"), "bsd,df->bsf") + g("ff_b1")[0], 0.0)
        y = y + bmm(h, g("ff_w2"), "bsf,fd->bsd") + g("ff_b2")[0]
    return layernorm(y, params["fn_g"], params["fn_b"])


# ----------------------------------- main ------------------------------------
if __name__ == "__main__":
    key = jax.random.PRNGKey(0)
    kp, ky, km = jax.random.split(key, 3)
    params = init_params(kp)

    y = jax.random.normal(ky, (BATCH, SEQ, D_MODEL), F32)
    memory = jax.random.normal(km, (BATCH, MEM_SEQ, D_MODEL), F32)
    tgt_mask = jnp.tril(jnp.ones((SEQ, SEQ), F32))     # causal decoder mask
    src_mask = jnp.ones((SEQ, MEM_SEQ), F32)           # attend to all memory

    out = transformer_decoder(y, memory, tgt_mask, src_mask, params)
    out = jax.block_until_ready(out)

    ref = reference_decoder(y, memory, tgt_mask, src_mask, params)
    # Tolerance covers bf16-MXU rounding and the different (but mathematically
    # equivalent) per-head-fold vs. concat accumulation paths across the
    # 2-layer stack; structural errors would be O(1).
    np.testing.assert_allclose(np.asarray(out), np.asarray(ref), atol=2e-2, rtol=2e-2)

    print("KERNEL_OK")
</pallas_src>

<mosaic_0001>
module attributes {stable_mosaic.version = 11 : i64} {
  func.func @decoder_stack_kernel(%arg0: i32, %arg1: memref<2x8x128xf32, #tpu.memory_space<vmem>>, %arg2: memref<2x8x128xf32, #tpu.memory_space<vmem>>, %arg3: memref<8x8xf32, #tpu.memory_space<vmem>>, %arg4: memref<8x8xf32, #tpu.memory_space<vmem>>, %arg5: memref<1x1x128xf32, #tpu.memory_space<vmem>>, %arg6: memref<1x1x128xf32, #tpu.memory_space<vmem>>, %arg7: memref<1x1x128xf32, #tpu.memory_space<vmem>>, %arg8: memref<1x1x128xf32, #tpu.memory_space<vmem>>, %arg9: memref<1x1x128xf32, #tpu.memory_space<vmem>>, %arg10: memref<1x1x128xf32, #tpu.memory_space<vmem>>, %arg11: memref<1x128x128xbf16, #tpu.memory_space<vmem>>, %arg12: memref<1x1x128xf32, #tpu.memory_space<vmem>>, %arg13: memref<1x128x128xbf16, #tpu.memory_space<vmem>>, %arg14: memref<1x1x128xf32, #tpu.memory_space<vmem>>, %arg15: memref<1x128x128xbf16, #tpu.memory_space<vmem>>, %arg16: memref<1x1x128xf32, #tpu.memory_space<vmem>>, %arg17: memref<1x128x128xbf16, #tpu.memory_space<vmem>>, %arg18: memref<1x1x128xf32, #tpu.memory_space<vmem>>, %arg19: memref<1x128x128xbf16, #tpu.memory_space<vmem>>, %arg20: memref<1x1x128xf32, #tpu.memory_space<vmem>>, %arg21: memref<1x128x128xbf16, #tpu.memory_space<vmem>>, %arg22: memref<1x1x128xf32, #tpu.memory_space<vmem>>, %arg23: memref<1x128x128xbf16, #tpu.memory_space<vmem>>, %arg24: memref<1x1x128xf32, #tpu.memory_space<vmem>>, %arg25: memref<1x128x128xbf16, #tpu.memory_space<vmem>>, %arg26: memref<1x1x128xf32, #tpu.memory_space<vmem>>, %arg27: memref<1x128x256xbf16, #tpu.memory_space<vmem>>, %arg28: memref<1x1x256xf32, #tpu.memory_space<vmem>>, %arg29: memref<1x256x128xbf16, #tpu.memory_space<vmem>>, %arg30: memref<1x1x128xf32, #tpu.memory_space<vmem>>, %arg31: memref<1x128xf32, #tpu.memory_space<vmem>>, %arg32: memref<1x128xf32, #tpu.memory_space<vmem>>, %arg33: memref<2x8x128xf32, #tpu.memory_space<vmem>>) attributes {dimension_semantics = [#tpu.dimension_semantics<arbitrary>], iteration_bounds = array<i64: 2>, scalar_prefetch = 0 : i64, scratch_operands = 0 : i64, tpu.core_type = #tpu.core_type<tc>, window_params = [{pipeline_mode = #tpu.pipeline_mode<synchronous>, transform_indices = @transform_0, window_bounds = array<i64: 2, 8, 128>}, {pipeline_mode = #tpu.pipeline_mode<synchronous>, transform_indices = @transform_1, window_bounds = array<i64: 2, 8, 128>}, {pipeline_mode = #tpu.pipeline_mode<synchronous>, transform_indices = @transform_2, window_bounds = array<i64: 8, 8>}, {pipeline_mode = #tpu.pipeline_mode<synchronous>, transform_indices = @transform_3, window_bounds = array<i64: 8, 8>}, {transform_indices = @transform_4, window_bounds = array<i64: 1, 1, 128>}, {transform_indices = @transform_5, window_bounds = array<i64: 1, 1, 128>}, {transform_indices = @transform_6, window_bounds = array<i64: 1, 1, 128>}, {transform_indices = @transform_7, window_bounds = array<i64: 1, 1, 128>}, {transform_indices = @transform_8, window_bounds = array<i64: 1, 1, 128>}, {transform_indices = @transform_9, window_bounds = array<i64: 1, 1, 128>}, {transform_indices = @transform_10, window_bounds = array<i64: 1, 128, 128>}, {transform_indices = @transform_11, window_bounds = array<i64: 1, 1, 128>}, {transform_indices = @transform_12, window_bounds = array<i64: 1, 128, 128>}, {transform_indices = @transform_13, window_bounds = array<i64: 1, 1, 128>}, {transform_indices = @transform_14, window_bounds = array<i64: 1, 128, 128>}, {transform_indices = @transform_15, window_bounds = array<i64: 1, 1, 128>}, {transform_indices = @transform_16, window_bounds = array<i64: 1, 128, 128>}, {transform_indices = @transform_17, window_bounds = array<i64: 1, 1, 128>}, {transform_indices = @transform_18, window_bounds = array<i64: 1, 128, 128>}, {transform_indices = @transform_19, window_bounds = array<i64: 1, 1, 128>}, {transform_indices = @transform_20, window_bounds = array<i64: 1, 128, 128>}, {transform_indices = @transform_21, window_bounds = array<i64: 1, 1, 128>}, {transform_indices = @transform_22, window_bounds = array<i64: 1, 128, 128>}, {transform_indices = @transform_23, window_bounds = array<i64: 1, 1, 128>}, {transform_indices = @transform_24, window_bounds = array<i64: 1, 128, 128>}, {transform_indices = @transform_25, window_bounds = array<i64: 1, 1, 128>}, {transform_indices = @transform_26, window_bounds = array<i64: 1, 128, 256>}, {transform_indices = @transform_27, window_bounds = array<i64: 1, 1, 256>}, {transform_indices = @transform_28, window_bounds = array<i64: 1, 256, 128>}, {transform_indices = @transform_29, window_bounds = array<i64: 1, 1, 128>}, {pipeline_mode = #tpu.pipeline_mode<synchronous>, transform_indices = @transform_30, window_bounds = array<i64: 1, 128>}, {pipeline_mode = #tpu.pipeline_mode<synchronous>, transform_indices = @transform_31, window_bounds = array<i64: 1, 128>}, {pipeline_mode = #tpu.pipeline_mode<synchronous>, transform_indices = @transform_32, window_bounds = array<i64: 2, 8, 128>}]} {
    %c0_i32 = arith.constant 0 : i32
    %0 = arith.cmpi eq, %arg0, %c0_i32 : i32
    %1 = arith.extui %0 : i1 to i32
    %c0_i32_0 = arith.constant 0 : i32
    %2 = arith.cmpi ne, %1, %c0_i32_0 : i32
    scf.if %2 {
      %c0_164 = arith.constant 0 : index
      %c0_165 = arith.constant 0 : index
      %c0_166 = arith.constant 0 : index
      %411 = vector.load %arg1[%c0_164, %c0_165, %c0_166] : memref<2x8x128xf32, #tpu.memory_space<vmem>>, vector<2x8x128xf32>
      %c0_167 = arith.constant 0 : index
      %c0_168 = arith.constant 0 : index
      %c0_169 = arith.constant 0 : index
      %412 = vector.load %arg33[%c0_167, %c0_168, %c0_169] : memref<2x8x128xf32, #tpu.memory_space<vmem>>, vector<2x8x128xf32>
      tpu.vector_store %arg33[%c0_167, %c0_168, %c0_169], %411 {strides = array<i32>} : memref<2x8x128xf32, #tpu.memory_space<vmem>>, vector<2x8x128xf32>,
    } else {
    }
    %c0 = arith.constant 0 : index
    %c0_1 = arith.constant 0 : index
    %c0_2 = arith.constant 0 : index
    %3 = vector.load %arg33[%c0, %c0_1, %c0_2] : memref<2x8x128xf32, #tpu.memory_space<vmem>>, vector<2x8x128xf32>
    %4 = vector.shape_cast %3 : vector<2x8x128xf32> to vector<16x128xf32>
    %c0_3 = arith.constant 0 : index
    %c0_4 = arith.constant 0 : index
    %c0_5 = arith.constant 0 : index
    %5 = vector.load %arg2[%c0_3, %c0_4, %c0_5] : memref<2x8x128xf32, #tpu.memory_space<vmem>>, vector<2x8x128xf32>
    %c0_6 = arith.constant 0 : index
    %c0_7 = arith.constant 0 : index
    %6 = vector.load %arg3[%c0_6, %c0_7] : memref<8x8xf32, #tpu.memory_space<vmem>>, vector<8x8xf32>
    %c0_8 = arith.constant 0 : index
    %c0_9 = arith.constant 0 : index
    %7 = vector.load %arg4[%c0_8, %c0_9] : memref<8x8xf32, #tpu.memory_space<vmem>>, vector<8x8xf32>
    %c0_10 = arith.constant 0 : index
    %c0_11 = arith.constant 0 : index
    %c0_12 = arith.constant 0 : index
    %8 = vector.load %arg5[%c0_10, %c0_11, %c0_12] : memref<1x1x128xf32, #tpu.memory_space<vmem>>, vector<1x1x128xf32>
    %9 = vector.shape_cast %8 : vector<1x1x128xf32> to vector<1x128xf32>
    %c0_13 = arith.constant 0 : index
    %c0_14 = arith.constant 0 : index
    %c0_15 = arith.constant 0 : index
    %10 = vector.load %arg6[%c0_13, %c0_14, %c0_15] : memref<1x1x128xf32, #tpu.memory_space<vmem>>, vector<1x1x128xf32>
    %11 = vector.shape_cast %10 : vector<1x1x128xf32> to vector<1x128xf32>
    %cst = arith.constant dense<0.000000e+00> : vector<16xf32>
    %12 = vector.multi_reduction <add>, %4, %cst [1] : vector<16x128xf32> to vector<16xf32>
    %13 = vector.shape_cast %12 : vector<16xf32> to vector<16x1xf32>
    %cst_16 = arith.constant 1.280000e+02 : f32
    %14 = vector.broadcast %cst_16 : f32 to vector<16x1xf32>
    %15 = arith.divf %13, %14 : vector<16x1xf32>
    %16 = vector.broadcast %15 : vector<16x1xf32> to vector<16x128xf32>
    %17 = arith.subf %4, %16 : vector<16x128xf32>
    %18 = arith.mulf %17, %17 : vector<16x128xf32>
    %cst_17 = arith.constant dense<0.000000e+00> : vector<16xf32>
    %19 = vector.multi_reduction <add>, %18, %cst_17 [1] : vector<16x128xf32> to vector<16xf32>
    %20 = vector.shape_cast %19 : vector<16xf32> to vector<16x1xf32>
    %cst_18 = arith.constant 1.280000e+02 : f32
    %21 = vector.broadcast %cst_18 : f32 to vector<16x1xf32>
    %22 = arith.divf %20, %21 : vector<16x1xf32>
    %23 = vector.broadcast %15 : vector<16x1xf32> to vector<16x128xf32>
    %24 = arith.subf %4, %23 : vector<16x128xf32>
    %cst_19 = arith.constant 9.99999974E-6 : f32
    %25 = vector.broadcast %cst_19 : f32 to vector<16x1xf32>
    %26 = arith.addf %22, %25 : vector<16x1xf32>
    %27 = math.rsqrt %26 : vector<16x1xf32>
    %28 = vector.broadcast %27 : vector<16x1xf32> to vector<16x128xf32>
    %29 = arith.mulf %24, %28 : vector<16x128xf32>
    %30 = vector.broadcast %9 : vector<1x128xf32> to vector<16x128xf32>
    %31 = arith.mulf %29, %30 : vector<16x128xf32>
    %32 = vector.broadcast %11 : vector<1x128xf32> to vector<16x128xf32>
    %33 = arith.addf %31, %32 : vector<16x128xf32>
    %34 = vector.shape_cast %33 : vector<16x128xf32> to vector<2x8x128xf32>
    %c0_20 = arith.constant 0 : index
    %c0_21 = arith.constant 0 : index
    %c0_22 = arith.constant 0 : index
    %35 = vector.load %arg11[%c0_20, %c0_21, %c0_22] : memref<1x128x128xbf16, #tpu.memory_space<vmem>>, vector<1x128x128xbf16>
    %36 = vector.shape_cast %35 : vector<1x128x128xbf16> to vector<128x128xbf16>
    %c0_23 = arith.constant 0 : index
    %c0_24 = arith.constant 0 : index
    %c0_25 = arith.constant 0 : index
    %37 = vector.load %arg12[%c0_23, %c0_24, %c0_25] : memref<1x1x128xf32, #tpu.memory_space<vmem>>, vector<1x1x128xf32>
    %38 = vector.shape_cast %37 : vector<1x1x128xf32> to vector<1x128xf32>
    %c0_26 = arith.constant 0 : index
    %c0_27 = arith.constant 0 : index
    %c0_28 = arith.constant 0 : index
    %39 = vector.load %arg13[%c0_26, %c0_27, %c0_28] : memref<1x128x128xbf16, #tpu.memory_space<vmem>>, vector<1x128x128xbf16>
    %40 = vector.shape_cast %39 : vector<1x128x128xbf16> to vector<128x128xbf16>
    %c0_29 = arith.constant 0 : index
    %c0_30 = arith.constant 0 : index
    %c0_31 = arith.constant 0 : index
    %41 = vector.load %arg14[%c0_29, %c0_30, %c0_31] : memref<1x1x128xf32, #tpu.memory_space<vmem>>, vector<1x1x128xf32>
    %42 = vector.shape_cast %41 : vector<1x1x128xf32> to vector<1x128xf32>
    %c0_32 = arith.constant 0 : index
    %c0_33 = arith.constant 0 : index
    %c0_34 = arith.constant 0 : index
    %43 = vector.load %arg15[%c0_32, %c0_33, %c0_34] : memref<1x128x128xbf16, #tpu.memory_space<vmem>>, vector<1x128x128xbf16>
    %44 = vector.shape_cast %43 : vector<1x128x128xbf16> to vector<128x128xbf16>
    %c0_35 = arith.constant 0 : index
    %c0_36 = arith.constant 0 : index
    %c0_37 = arith.constant 0 : index
    %45 = vector.load %arg16[%c0_35, %c0_36, %c0_37] : memref<1x1x128xf32, #tpu.memory_space<vmem>>, vector<1x1x128xf32>
    %46 = vector.shape_cast %45 : vector<1x1x128xf32> to vector<1x128xf32>
    %c0_38 = arith.constant 0 : index
    %c0_39 = arith.constant 0 : index
    %c0_40 = arith.constant 0 : index
    %47 = vector.load %arg17[%c0_38, %c0_39, %c0_40] : memref<1x128x128xbf16, #tpu.memory_space<vmem>>, vector<1x128x128xbf16>
    %48 = vector.shape_cast %47 : vector<1x128x128xbf16> to vector<128x128xbf16>
    %c0_41 = arith.constant 0 : index
    %c0_42 = arith.constant 0 : index
    %c0_43 = arith.constant 0 : index
    %49 = vector.load %arg18[%c0_41, %c0_42, %c0_43] : memref<1x1x128xf32, #tpu.memory_space<vmem>>, vector<1x1x128xf32>
    %50 = vector.shape_cast %49 : vector<1x1x128xf32> to vector<1x128xf32>
    %51 = vector.shape_cast %34 : vector<2x8x128xf32> to vector<16x128xf32>
    %52 = vector.shape_cast %34 : vector<2x8x128xf32> to vector<16x128xf32>
    %53 = arith.truncf %51 : vector<16x128xf32> to vector<16x128xbf16>
    %cst_44 = arith.constant dense<0.000000e+00> : vector<16x128xf32>
    %54 = tpu.matmul %53, %36, %cst_44 {dimension_numbers = #tpu.dot_dimension_numbers<[1], [0], [0], [1], [0, 0, 1, 1], [], []>} : vector<16x128xbf16>, vector<128x128xbf16>, vector<16x128xf32> -> vector<16x128xf32>
    %55 = vector.broadcast %38 : vector<1x128xf32> to vector<16x128xf32>
    %56 = arith.addf %54, %55 : vector<16x128xf32>
    %57 = arith.truncf %52 : vector<16x128xf32> to vector<16x128xbf16>
    %cst_45 = arith.constant dense<0.000000e+00> : vector<16x128xf32>
    %58 = tpu.matmul %57, %40, %cst_45 {dimension_numbers = #tpu.dot_dimension_numbers<[1], [0], [0], [1], [0, 0, 1, 1], [], []>} : vector<16x128xbf16>, vector<128x128xbf16>, vector<16x128xf32> -> vector<16x128xf32>
    %59 = vector.broadcast %42 : vector<1x128xf32> to vector<16x128xf32>
    %60 = arith.addf %58, %59 : vector<16x128xf32>
    %61 = arith.truncf %52 : vector<16x128xf32> to vector<16x128xbf16>
    %cst_46 = arith.constant dense<0.000000e+00> : vector<16x128xf32>
    %62 = tpu.matmul %61, %44, %cst_46 {dimension_numbers = #tpu.dot_dimension_numbers<[1], [0], [0], [1], [0, 0, 1, 1], [], []>} : vector<16x128xbf16>, vector<128x128xbf16>, vector<16x128xf32> -> vector<16x128xf32>
    %63 = vector.broadcast %46 : vector<1x128xf32> to vector<16x128xf32>
    %64 = arith.addf %62, %63 : vector<16x128xf32>
    %65 = vector.shape_cast %56 : vector<16x128xf32> to vector<2x8x128xf32>
    %66 = vector.shape_cast %60 : vector<16x128xf32> to vector<2x8x128xf32>
    %67 = vector.shape_cast %64 : vector<16x128xf32> to vector<2x8x128xf32>
    %cst_47 = arith.constant 0.000000e+00 : f32
    %68 = vector.broadcast %cst_47 : f32 to vector<16x128xf32>
    %69 = vector.extract_strided_slice %65 {offsets = [0, 0, 0], sizes = [2, 8, 32], strides = [1, 1, 1]} : vector<2x8x128xf32> to vector<2x8x32xf32>
    %70 = arith.truncf %69 : vector<2x8x32xf32> to vector<2x8x32xbf16>
    %71 = vector.extract_strided_slice %66 {offsets = [0, 0, 0], sizes = [2, 8, 32], strides = [1, 1, 1]} : vector<2x8x128xf32> to vector<2x8x32xf32>
    %72 = arith.truncf %71 : vector<2x8x32xf32> to vector<2x8x32xbf16>
    %73 = vector.extract_strided_slice %67 {offsets = [0, 0, 0], sizes = [2, 8, 32], strides = [1, 1, 1]} : vector<2x8x128xf32> to vector<2x8x32xf32>
    %74 = arith.truncf %73 : vector<2x8x32xf32> to vector<2x8x32xbf16>
    "tpu.trace_start"() <{level = 10 : i32, message = "bqd,bkd->bqk"}> : () -> ()
    %cst_48 = arith.constant dense<0.000000e+00> : vector<2x8x8xf32>
    %75 = tpu.matmul %70, %72, %cst_48 {dimension_numbers = #tpu.dot_dimension_numbers<[2], [2], [1], [1], [0, 0, 0, 1, 1, 1], [0], [0]>} : vector<2x8x32xbf16>, vector<2x8x32xbf16>, vector<2x8x8xf32> -> vector<2x8x8xf32>
    "tpu.trace_stop"() : () -> ()
    %cst_49 = arith.constant 0.176776692 : f32
    %76 = vector.broadcast %cst_49 : f32 to vector<2x8x8xf32>
    %77 = arith.mulf %75, %76 : vector<2x8x8xf32>
    %78 = vector.shape_cast %6 : vector<8x8xf32> to vector<1x8x8xf32>
    %79 = vector.broadcast %78 : vector<1x8x8xf32> to vector<2x8x8xf32>
    %80 = arith.addf %77, %79 : vector<2x8x8xf32>
    %cst_50 = arith.constant dense<0xFF800000> : vector<2x8xf32>
    %81 = vector.multi_reduction <maximumf>, %80, %cst_50 [2] : vector<2x8x8xf32> to vector<2x8xf32>
    %82 = vector.shape_cast %81 : vector<2x8xf32> to vector<2x8x1xf32>
    %83 = vector.broadcast %82 : vector<2x8x1xf32> to vector<2x8x8xf32>
    %84 = arith.subf %80, %83 : vector<2x8x8xf32>
    %85 = math.exp %84 : vector<2x8x8xf32>
    %cst_51 = arith.constant dense<0.000000e+00> : vector<2x8xf32>
    %86 = vector.multi_reduction <add>, %85, %cst_51 [2] : vector<2x8x8xf32> to vector<2x8xf32>
    %87 = vector.shape_cast %86 : vector<2x8xf32> to vector<2x8x1xf32>
    %88 = vector.broadcast %87 : vector<2x8x1xf32> to vector<2x8x8xf32>
    %89 = arith.divf %85, %88 : vector<2x8x8xf32>
    %90 = arith.truncf %89 : vector<2x8x8xf32> to vector<2x8x8xbf16>
    "tpu.trace_start"() <{level = 10 : i32, message = "bqk,bkd->bqd"}> : () -> ()
    %cst_52 = arith.constant dense<0.000000e+00> : vector<2x8x32xf32>
    %91 = tpu.matmul %90, %74, %cst_52 {dimension_numbers = #tpu.dot_dimension_numbers<[2], [1], [1], [2], [0, 0, 0, 1, 1, 2], [0], [0]>} : vector<2x8x8xbf16>, vector<2x8x32xbf16>, vector<2x8x32xf32> -> vector<2x8x32xf32>
    "tpu.trace_stop"() : () -> ()
    %92 = vector.shape_cast %91 : vector<2x8x32xf32> to vector<16x32xf32>
    %93 = vector.extract_strided_slice %48 {offsets = [0, 0], sizes = [32, 128], strides = [1, 1]} : vector<128x128xbf16> to vector<32x128xbf16>
    %94 = arith.truncf %92 : vector<16x32xf32> to vector<16x32xbf16>
    %cst_53 = arith.constant dense<0.000000e+00> : vector<16x128xf32>
    %95 = tpu.matmul %94, %93, %cst_53 {dimension_numbers = #tpu.dot_dimension_numbers<[1], [0], [0], [1], [0, 0, 1, 1], [], []>} : vector<16x32xbf16>, vector<32x128xbf16>, vector<16x128xf32> -> vector<16x128xf32>
    %96 = arith.addf %68, %95 : vector<16x128xf32>
    %97 = vector.extract_strided_slice %65 {offsets = [0, 0, 32], sizes = [2, 8, 32], strides = [1, 1, 1]} : vector<2x8x128xf32> to vector<2x8x32xf32>
    %98 = arith.truncf %97 : vector<2x8x32xf32> to vector<2x8x32xbf16>
    %99 = vector.extract_strided_slice %66 {offsets = [0, 0, 32], sizes = [2, 8, 32], strides = [1, 1, 1]} : vector<2x8x128xf32> to vector<2x8x32xf32>
    %100 = arith.truncf %99 : vector<2x8x32xf32> to vector<2x8x32xbf16>
    %101 = vector.extract_strided_slice %67 {offsets = [0, 0, 32], sizes = [2, 8, 32], strides = [1, 1, 1]} : vector<2x8x128xf32> to vector<2x8x32xf32>
    %102 = arith.truncf %101 : vector<2x8x32xf32> to vector<2x8x32xbf16>
    "tpu.trace_start"() <{level = 10 : i32, message = "bqd,bkd->bqk"}> : () -> ()
    %cst_54 = arith.constant dense<0.000000e+00> : vector<2x8x8xf32>
    %103 = tpu.matmul %98, %100, %cst_54 {dimension_numbers = #tpu.dot_dimension_numbers<[2], [2], [1], [1], [0, 0, 0, 1, 1, 1], [0], [0]>} : vector<2x8x32xbf16>, vector<2x8x32xbf16>, vector<2x8x8xf32> -> vector<2x8x8xf32>
    "tpu.trace_stop"() : () -> ()
    %cst_55 = arith.constant 0.176776692 : f32
    %104 = vector.broadcast %cst_55 : f32 to vector<2x8x8xf32>
    %105 = arith.mulf %103, %104 : vector<2x8x8xf32>
    %106 = vector.shape_cast %6 : vector<8x8xf32> to vector<1x8x8xf32>
    %107 = vector.broadcast %106 : vector<1x8x8xf32> to vector<2x8x8xf32>
    %108 = arith.addf %105, %107 : vector<2x8x8xf32>
    %cst_56 = arith.constant dense<0xFF800000> : vector<2x8xf32>
    %109 = vector.multi_reduction <maximumf>, %108, %cst_56 [2] : vector<2x8x8xf32> to vector<2x8xf32>
    %110 = vector.shape_cast %109 : vector<2x8xf32> to vector<2x8x1xf32>
    %111 = vector.broadcast %110 : vector<2x8x1xf32> to vector<2x8x8xf32>
    %112 = arith.subf %108, %111 : vector<2x8x8xf32>
    %113 = math.exp %112 : vector<2x8x8xf32>
    %cst_57 = arith.constant dense<0.000000e+00> : vector<2x8xf32>
    %114 = vector.multi_reduction <add>, %113, %cst_57 [2] : vector<2x8x8xf32> to vector<2x8xf32>
    %115 = vector.shape_cast %114 : vector<2x8xf32> to vector<2x8x1xf32>
    %116 = vector.broadcast %115 : vector<2x8x1xf32> to vector<2x8x8xf32>
    %117 = arith.divf %113, %116 : vector<2x8x8xf32>
    %118 = arith.truncf %117 : vector<2x8x8xf32> to vector<2x8x8xbf16>
    "tpu.trace_start"() <{level = 10 : i32, message = "bqk,bkd->bqd"}> : () -> ()
    %cst_58 = arith.constant dense<0.000000e+00> : vector<2x8x32xf32>
    %119 = tpu.matmul %118, %102, %cst_58 {dimension_numbers = #tpu.dot_dimension_numbers<[2], [1], [1], [2], [0, 0, 0, 1, 1, 2], [0], [0]>} : vector<2x8x8xbf16>, vector<2x8x32xbf16>, vector<2x8x32xf32> -> vector<2x8x32xf32>
    "tpu.trace_stop"() : () -> ()
    %120 = vector.shape_cast %119 : vector<2x8x32xf32> to vector<16x32xf32>
    %121 = vector.extract_strided_slice %48 {offsets = [32, 0], sizes = [32, 128], strides = [1, 1]} : vector<128x128xbf16> to vector<32x128xbf16>
    %122 = arith.truncf %120 : vector<16x32xf32> to vector<16x32xbf16>
    %cst_59 = arith.constant dense<0.000000e+00> : vector<16x128xf32>
    %123 = tpu.matmul %122, %121, %cst_59 {dimension_numbers = #tpu.dot_dimension_numbers<[1], [0], [0], [1], [0, 0, 1, 1], [], []>} : vector<16x32xbf16>, vector<32x128xbf16>, vector<16x128xf32> -> vector<16x128xf32>
    %124 = arith.addf %96, %123 : vector<16x128xf32>
    %125 = vector.extract_strided_slice %65 {offsets = [0, 0, 64], sizes = [2, 8, 32], strides = [1, 1, 1]} : vector<2x8x128xf32> to vector<2x8x32xf32>
    %126 = arith.truncf %125 : vector<2x8x32xf32> to vector<2x8x32xbf16>
    %127 = vector.extract_strided_slice %66 {offsets = [0, 0, 64], sizes = [2, 8, 32], strides = [1, 1, 1]} : vector<2x8x128xf32> to vector<2x8x32xf32>
    %128 = arith.truncf %127 : vector<2x8x32xf32> to vector<2x8x32xbf16>
    %129 = vector.extract_strided_slice %67 {offsets = [0, 0, 64], sizes = [2, 8, 32], strides = [1, 1, 1]} : vector<2x8x128xf32> to vector<2x8x32xf32>
    %130 = arith.truncf %129 : vector<2x8x32xf32> to vector<2x8x32xbf16>
    "tpu.trace_start"() <{level = 10 : i32, message = "bqd,bkd->bqk"}> : () -> ()
    %cst_60 = arith.constant dense<0.000000e+00> : vector<2x8x8xf32>
    %131 = tpu.matmul %126, %128, %cst_60 {dimension_numbers = #tpu.dot_dimension_numbers<[2], [2], [1], [1], [0, 0, 0, 1, 1, 1], [0], [0]>} : vector<2x8x32xbf16>, vector<2x8x32xbf16>, vector<2x8x8xf32> -> vector<2x8x8xf32>
    "tpu.trace_stop"() : () -> ()
    %cst_61 = arith.constant 0.176776692 : f32
    %132 = vector.broadcast %cst_61 : f32 to vector<2x8x8xf32>
    %133 = arith.mulf %131, %132 : vector<2x8x8xf32>
    %134 = vector.shape_cast %6 : vector<8x8xf32> to vector<1x8x8xf32>
    %135 = vector.broadcast %134 : vector<1x8x8xf32> to vector<2x8x8xf32>
    %136 = arith.addf %133, %135 : vector<2x8x8xf32>
    %cst_62 = arith.constant dense<0xFF800000> : vector<2x8xf32>
    %137 = vector.multi_reduction <maximumf>, %136, %cst_62 [2] : vector<2x8x8xf32> to vector<2x8xf32>
    %138 = vector.shape_cast %137 : vector<2x8xf32> to vector<2x8x1xf32>
    %139 = vector.broadcast %138 : vector<2x8x1xf32> to vector<2x8x8xf32>
    %140 = arith.subf %136, %139 : vector<2x8x8xf32>
    %141 = math.exp %140 : vector<2x8x8xf32>
    %cst_63 = arith.constant dense<0.000000e+00> : vector<2x8xf32>
    %142 = vector.multi_reduction <add>, %141, %cst_63 [2] : vector<2x8x8xf32> to vector<2x8xf32>
    %143 = vector.shape_cast %142 : vector<2x8xf32> to vector<2x8x1xf32>
    %144 = vector.broadcast %143 : vector<2x8x1xf32> to vector<2x8x8xf32>
    %145 = arith.divf %141, %144 : vector<2x8x8xf32>
    %146 = arith.truncf %145 : vector<2x8x8xf32> to vector<2x8x8xbf16>
    "tpu.trace_start"() <{level = 10 : i32, message = "bqk,bkd->bqd"}> : () -> ()
    %cst_64 = arith.constant dense<0.000000e+00> : vector<2x8x32xf32>
    %147 = tpu.matmul %146, %130, %cst_64 {dimension_numbers = #tpu.dot_dimension_numbers<[2], [1], [1], [2], [0, 0, 0, 1, 1, 2], [0], [0]>} : vector<2x8x8xbf16>, vector<2x8x32xbf16>, vector<2x8x32xf32> -> vector<2x8x32xf32>
    "tpu.trace_stop"() : () -> ()
    %148 = vector.shape_cast %147 : vector<2x8x32xf32> to vector<16x32xf32>
    %149 = vector.extract_strided_slice %48 {offsets = [64, 0], sizes = [32, 128], strides = [1, 1]} : vector<128x128xbf16> to vector<32x128xbf16>
    %150 = arith.truncf %148 : vector<16x32xf32> to vector<16x32xbf16>
    %cst_65 = arith.constant dense<0.000000e+00> : vector<16x128xf32>
    %151 = tpu.matmul %150, %149, %cst_65 {dimension_numbers = #tpu.dot_dimension_numbers<[1], [0], [0], [1], [0, 0, 1, 1], [], []>} : vector<16x32xbf16>, vector<32x128xbf16>, vector<16x128xf32> -> vector<16x128xf32>
    %152 = arith.addf %124, %151 : vector<16x128xf32>
    %153 = vector.extract_strided_slice %65 {offsets = [0, 0, 96], sizes = [2, 8, 32], strides = [1, 1, 1]} : vector<2x8x128xf32> to vector<2x8x32xf32>
    %154 = arith.truncf %153 : vector<2x8x32xf32> to vector<2x8x32xbf16>
    %155 = vector.extract_strided_slice %66 {offsets = [0, 0, 96], sizes = [2, 8, 32], strides = [1, 1, 1]} : vector<2x8x128xf32> to vector<2x8x32xf32>
    %156 = arith.truncf %155 : vector<2x8x32xf32> to vector<2x8x32xbf16>
    %157 = vector.extract_strided_slice %67 {offsets = [0, 0, 96], sizes = [2, 8, 32], strides = [1, 1, 1]} : vector<2x8x128xf32> to vector<2x8x32xf32>
    %158 = arith.truncf %157 : vector<2x8x32xf32> to vector<2x8x32xbf16>
    "tpu.trace_start"() <{level = 10 : i32, message = "bqd,bkd->bqk"}> : () -> ()
    %cst_66 = arith.constant dense<0.000000e+00> : vector<2x8x8xf32>
    %159 = tpu.matmul %154, %156, %cst_66 {dimension_numbers = #tpu.dot_dimension_numbers<[2], [2], [1], [1], [0, 0, 0, 1, 1, 1], [0], [0]>} : vector<2x8x32xbf16>, vector<2x8x32xbf16>, vector<2x8x8xf32> -> vector<2x8x8xf32>
    "tpu.trace_stop"() : () -> ()
    %cst_67 = arith.constant 0.176776692 : f32
    %160 = vector.broadcast %cst_67 : f32 to vector<2x8x8xf32>
    %161 = arith.mulf %159, %160 : vector<2x8x8xf32>
    %162 = vector.shape_cast %6 : vector<8x8xf32> to vector<1x8x8xf32>
    %163 = vector.broadcast %162 : vector<1x8x8xf32> to vector<2x8x8xf32>
    %164 = arith.addf %161, %163 : vector<2x8x8xf32>
    %cst_68 = arith.constant dense<0xFF800000> : vector<2x8xf32>
    %165 = vector.multi_reduction <maximumf>, %164, %cst_68 [2] : vector<2x8x8xf32> to vector<2x8xf32>
    %166 = vector.shape_cast %165 : vector<2x8xf32> to vector<2x8x1xf32>
    %167 = vector.broadcast %166 : vector<2x8x1xf32> to vector<2x8x8xf32>
    %168 = arith.subf %164, %167 : vector<2x8x8xf32>
    %169 = math.exp %168 : vector<2x8x8xf32>
    %cst_69 = arith.constant dense<0.000000e+00> : vector<2x8xf32>
    %170 = vector.multi_reduction <add>, %169, %cst_69 [2] : vector<2x8x8xf32> to vector<2x8xf32>
    %171 = vector.shape_cast %170 : vector<2x8xf32> to vector<2x8x1xf32>
    %172 = vector.broadcast %171 : vector<2x8x1xf32> to vector<2x8x8xf32>
    %173 = arith.divf %169, %172 : vector<2x8x8xf32>
    %174 = arith.truncf %173 : vector<2x8x8xf32> to vector<2x8x8xbf16>
    "tpu.trace_start"() <{level = 10 : i32, message = "bqk,bkd->bqd"}> : () -> ()
    %cst_70 = arith.constant dense<0.000000e+00> : vector<2x8x32xf32>
    %175 = tpu.matmul %174, %158, %cst_70 {dimension_numbers = #tpu.dot_dimension_numbers<[2], [1], [1], [2], [0, 0, 0, 1, 1, 2], [0], [0]>} : vector<2x8x8xbf16>, vector<2x8x32xbf16>, vector<2x8x32xf32> -> vector<2x8x32xf32>
    "tpu.trace_stop"() : () -> ()
    %176 = vector.shape_cast %175 : vector<2x8x32xf32> to vector<16x32xf32>
    %177 = vector.extract_strided_slice %48 {offsets = [96, 0], sizes = [32, 128], strides = [1, 1]} : vector<128x128xbf16> to vector<32x128xbf16>
    %178 = arith.truncf %176 : vector<16x32xf32> to vector<16x32xbf16>
    %cst_71 = arith.constant dense<0.000000e+00> : vector<16x128xf32>
    %179 = tpu.matmul %178, %177, %cst_71 {dimension_numbers = #tpu.dot_dimension_numbers<[1], [0], [0], [1], [0, 0, 1, 1], [], []>} : vector<16x32xbf16>, vector<32x128xbf16>, vector<16x128xf32> -> vector<16x128xf32>
    %180 = arith.addf %152, %179 : vector<16x128xf32>
    %181 = vector.broadcast %50 : vector<1x128xf32> to vector<16x128xf32>
    %182 = arith.addf %180, %181 : vector<16x128xf32>
    %183 = arith.addf %33, %182 : vector<16x128xf32>
    %c0_72 = arith.constant 0 : index
    %c0_73 = arith.constant 0 : index
    %c0_74 = arith.constant 0 : index
    %184 = vector.load %arg7[%c0_72, %c0_73, %c0_74] : memref<1x1x128xf32, #tpu.memory_space<vmem>>, vector<1x1x128xf32>
    %185 = vector.shape_cast %184 : vector<1x1x128xf32> to vector<1x128xf32>
    %c0_75 = arith.constant 0 : index
    %c0_76 = arith.constant 0 : index
    %c0_77 = arith.constant 0 : index
    %186 = vector.load %arg8[%c0_75, %c0_76, %c0_77] : memref<1x1x128xf32, #tpu.memory_space<vmem>>, vector<1x1x128xf32>
    %187 = vector.shape_cast %186 : vector<1x1x128xf32> to vector<1x128xf32>
    %cst_78 = arith.constant dense<0.000000e+00> : vector<16xf32>
    %188 = vector.multi_reduction <add>, %183, %cst_78 [1] : vector<16x128xf32> to vector<16xf32>
    %189 = vector.shape_cast %188 : vector<16xf32> to vector<16x1xf32>
    %cst_79 = arith.constant 1.280000e+02 : f32
    %190 = vector.broadcast %cst_79 : f32 to vector<16x1xf32>
    %191 = arith.divf %189, %190 : vector<16x1xf32>
    %192 = vector.broadcast %191 : vector<16x1xf32> to vector<16x128xf32>
    %193 = arith.subf %183, %192 : vector<16x128xf32>
    %194 = arith.mulf %193, %193 : vector<16x128xf32>
    %cst_80 = arith.constant dense<0.000000e+00> : vector<16xf32>
    %195 = vector.multi_reduction <add>, %194, %cst_80 [1] : vector<16x128xf32> to vector<16xf32>
    %196 = vector.shape_cast %195 : vector<16xf32> to vector<16x1xf32>
    %cst_81 = arith.constant 1.280000e+02 : f32
    %197 = vector.broadcast %cst_81 : f32 to vector<16x1xf32>
    %198 = arith.divf %196, %197 : vector<16x1xf32>
    %199 = vector.broadcast %191 : vector<16x1xf32> to vector<16x128xf32>
    %200 = arith.subf %183, %199 : vector<16x128xf32>
    %cst_82 = arith.constant 9.99999974E-6 : f32
    %201 = vector.broadcast %cst_82 : f32 to vector<16x1xf32>
    %202 = arith.addf %198, %201 : vector<16x1xf32>
    %203 = math.rsqrt %202 : vector<16x1xf32>
    %204 = vector.broadcast %203 : vector<16x1xf32> to vector<16x128xf32>
    %205 = arith.mulf %200, %204 : vector<16x128xf32>
    %206 = vector.broadcast %185 : vector<1x128xf32> to vector<16x128xf32>
    %207 = arith.mulf %205, %206 : vector<16x128xf32>
    %208 = vector.broadcast %187 : vector<1x128xf32> to vector<16x128xf32>
    %209 = arith.addf %207, %208 : vector<16x128xf32>
    %210 = vector.shape_cast %209 : vector<16x128xf32> to vector<2x8x128xf32>
    %c0_83 = arith.constant 0 : index
    %c0_84 = arith.constant 0 : index
    %c0_85 = arith.constant 0 : index
    %211 = vector.load %arg19[%c0_83, %c0_84, %c0_85] : memref<1x128x128xbf16, #tpu.memory_space<vmem>>, vector<1x128x128xbf16>
    %212 = vector.shape_cast %211 : vector<1x128x128xbf16> to vector<128x128xbf16>
    %c0_86 = arith.constant 0 : index
    %c0_87 = arith.constant 0 : index
    %c0_88 = arith.constant 0 : index
    %213 = vector.load %arg20[%c0_86, %c0_87, %c0_88] : memref<1x1x128xf32, #tpu.memory_space<vmem>>, vector<1x1x128xf32>
    %214 = vector.shape_cast %213 : vector<1x1x128xf32> to vector<1x128xf32>
    %c0_89 = arith.constant 0 : index
    %c0_90 = arith.constant 0 : index
    %c0_91 = arith.constant 0 : index
    %215 = vector.load %arg21[%c0_89, %c0_90, %c0_91] : memref<1x128x128xbf16, #tpu.memory_space<vmem>>, vector<1x128x128xbf16>
    %216 = vector.shape_cast %215 : vector<1x128x128xbf16> to vector<128x128xbf16>
    %c0_92 = arith.constant 0 : index
    %c0_93 = arith.constant 0 : index
    %c0_94 = arith.constant 0 : index
    %217 = vector.load %arg22[%c0_92, %c0_93, %c0_94] : memref<1x1x128xf32, #tpu.memory_space<vmem>>, vector<1x1x128xf32>
    %218 = vector.shape_cast %217 : vector<1x1x128xf32> to vector<1x128xf32>
    %c0_95 = arith.constant 0 : index
    %c0_96 = arith.constant 0 : index
    %c0_97 = arith.constant 0 : index
    %219 = vector.load %arg23[%c0_95, %c0_96, %c0_97] : memref<1x128x128xbf16, #tpu.memory_space<vmem>>, vector<1x128x128xbf16>
    %220 = vector.shape_cast %219 : vector<1x128x128xbf16> to vector<128x128xbf16>
    %c0_98 = arith.constant 0 : index
    %c0_99 = arith.constant 0 : index
    %c0_100 = arith.constant 0 : index
    %221 = vector.load %arg24[%c0_98, %c0_99, %c0_100] : memref<1x1x128xf32, #tpu.memory_space<vmem>>, vector<1x1x128xf32>
    %222 = vector.shape_cast %221 : vector<1x1x128xf32> to vector<1x128xf32>
    %c0_101 = arith.constant 0 : index
    %c0_102 = arith.constant 0 : index
    %c0_103 = arith.constant 0 : index
    %223 = vector.load %arg25[%c0_101, %c0_102, %c0_103] : memref<1x128x128xbf16, #tpu.memory_space<vmem>>, vector<1x128x128xbf16>
    %224 = vector.shape_cast %223 : vector<1x128x128xbf16> to vector<128x128xbf16>
    %c0_104 = arith.constant 0 : index
    %c0_105 = arith.constant 0 : index
    %c0_106 = arith.constant 0 : index
    %225 = vector.load %arg26[%c0_104, %c0_105, %c0_106] : memref<1x1x128xf32, #tpu.memory_space<vmem>>, vector<1x1x128xf32>
    %226 = vector.shape_cast %225 : vector<1x1x128xf32> to vector<1x128xf32>
    %227 = vector.shape_cast %210 : vector<2x8x128xf32> to vector<16x128xf32>
    %228 = vector.shape_cast %5 : vector<2x8x128xf32> to vector<16x128xf32>
    %229 = arith.truncf %227 : vector<16x128xf32> to vector<16x128xbf16>
    %cst_107 = arith.constant dense<0.000000e+00> : vector<16x128xf32>
    %230 = tpu.matmul %229, %212, %cst_107 {dimension_numbers = #tpu.dot_dimension_numbers<[1], [0], [0], [1], [0, 0, 1, 1], [], []>} : vector<16x128xbf16>, vector<128x128xbf16>, vector<16x128xf32> -> vector<16x128xf32>
    %231 = vector.broadcast %214 : vector<1x128xf32> to vector<16x128xf32>
    %232 = arith.addf %230, %231 : vector<16x128xf32>
    %233 = arith.truncf %228 : vector<16x128xf32> to vector<16x128xbf16>
    %cst_108 = arith.constant dense<0.000000e+00> : vector<16x128xf32>
    %234 = tpu.matmul %233, %216, %cst_108 {dimension_numbers = #tpu.dot_dimension_numbers<[1], [0], [0], [1], [0, 0, 1, 1], [], []>} : vector<16x128xbf16>, vector<128x128xbf16>, vector<16x128xf32> -> vector<16x128xf32>
    %235 = vector.broadcast %218 : vector<1x128xf32> to vector<16x128xf32>
    %236 = arith.addf %234, %235 : vector<16x128xf32>
    %237 = arith.truncf %228 : vector<16x128xf32> to vector<16x128xbf16>
    %cst_109 = arith.constant dense<0.000000e+00> : vector<16x128xf32>
    %238 = tpu.matmul %237, %220, %cst_109 {dimension_numbers = #tpu.dot_dimension_numbers<[1], [0], [0], [1], [0, 0, 1, 1], [], []>} : vector<16x128xbf16>, vector<128x128xbf16>, vector<16x128xf32> -> vector<16x128xf32>
    %239 = vector.broadcast %222 : vector<1x128xf32> to vector<16x128xf32>
    %240 = arith.addf %238, %239 : vector<16x128xf32>
    %241 = vector.shape_cast %232 : vector<16x128xf32> to vector<2x8x128xf32>
    %242 = vector.shape_cast %236 : vector<16x128xf32> to vector<2x8x128xf32>
    %243 = vector.shape_cast %240 : vector<16x128xf32> to vector<2x8x128xf32>
    %cst_110 = arith.constant 0.000000e+00 : f32
    %244 = vector.broadcast %cst_110 : f32 to vector<16x128xf32>
    %245 = vector.extract_strided_slice %241 {offsets = [0, 0, 0], sizes = [2, 8, 32], strides = [1, 1, 1]} : vector<2x8x128xf32> to vector<2x8x32xf32>
    %246 = arith.truncf %245 : vector<2x8x32xf32> to vector<2x8x32xbf16>
    %247 = vector.extract_strided_slice %242 {offsets = [0, 0, 0], sizes = [2, 8, 32], strides = [1, 1, 1]} : vector<2x8x128xf32> to vector<2x8x32xf32>
    %248 = arith.truncf %247 : vector<2x8x32xf32> to vector<2x8x32xbf16>
    %249 = vector.extract_strided_slice %243 {offsets = [0, 0, 0], sizes = [2, 8, 32], strides = [1, 1, 1]} : vector<2x8x128xf32> to vector<2x8x32xf32>
    %250 = arith.truncf %249 : vector<2x8x32xf32> to vector<2x8x32xbf16>
    "tpu.trace_start"() <{level = 10 : i32, message = "bqd,bkd->bqk"}> : () -> ()
    %cst_111 = arith.constant dense<0.000000e+00> : vector<2x8x8xf32>
    %251 = tpu.matmul %246, %248, %cst_111 {dimension_numbers = #tpu.dot_dimension_numbers<[2], [2], [1], [1], [0, 0, 0, 1, 1, 1], [0], [0]>} : vector<2x8x32xbf16>, vector<2x8x32xbf16>, vector<2x8x8xf32> -> vector<2x8x8xf32>
    "tpu.trace_stop"() : () -> ()
    %cst_112 = arith.constant 0.176776692 : f32
    %252 = vector.broadcast %cst_112 : f32 to vector<2x8x8xf32>
    %253 = arith.mulf %251, %252 : vector<2x8x8xf32>
    %254 = vector.shape_cast %7 : vector<8x8xf32> to vector<1x8x8xf32>
    %255 = vector.broadcast %254 : vector<1x8x8xf32> to vector<2x8x8xf32>
    %256 = arith.addf %253, %255 : vector<2x8x8xf32>
    %cst_113 = arith.constant dense<0xFF800000> : vector<2x8xf32>
    %257 = vector.multi_reduction <maximumf>, %256, %cst_113 [2] : vector<2x8x8xf32> to vector<2x8xf32>
    %258 = vector.shape_cast %257 : vector<2x8xf32> to vector<2x8x1xf32>
    %259 = vector.broadcast %258 : vector<2x8x1xf32> to vector<2x8x8xf32>
    %260 = arith.subf %256, %259 : vector<2x8x8xf32>
    %261 = math.exp %260 : vector<2x8x8xf32>
    %cst_114 = arith.constant dense<0.000000e+00> : vector<2x8xf32>
    %262 = vector.multi_reduction <add>, %261, %cst_114 [2] : vector<2x8x8xf32> to vector<2x8xf32>
    %263 = vector.shape_cast %262 : vector<2x8xf32> to vector<2x8x1xf32>
    %264 = vector.broadcast %263 : vector<2x8x1xf32> to vector<2x8x8xf32>
    %265 = arith.divf %261, %264 : vector<2x8x8xf32>
    %266 = arith.truncf %265 : vector<2x8x8xf32> to vector<2x8x8xbf16>
    "tpu.trace_start"() <{level = 10 : i32, message = "bqk,bkd->bqd"}> : () -> ()
    %cst_115 = arith.constant dense<0.000000e+00> : vector<2x8x32xf32>
    %267 = tpu.matmul %266, %250, %cst_115 {dimension_numbers = #tpu.dot_dimension_numbers<[2], [1], [1], [2], [0, 0, 0, 1, 1, 2], [0], [0]>} : vector<2x8x8xbf16>, vector<2x8x32xbf16>, vector<2x8x32xf32> -> vector<2x8x32xf32>
    "tpu.trace_stop"() : () -> ()
    %268 = vector.shape_cast %267 : vector<2x8x32xf32> to vector<16x32xf32>
    %269 = vector.extract_strided_slice %224 {offsets = [0, 0], sizes = [32, 128], strides = [1, 1]} : vector<128x128xbf16> to vector<32x128xbf16>
    %270 = arith.truncf %268 : vector<16x32xf32> to vector<16x32xbf16>
    %cst_116 = arith.constant dense<0.000000e+00> : vector<16x128xf32>
    %271 = tpu.matmul %270, %269, %cst_116 {dimension_numbers = #tpu.dot_dimension_numbers<[1], [0], [0], [1], [0, 0, 1, 1], [], []>} : vector<16x32xbf16>, vector<32x128xbf16>, vector<16x128xf32> -> vector<16x128xf32>
    %272 = arith.addf %244, %271 : vector<16x128xf32>
    %273 = vector.extract_strided_slice %241 {offsets = [0, 0, 32], sizes = [2, 8, 32], strides = [1, 1, 1]} : vector<2x8x128xf32> to vector<2x8x32xf32>
    %274 = arith.truncf %273 : vector<2x8x32xf32> to vector<2x8x32xbf16>
    %275 = vector.extract_strided_slice %242 {offsets = [0, 0, 32], sizes = [2, 8, 32], strides = [1, 1, 1]} : vector<2x8x128xf32> to vector<2x8x32xf32>
    %276 = arith.truncf %275 : vector<2x8x32xf32> to vector<2x8x32xbf16>
    %277 = vector.extract_strided_slice %243 {offsets = [0, 0, 32], sizes = [2, 8, 32], strides = [1, 1, 1]} : vector<2x8x128xf32> to vector<2x8x32xf32>
    %278 = arith.truncf %277 : vector<2x8x32xf32> to vector<2x8x32xbf16>
    "tpu.trace_start"() <{level = 10 : i32, message = "bqd,bkd->bqk"}> : () -> ()
    %cst_117 = arith.constant dense<0.000000e+00> : vector<2x8x8xf32>
    %279 = tpu.matmul %274, %276, %cst_117 {dimension_numbers = #tpu.dot_dimension_numbers<[2], [2], [1], [1], [0, 0, 0, 1, 1, 1], [0], [0]>} : vector<2x8x32xbf16>, vector<2x8x32xbf16>, vector<2x8x8xf32> -> vector<2x8x8xf32>
    "tpu.trace_stop"() : () -> ()
    %cst_118 = arith.constant 0.176776692 : f32
    %280 = vector.broadcast %cst_118 : f32 to vector<2x8x8xf32>
    %281 = arith.mulf %279, %280 : vector<2x8x8xf32>
    %282 = vector.shape_cast %7 : vector<8x8xf32> to vector<1x8x8xf32>
    %283 = vector.broadcast %282 : vector<1x8x8xf32> to vector<2x8x8xf32>
    %284 = arith.addf %281, %283 : vector<2x8x8xf32>
    %cst_119 = arith.constant dense<0xFF800000> : vector<2x8xf32>
    %285 = vector.multi_reduction <maximumf>, %284, %cst_119 [2] : vector<2x8x8xf32> to vector<2x8xf32>
    %286 = vector.shape_cast %285 : vector<2x8xf32> to vector<2x8x1xf32>
    %287 = vector.broadcast %286 : vector<2x8x1xf32> to vector<2x8x8xf32>
    %288 = arith.subf %284, %287 : vector<2x8x8xf32>
    %289 = math.exp %288 : vector<2x8x8xf32>
    %cst_120 = arith.constant dense<0.000000e+00> : vector<2x8xf32>
    %290 = vector.multi_reduction <add>, %289, %cst_120 [2] : vector<2x8x8xf32> to vector<2x8xf32>
    %291 = vector.shape_cast %290 : vector<2x8xf32> to vector<2x8x1xf32>
    %292 = vector.broadcast %291 : vector<2x8x1xf32> to vector<2x8x8xf32>
    %293 = arith.divf %289, %292 : vector<2x8x8xf32>
    %294 = arith.truncf %293 : vector<2x8x8xf32> to vector<2x8x8xbf16>
    "tpu.trace_start"() <{level = 10 : i32, message = "bqk,bkd->bqd"}> : () -> ()
    %cst_121 = arith.constant dense<0.000000e+00> : vector<2x8x32xf32>
    %295 = tpu.matmul %294, %278, %cst_121 {dimension_numbers = #tpu.dot_dimension_numbers<[2], [1], [1], [2], [0, 0, 0, 1, 1, 2], [0], [0]>} : vector<2x8x8xbf16>, vector<2x8x32xbf16>, vector<2x8x32xf32> -> vector<2x8x32xf32>
    "tpu.trace_stop"() : () -> ()
    %296 = vector.shape_cast %295 : vector<2x8x32xf32> to vector<16x32xf32>
    %297 = vector.extract_strided_slice %224 {offsets = [32, 0], sizes = [32, 128], strides = [1, 1]} : vector<128x128xbf16> to vector<32x128xbf16>
    %298 = arith.truncf %296 : vector<16x32xf32> to vector<16x32xbf16>
    %cst_122 = arith.constant dense<0.000000e+00> : vector<16x128xf32>
    %299 = tpu.matmul %298, %297, %cst_122 {dimension_numbers = #tpu.dot_dimension_numbers<[1], [0], [0], [1], [0, 0, 1, 1], [], []>} : vector<16x32xbf16>, vector<32x128xbf16>, vector<16x128xf32> -> vector<16x128xf32>
    %300 = arith.addf %272, %299 : vector<16x128xf32>
    %301 = vector.extract_strided_slice %241 {offsets = [0, 0, 64], sizes = [2, 8, 32], strides = [1, 1, 1]} : vector<2x8x128xf32> to vector<2x8x32xf32>
    %302 = arith.truncf %301 : vector<2x8x32xf32> to vector<2x8x32xbf16>
    %303 = vector.extract_strided_slice %242 {offsets = [0, 0, 64], sizes = [2, 8, 32], strides = [1, 1, 1]} : vector<2x8x128xf32> to vector<2x8x32xf32>
    %304 = arith.truncf %303 : vector<2x8x32xf32> to vector<2x8x32xbf16>
    %305 = vector.extract_strided_slice %243 {offsets = [0, 0, 64], sizes = [2, 8, 32], strides = [1, 1, 1]} : vector<2x8x128xf32> to vector<2x8x32xf32>
    %306 = arith.truncf %305 : vector<2x8x32xf32> to vector<2x8x32xbf16>
    "tpu.trace_start"() <{level = 10 : i32, message = "bqd,bkd->bqk"}> : () -> ()
    %cst_123 = arith.constant dense<0.000000e+00> : vector<2x8x8xf32>
    %307 = tpu.matmul %302, %304, %cst_123 {dimension_numbers = #tpu.dot_dimension_numbers<[2], [2], [1], [1], [0, 0, 0, 1, 1, 1], [0], [0]>} : vector<2x8x32xbf16>, vector<2x8x32xbf16>, vector<2x8x8xf32> -> vector<2x8x8xf32>
    "tpu.trace_stop"() : () -> ()
    %cst_124 = arith.constant 0.176776692 : f32
    %308 = vector.broadcast %cst_124 : f32 to vector<2x8x8xf32>
    %309 = arith.mulf %307, %308 : vector<2x8x8xf32>
    %310 = vector.shape_cast %7 : vector<8x8xf32> to vector<1x8x8xf32>
    %311 = vector.broadcast %310 : vector<1x8x8xf32> to vector<2x8x8xf32>
    %312 = arith.addf %309, %311 : vector<2x8x8xf32>
    %cst_125 = arith.constant dense<0xFF800000> : vector<2x8xf32>
    %313 = vector.multi_reduction <maximumf>, %312, %cst_125 [2] : vector<2x8x8xf32> to vector<2x8xf32>
    %314 = vector.shape_cast %313 : vector<2x8xf32> to vector<2x8x1xf32>
    %315 = vector.broadcast %314 : vector<2x8x1xf32> to vector<2x8x8xf32>
    %316 = arith.subf %312, %315 : vector<2x8x8xf32>
    %317 = math.exp %316 : vector<2x8x8xf32>
    %cst_126 = arith.constant dense<0.000000e+00> : vector<2x8xf32>
    %318 = vector.multi_reduction <add>, %317, %cst_126 [2] : vector<2x8x8xf32> to vector<2x8xf32>
    %319 = vector.shape_cast %318 : vector<2x8xf32> to vector<2x8x1xf32>
    %320 = vector.broadcast %319 : vector<2x8x1xf32> to vector<2x8x8xf32>
    %321 = arith.divf %317, %320 : vector<2x8x8xf32>
    %322 = arith.truncf %321 : vector<2x8x8xf32> to vector<2x8x8xbf16>
    "tpu.trace_start"() <{level = 10 : i32, message = "bqk,bkd->bqd"}> : () -> ()
    %cst_127 = arith.constant dense<0.000000e+00> : vector<2x8x32xf32>
    %323 = tpu.matmul %322, %306, %cst_127 {dimension_numbers = #tpu.dot_dimension_numbers<[2], [1], [1], [2], [0, 0, 0, 1, 1, 2], [0], [0]>} : vector<2x8x8xbf16>, vector<2x8x32xbf16>, vector<2x8x32xf32> -> vector<2x8x32xf32>
    "tpu.trace_stop"() : () -> ()
    %324 = vector.shape_cast %323 : vector<2x8x32xf32> to vector<16x32xf32>
    %325 = vector.extract_strided_slice %224 {offsets = [64, 0], sizes = [32, 128], strides = [1, 1]} : vector<128x128xbf16> to vector<32x128xbf16>
    %326 = arith.truncf %324 : vector<16x32xf32> to vector<16x32xbf16>
    %cst_128 = arith.constant dense<0.000000e+00> : vector<16x128xf32>
    %327 = tpu.matmul %326, %325, %cst_128 {dimension_numbers = #tpu.dot_dimension_numbers<[1], [0], [0], [1], [0, 0, 1, 1], [], []>} : vector<16x32xbf16>, vector<32x128xbf16>, vector<16x128xf32> -> vector<16x128xf32>
    %328 = arith.addf %300, %327 : vector<16x128xf32>
    %329 = vector.extract_strided_slice %241 {offsets = [0, 0, 96], sizes = [2, 8, 32], strides = [1, 1, 1]} : vector<2x8x128xf32> to vector<2x8x32xf32>
    %330 = arith.truncf %329 : vector<2x8x32xf32> to vector<2x8x32xbf16>
    %331 = vector.extract_strided_slice %242 {offsets = [0, 0, 96], sizes = [2, 8, 32], strides = [1, 1, 1]} : vector<2x8x128xf32> to vector<2x8x32xf32>
    %332 = arith.truncf %331 : vector<2x8x32xf32> to vector<2x8x32xbf16>
    %333 = vector.extract_strided_slice %243 {offsets = [0, 0, 96], sizes = [2, 8, 32], strides = [1, 1, 1]} : vector<2x8x128xf32> to vector<2x8x32xf32>
    %334 = arith.truncf %333 : vector<2x8x32xf32> to vector<2x8x32xbf16>
    "tpu.trace_start"() <{level = 10 : i32, message = "bqd,bkd->bqk"}> : () -> ()
    %cst_129 = arith.constant dense<0.000000e+00> : vector<2x8x8xf32>
    %335 = tpu.matmul %330, %332, %cst_129 {dimension_numbers = #tpu.dot_dimension_numbers<[2], [2], [1], [1], [0, 0, 0, 1, 1, 1], [0], [0]>} : vector<2x8x32xbf16>, vector<2x8x32xbf16>, vector<2x8x8xf32> -> vector<2x8x8xf32>
    "tpu.trace_stop"() : () -> ()
    %cst_130 = arith.constant 0.176776692 : f32
    %336 = vector.broadcast %cst_130 : f32 to vector<2x8x8xf32>
    %337 = arith.mulf %335, %336 : vector<2x8x8xf32>
    %338 = vector.shape_cast %7 : vector<8x8xf32> to vector<1x8x8xf32>
    %339 = vector.broadcast %338 : vector<1x8x8xf32> to vector<2x8x8xf32>
    %340 = arith.addf %337, %339 : vector<2x8x8xf32>
    %cst_131 = arith.constant dense<0xFF800000> : vector<2x8xf32>
    %341 = vector.multi_reduction <maximumf>, %340, %cst_131 [2] : vector<2x8x8xf32> to vector<2x8xf32>
    %342 = vector.shape_cast %341 : vector<2x8xf32> to vector<2x8x1xf32>
    %343 = vector.broadcast %342 : vector<2x8x1xf32> to vector<2x8x8xf32>
    %344 = arith.subf %340, %343 : vector<2x8x8xf32>
    %345 = math.exp %344 : vector<2x8x8xf32>
    %cst_132 = arith.constant dense<0.000000e+00> : vector<2x8xf32>
    %346 = vector.multi_reduction <add>, %345, %cst_132 [2] : vector<2x8x8xf32> to vector<2x8xf32>
    %347 = vector.shape_cast %346 : vector<2x8xf32> to vector<2x8x1xf32>
    %348 = vector.broadcast %347 : vector<2x8x1xf32> to vector<2x8x8xf32>
    %349 = arith.divf %345, %348 : vector<2x8x8xf32>
    %350 = arith.truncf %349 : vector<2x8x8xf32> to vector<2x8x8xbf16>
    "tpu.trace_start"() <{level = 10 : i32, message = "bqk,bkd->bqd"}> : () -> ()
    %cst_133 = arith.constant dense<0.000000e+00> : vector<2x8x32xf32>
    %351 = tpu.matmul %350, %334, %cst_133 {dimension_numbers = #tpu.dot_dimension_numbers<[2], [1], [1], [2], [0, 0, 0, 1, 1, 2], [0], [0]>} : vector<2x8x8xbf16>, vector<2x8x32xbf16>, vector<2x8x32xf32> -> vector<2x8x32xf32>
    "tpu.trace_stop"() : () -> ()
    %352 = vector.shape_cast %351 : vector<2x8x32xf32> to vector<16x32xf32>
    %353 = vector.extract_strided_slice %224 {offsets = [96, 0], sizes = [32, 128], strides = [1, 1]} : vector<128x128xbf16> to vector<32x128xbf16>
    %354 = arith.truncf %352 : vector<16x32xf32> to vector<16x32xbf16>
    %cst_134 = arith.constant dense<0.000000e+00> : vector<16x128xf32>
    %355 = tpu.matmul %354, %353, %cst_134 {dimension_numbers = #tpu.dot_dimension_numbers<[1], [0], [0], [1], [0, 0, 1, 1], [], []>} : vector<16x32xbf16>, vector<32x128xbf16>, vector<16x128xf32> -> vector<16x128xf32>
    %356 = arith.addf %328, %355 : vector<16x128xf32>
    %357 = vector.broadcast %226 : vector<1x128xf32> to vector<16x128xf32>
    %358 = arith.addf %356, %357 : vector<16x128xf32>
    %359 = arith.addf %209, %358 : vector<16x128xf32>
    %c0_135 = arith.constant 0 : index
    %c0_136 = arith.constant 0 : index
    %c0_137 = arith.constant 0 : index
    %360 = vector.load %arg9[%c0_135, %c0_136, %c0_137] : memref<1x1x128xf32, #tpu.memory_space<vmem>>, vector<1x1x128xf32>
    %361 = vector.shape_cast %360 : vector<1x1x128xf32> to vector<1x128xf32>
    %c0_138 = arith.constant 0 : index
    %c0_139 = arith.constant 0 : index
    %c0_140 = arith.constant 0 : index
    %362 = vector.load %arg10[%c0_138, %c0_139, %c0_140] : memref<1x1x128xf32, #tpu.memory_space<vmem>>, vector<1x1x128xf32>
    %363 = vector.shape_cast %362 : vector<1x1x128xf32> to vector<1x128xf32>
    %cst_141 = arith.constant dense<0.000000e+00> : vector<16xf32>
    %364 = vector.multi_reduction <add>, %359, %cst_141 [1] : vector<16x128xf32> to vector<16xf32>
    %365 = vector.shape_cast %364 : vector<16xf32> to vector<16x1xf32>
    %cst_142 = arith.constant 1.280000e+02 : f32
    %366 = vector.broadcast %cst_142 : f32 to vector<16x1xf32>
    %367 = arith.divf %365, %366 : vector<16x1xf32>
    %368 = vector.broadcast %367 : vector<16x1xf32> to vector<16x128xf32>
    %369 = arith.subf %359, %368 : vector<16x128xf32>
    %370 = arith.mulf %369, %369 : vector<16x128xf32>
    %cst_143 = arith.constant dense<0.000000e+00> : vector<16xf32>
    %371 = vector.multi_reduction <add>, %370, %cst_143 [1] : vector<16x128xf32> to vector<16xf32>
    %372 = vector.shape_cast %371 : vector<16xf32> to vector<16x1xf32>
    %cst_144 = arith.constant 1.280000e+02 : f32
    %373 = vector.broadcast %cst_144 : f32 to vector<16x1xf32>
    %374 = arith.divf %372, %373 : vector<16x1xf32>
    %375 = vector.broadcast %367 : vector<16x1xf32> to vector<16x128xf32>
    %376 = arith.subf %359, %375 : vector<16x128xf32>
    %cst_145 = arith.constant 9.99999974E-6 : f32
    %377 = vector.broadcast %cst_145 : f32 to vector<16x1xf32>
    %378 = arith.addf %374, %377 : vector<16x1xf32>
    %379 = math.rsqrt %378 : vector<16x1xf32>
    %380 = vector.broadcast %379 : vector<16x1xf32> to vector<16x128xf32>
    %381 = arith.mulf %376, %380 : vector<16x128xf32>
    %382 = vector.broadcast %361 : vector<1x128xf32> to vector<16x128xf32>
    %383 = arith.mulf %381, %382 : vector<16x128xf32>
    %384 = vector.broadcast %363 : vector<1x128xf32> to vector<16x128xf32>
    %385 = arith.addf %383, %384 : vector<16x128xf32>
    %c0_146 = arith.constant 0 : index
    %c0_147 = arith.constant 0 : index
    %c0_148 = arith.constant 0 : index
    %386 = vector.load %arg27[%c0_146, %c0_147, %c0_148] : memref<1x128x256xbf16, #tpu.memory_space<vmem>>, vector<1x128x256xbf16>
    %387 = vector.shape_cast %386 : vector<1x128x256xbf16> to vector<128x256xbf16>
    %388 = arith.truncf %385 : vector<16x128xf32> to vector<16x128xbf16>
    %cst_149 = arith.constant dense<0.000000e+00> : vector<16x256xf32>
    %389 = tpu.matmul %388, %387, %cst_149 {dimension_numbers = #tpu.dot_dimension_numbers<[1], [0], [0], [1], [0, 0, 1, 1], [], []>} : vector<16x128xbf16>, vector<128x256xbf16>, vector<16x256xf32> -> vector<16x256xf32>
    %c0_150 = arith.constant 0 : index
    %c0_151 = arith.constant 0 : index
    %c0_152 = arith.constant 0 : index
    %390 = vector.load %arg28[%c0_150, %c0_151, %c0_152] : memref<1x1x256xf32, #tpu.memory_space<vmem>>, vector<1x1x256xf32>
    %391 = vector.shape_cast %390 : vector<1x1x256xf32> to vector<1x256xf32>
    %392 = vector.broadcast %391 : vector<1x256xf32> to vector<16x256xf32>
    %393 = arith.addf %389, %392 : vector<16x256xf32>
    %cst_153 = arith.constant 0.000000e+00 : f32
    %394 = vector.broadcast %cst_153 : f32 to vector<16x256xf32>
    %395 = arith.maximumf %393, %394 : vector<16x256xf32>
    %c0_154 = arith.constant 0 : index
    %c0_155 = arith.constant 0 : index
    %c0_156 = arith.constant 0 : index
    %396 = vector.load %arg29[%c0_154, %c0_155, %c0_156] : memref<1x256x128xbf16, #tpu.memory_space<vmem>>, vector<1x256x128xbf16>
    %397 = vector.shape_cast %396 : vector<1x256x128xbf16> to vector<256x128xbf16>
    %398 = arith.truncf %395 : vector<16x256xf32> to vector<16x256xbf16>
    %cst_157 = arith.constant dense<0.000000e+00> : vector<16x128xf32>
    %399 = tpu.matmul %398, %397, %cst_157 {dimension_numbers = #tpu.dot_dimension_numbers<[1], [0], [0], [1], [0, 0, 1, 1], [], []>} : vector<16x256xbf16>, vector<256x128xbf16>, vector<16x128xf32> -> vector<16x128xf32>
    %400 = arith.addf %385, %399 : vector<16x128xf32>
    %c0_158 = arith.constant 0 : index
    %c0_159 = arith.constant 0 : index
    %c0_160 = arith.constant 0 : index
    %401 = vector.load %arg30[%c0_158, %c0_159, %c0_160] : memref<1x1x128xf32, #tpu.memory_space<vmem>>, vector<1x1x128xf32>
    %402 = vector.shape_cast %401 : vector<1x1x128xf32> to vector<1x128xf32>
    %403 = vector.broadcast %402 : vector<1x128xf32> to vector<16x128xf32>
    %404 = arith.addf %400, %403 : vector<16x128xf32>
    %c1_i32 = arith.constant 1 : i32
    %405 = arith.cmpi ne, %arg0, %c1_i32 : i32
    %406 = arith.extui %405 : i1 to i32
    %c0_i32_161 = arith.constant 0 : i32
    %407 = arith.cmpi ne, %406, %c0_i32_161 : i32
    scf.if %407 {
      %411 = vector.shape_cast %404 : vector<16x128xf32> to vector<2x8x128xf32>
      %c0_164 = arith.constant 0 : index
      %c0_165 = arith.constant 0 : index
      %c0_166 = arith.constant 0 : index
      %412 = vector.load %arg33[%c0_164, %c0_165, %c0_166] : memref<2x8x128xf32, #tpu.memory_space<vmem>>, vector<2x8x128xf32>
      tpu.vector_store %arg33[%c0_164, %c0_165, %c0_166], %411 {strides = array<i32>} : memref<2x8x128xf32, #tpu.memory_space<vmem>>, vector<2x8x128xf32>,
    } else {
    }
    %c1_i32_162 = arith.constant 1 : i32
    %408 = arith.cmpi eq, %arg0, %c1_i32_162 : i32
    %409 = arith.extui %408 : i1 to i32
    %c0_i32_163 = arith.constant 0 : i32
    %410 = arith.cmpi ne, %409, %c0_i32_163 : i32
    scf.if %410 {
      %c0_164 = arith.constant 0 : index
      %c0_165 = arith.constant 0 : index
      %411 = vector.load %arg31[%c0_164, %c0_165] : memref<1x128xf32, #tpu.memory_space<vmem>>, vector<1x128xf32>
      %c0_166 = arith.constant 0 : index
      %c0_167 = arith.constant 0 : index
      %412 = vector.load %arg32[%c0_166, %c0_167] : memref<1x128xf32, #tpu.memory_space<vmem>>, vector<1x128xf32>
      %cst_168 = arith.constant dense<0.000000e+00> : vector<16xf32>
      %413 = vector.multi_reduction <add>, %404, %cst_168 [1] : vector<16x128xf32> to vector<16xf32>
      %414 = vector.shape_cast %413 : vector<16xf32> to vector<16x1xf32>
      %cst_169 = arith.constant 1.280000e+02 : f32
      %415 = vector.broadcast %cst_169 : f32 to vector<16x1xf32>
      %416 = arith.divf %414, %415 : vector<16x1xf32>
      %417 = vector.broadcast %416 : vector<16x1xf32> to vector<16x128xf32>
      %418 = arith.subf %404, %417 : vector<16x128xf32>
      %419 = arith.mulf %418, %418 : vector<16x128xf32>
      %cst_170 = arith.constant dense<0.000000e+00> : vector<16xf32>
      %420 = vector.multi_reduction <add>, %419, %cst_170 [1] : vector<16x128xf32> to vector<16xf32>
      %421 = vector.shape_cast %420 : vector<16xf32> to vector<16x1xf32>
      %cst_171 = arith.constant 1.280000e+02 : f32
      %422 = vector.broadcast %cst_171 : f32 to vector<16x1xf32>
      %423 = arith.divf %421, %422 : vector<16x1xf32>
      %424 = vector.broadcast %416 : vector<16x1xf32> to vector<16x128xf32>
      %425 = arith.subf %404, %424 : vector<16x128xf32>
      %cst_172 = arith.constant 9.99999974E-6 : f32
      %426 = vector.broadcast %cst_172 : f32 to vector<16x1xf32>
      %427 = arith.addf %423, %426 : vector<16x1xf32>
      %428 = math.rsqrt %427 : vector<16x1xf32>
      %429 = vector.broadcast %428 : vector<16x1xf32> to vector<16x128xf32>
      %430 = arith.mulf %425, %429 : vector<16x128xf32>
      %431 = vector.broadcast %411 : vector<1x128xf32> to vector<16x128xf32>
      %432 = arith.mulf %430, %431 : vector<16x128xf32>
      %433 = vector.broadcast %412 : vector<1x128xf32> to vector<16x128xf32>
      %434 = arith.addf %432, %433 : vector<16x128xf32>
      %435 = vector.shape_cast %434 : vector<16x128xf32> to vector<2x8x128xf32>
      %c0_173 = arith.constant 0 : index
      %c0_174 = arith.constant 0 : index
      %c0_175 = arith.constant 0 : index
      %436 = vector.load %arg33[%c0_173, %c0_174, %c0_175] : memref<2x8x128xf32, #tpu.memory_space<vmem>>, vector<2x8x128xf32>
      tpu.vector_store %arg33[%c0_173, %c0_174, %c0_175], %435 {strides = array<i32>} : memref<2x8x128xf32, #tpu.memory_space<vmem>>, vector<2x8x128xf32>,
    } else {
    }
    return
  }
  func.func @transform_0(%arg0: i32) -> (i32, i32, i32) {
    %c0_i32 = arith.constant 0 : i32
    %c0_i32_0 = arith.constant 0 : i32
    %c0_i32_1 = arith.constant 0 : i32
    %c0_i32_2 = arith.constant 0 : i32
    return %c0_i32, %c0_i32_0, %c0_i32_1 : i32, i32, i32
  }
  func.func @transform_1(%arg0: i32) -> (i32, i32, i32) {
    %c0_i32 = arith.constant 0 : i32
    %c0_i32_0 = arith.constant 0 : i32
    %c0_i32_1 = arith.constant 0 : i32
    %c0_i32_2 = arith.constant 0 : i32
    return %c0_i32, %c0_i32_0, %c0_i32_1 : i32, i32, i32
  }
  func.func @transform_2(%arg0: i32) -> (i32, i32) {
    %c0_i32 = arith.constant 0 : i32
    %c0_i32_0 = arith.constant 0 : i32
    %c0_i32_1 = arith.constant 0 : i32
    return %c0_i32, %c0_i32_0 : i32, i32
  }
  func.func @transform_3(%arg0: i32) -> (i32, i32) {
    %c0_i32 = arith.constant 0 : i32
    %c0_i32_0 = arith.constant 0 : i32
    %c0_i32_1 = arith.constant 0 : i32
    return %c0_i32, %c0_i32_0 : i32, i32
  }
  func.func @transform_4(%arg0: i32) -> (i32, i32, i32) {
    %c0_i32 = arith.constant 0 : i32
    %c0_i32_0 = arith.constant 0 : i32
    %c0_i32_1 = arith.constant 0 : i32
    return %arg0, %c0_i32, %c0_i32_0 : i32, i32, i32
  }
  func.func @transform_5(%arg0: i32) -> (i32, i32, i32) {
    %c0_i32 = arith.constant 0 : i32
    %c0_i32_0 = arith.constant 0 : i32
    %c0_i32_1 = arith.constant 0 : i32
    return %arg0, %c0_i32, %c0_i32_0 : i32, i32, i32
  }
  func.func @transform_6(%arg0: i32) -> (i32, i32, i32) {
    %c0_i32 = arith.constant 0 : i32
    %c0_i32_0 = arith.constant 0 : i32
    %c0_i32_1 = arith.constant 0 : i32
    return %arg0, %c0_i32, %c0_i32_0 : i32, i32, i32
  }
  func.func @transform_7(%arg0: i32) -> (i32, i32, i32) {
    %c0_i32 = arith.constant 0 : i32
    %c0_i32_0 = arith.constant 0 : i32
    %c0_i32_1 = arith.constant 0 : i32
    return %arg0, %c0_i32, %c0_i32_0 : i32, i32, i32
  }
  func.func @transform_8(%arg0: i32) -> (i32, i32, i32) {
    %c0_i32 = arith.constant 0 : i32
    %c0_i32_0 = arith.constant 0 : i32
    %c0_i32_1 = arith.constant 0 : i32
    return %arg0, %c0_i32, %c0_i32_0 : i32, i32, i32
  }
  func.func @transform_9(%arg0: i32) -> (i32, i32, i32) {
    %c0_i32 = arith.constant 0 : i32
    %c0_i32_0 = arith.constant 0 : i32
    %c0_i32_1 = arith.constant 0 : i32
    return %arg0, %c0_i32, %c0_i32_0 : i32, i32, i32
  }
  func.func @transform_10(%arg0: i32) -> (i32, i32, i32) {
    %c0_i32 = arith.constant 0 : i32
    %c0_i32_0 = arith.constant 0 : i32
    %c0_i32_1 = arith.constant 0 : i32
    return %arg0, %c0_i32, %c0_i32_0 : i32, i32, i32
  }
  func.func @transform_11(%arg0: i32) -> (i32, i32, i32) {
    %c0_i32 = arith.constant 0 : i32
    %c0_i32_0 = arith.constant 0 : i32
    %c0_i32_1 = arith.constant 0 : i32
    return %arg0, %c0_i32, %c0_i32_0 : i32, i32, i32
  }
  func.func @transform_12(%arg0: i32) -> (i32, i32, i32) {
    %c0_i32 = arith.constant 0 : i32
    %c0_i32_0 = arith.constant 0 : i32
    %c0_i32_1 = arith.constant 0 : i32
    return %arg0, %c0_i32, %c0_i32_0 : i32, i32, i32
  }
  func.func @transform_13(%arg0: i32) -> (i32, i32, i32) {
    %c0_i32 = arith.constant 0 : i32
    %c0_i32_0 = arith.constant 0 : i32
    %c0_i32_1 = arith.constant 0 : i32
    return %arg0, %c0_i32, %c0_i32_0 : i32, i32, i32
  }
  func.func @transform_14(%arg0: i32) -> (i32, i32, i32) {
    %c0_i32 = arith.constant 0 : i32
    %c0_i32_0 = arith.constant 0 : i32
    %c0_i32_1 = arith.constant 0 : i32
    return %arg0, %c0_i32, %c0_i32_0 : i32, i32, i32
  }
  func.func @transform_15(%arg0: i32) -> (i32, i32, i32) {
    %c0_i32 = arith.constant 0 : i32
    %c0_i32_0 = arith.constant 0 : i32
    %c0_i32_1 = arith.constant 0 : i32
    return %arg0, %c0_i32, %c0_i32_0 : i32, i32, i32
  }
  func.func @transform_16(%arg0: i32) -> (i32, i32, i32) {
    %c0_i32 = arith.constant 0 : i32
    %c0_i32_0 = arith.constant 0 : i32
    %c0_i32_1 = arith.constant 0 : i32
    return %arg0, %c0_i32, %c0_i32_0 : i32, i32, i32
  }
  func.func @transform_17(%arg0: i32) -> (i32, i32, i32) {
    %c0_i32 = arith.constant 0 : i32
    %c0_i32_0 = arith.constant 0 : i32
    %c0_i32_1 = arith.constant 0 : i32
    return %arg0, %c0_i32, %c0_i32_0 : i32, i32, i32
  }
  func.func @transform_18(%arg0: i32) -> (i32, i32, i32) {
    %c0_i32 = arith.constant 0 : i32
    %c0_i32_0 = arith.constant 0 : i32
    %c0_i32_1 = arith.constant 0 : i32
    return %arg0, %c0_i32, %c0_i32_0 : i32, i32, i32
  }
  func.func @transform_19(%arg0: i32) -> (i32, i32, i32) {
    %c0_i32 = arith.constant 0 : i32
    %c0_i32_0 = arith.constant 0 : i32
    %c0_i32_1 = arith.constant 0 : i32
    return %arg0, %c0_i32, %c0_i32_0 : i32, i32, i32
  }
  func.func @transform_20(%arg0: i32) -> (i32, i32, i32) {
    %c0_i32 = arith.constant 0 : i32
    %c0_i32_0 = arith.constant 0 : i32
    %c0_i32_1 = arith.constant 0 : i32
    return %arg0, %c0_i32, %c0_i32_0 : i32, i32, i32
  }
  func.func @transform_21(%arg0: i32) -> (i32, i32, i32) {
    %c0_i32 = arith.constant 0 : i32
    %c0_i32_0 = arith.constant 0 : i32
    %c0_i32_1 = arith.constant 0 : i32
    return %arg0, %c0_i32, %c0_i32_0 : i32, i32, i32
  }
  func.func @transform_22(%arg0: i32) -> (i32, i32, i32) {
    %c0_i32 = arith.constant 0 : i32
    %c0_i32_0 = arith.constant 0 : i32
    %c0_i32_1 = arith.constant 0 : i32
    return %arg0, %c0_i32, %c0_i32_0 : i32, i32, i32
  }
  func.func @transform_23(%arg0: i32) -> (i32, i32, i32) {
    %c0_i32 = arith.constant 0 : i32
    %c0_i32_0 = arith.constant 0 : i32
    %c0_i32_1 = arith.constant 0 : i32
    return %arg0, %c0_i32, %c0_i32_0 : i32, i32, i32
  }
  func.func @transform_24(%arg0: i32) -> (i32, i32, i32) {
    %c0_i32 = arith.constant 0 : i32
    %c0_i32_0 = arith.constant 0 : i32
    %c0_i32_1 = arith.constant 0 : i32
    return %arg0, %c0_i32, %c0_i32_0 : i32, i32, i32
  }
  func.func @transform_25(%arg0: i32) -> (i32, i32, i32) {
    %c0_i32 = arith.constant 0 : i32
    %c0_i32_0 = arith.constant 0 : i32
    %c0_i32_1 = arith.constant 0 : i32
    return %arg0, %c0_i32, %c0_i32_0 : i32, i32, i32
  }
  func.func @transform_26(%arg0: i32) -> (i32, i32, i32) {
    %c0_i32 = arith.constant 0 : i32
    %c0_i32_0 = arith.constant 0 : i32
    %c0_i32_1 = arith.constant 0 : i32
    return %arg0, %c0_i32, %c0_i32_0 : i32, i32, i32
  }
  func.func @transform_27(%arg0: i32) -> (i32, i32, i32) {
    %c0_i32 = arith.constant 0 : i32
    %c0_i32_0 = arith.constant 0 : i32
    %c0_i32_1 = arith.constant 0 : i32
    return %arg0, %c0_i32, %c0_i32_0 : i32, i32, i32
  }
  func.func @transform_28(%arg0: i32) -> (i32, i32, i32) {
    %c0_i32 = arith.constant 0 : i32
    %c0_i32_0 = arith.constant 0 : i32
    %c0_i32_1 = arith.constant 0 : i32
    return %arg0, %c0_i32, %c0_i32_0 : i32, i32, i32
  }
  func.func @transform_29(%arg0: i32) -> (i32, i32, i32) {
    %c0_i32 = arith.constant 0 : i32
    %c0_i32_0 = arith.constant 0 : i32
    %c0_i32_1 = arith.constant 0 : i32
    return %arg0, %c0_i32, %c0_i32_0 : i32, i32, i32
  }
  func.func @transform_30(%arg0: i32) -> (i32, i32) {
    %c0_i32 = arith.constant 0 : i32
    %c0_i32_0 = arith.constant 0 : i32
    %c0_i32_1 = arith.constant 0 : i32
    return %c0_i32, %c0_i32_0 : i32, i32
  }
  func.func @transform_31(%arg0: i32) -> (i32, i32) {
    %c0_i32 = arith.constant 0 : i32
    %c0_i32_0 = arith.constant 0 : i32
    %c0_i32_1 = arith.constant 0 : i32
    return %c0_i32, %c0_i32_0 : i32, i32
  }
  func.func @transform_32(%arg0: i32) -> (i32, i32, i32) {
    %c0_i32 = arith.constant 0 : i32
    %c0_i32_0 = arith.constant 0 : i32
    %c0_i32_1 = arith.constant 0 : i32
    %c0_i32_2 = arith.constant 0 : i32
    return %c0_i32, %c0_i32_0, %c0_i32_1 : i32, i32, i32
  }
}

</mosaic_0001>

<llo_original>
// kernel: tpu_custom_call.1
$region0: #{tpu_custom_call.1}
  #allocation0 [shape = 'u32[]', space=smem, size = 0x4, offset = 0x4, fixed_abs, tag = 'smem constant byte address 0x4 - core index']
  #allocation1 [shape = 'u32[72,128]{1,0:T(1,128)}', space=vmem, size = 0x9000, scoped, tag = 'internal scratch']
  %s0 = inlined_call_operand.smem [shape: u32[33], index: -1, kind: input, shape index: {}]
  %s1 = sld [smem:[%s0]]
  %s2 = scalar_lea.smem %s0, 1
  %s3 = sld [smem:[%s2]]
  %s4 = scalar_lea.smem %s0, 2
  %s5 = sld [smem:[%s4]]
  %s6 = scalar_lea.smem %s0, 3
  %s7 = sld [smem:[%s6]]
  %s8 = scalar_lea.smem %s0, 4
  %s9 = sld [smem:[%s8]]
  %s10 = scalar_lea.smem %s0, 5
  %s11 = sld [smem:[%s10]]
  %s12 = scalar_lea.smem %s0, 6
  %s13 = sld [smem:[%s12]]
  %s14 = scalar_lea.smem %s0, 7
  %s15 = sld [smem:[%s14]]
  %s16 = scalar_lea.smem %s0, 8
  %s17 = sld [smem:[%s16]]
  %s18 = scalar_lea.smem %s0, 9
  %s19 = sld [smem:[%s18]]
  %s20 = scalar_lea.smem %s0, 10
  %s21 = sld [smem:[%s20]]
  %s22 = scalar_lea.smem %s0, 11
  %s23 = sld [smem:[%s22]]
  %s24 = scalar_lea.smem %s0, 12
  %s25 = sld [smem:[%s24]]
  %s26 = scalar_lea.smem %s0, 13
  %s27 = sld [smem:[%s26]]
  %s28 = scalar_lea.smem %s0, 14
  %s29 = sld [smem:[%s28]]
  %s30 = scalar_lea.smem %s0, 15
  %s31 = sld [smem:[%s30]]
  %s32 = scalar_lea.smem %s0, 16
  %s33 = sld [smem:[%s32]]
  %s34 = scalar_lea.smem %s0, 17
  %s35 = sld [smem:[%s34]]
  %s36 = scalar_lea.smem %s0, 18
  %s37 = sld [smem:[%s36]]
  %s38 = scalar_lea.smem %s0, 19
  %s39 = sld [smem:[%s38]]
  %s40 = scalar_lea.smem %s0, 20
  %s41 = sld [smem:[%s40]]
  %s42 = scalar_lea.smem %s0, 21
  %s43 = sld [smem:[%s42]]
  %s44 = scalar_lea.smem %s0, 22
  %s45 = sld [smem:[%s44]]
  %s46 = scalar_lea.smem %s0, 23
  %s47 = sld [smem:[%s46]]
  %s48 = scalar_lea.smem %s0, 24
  %s49 = sld [smem:[%s48]]
  %s50 = scalar_lea.smem %s0, 25
  %s51 = sld [smem:[%s50]]
  %s52 = scalar_lea.smem %s0, 26
  %s53 = sld [smem:[%s52]]
  %s54 = scalar_lea.smem %s0, 27
  %s55 = sld [smem:[%s54]]
  %s56 = scalar_lea.smem %s0, 28
  %s57 = sld [smem:[%s56]]
  %s58 = scalar_lea.smem %s0, 29
  %s59 = sld [smem:[%s58]]
  %s60 = scalar_lea.smem %s0, 30
  %s61 = sld [smem:[%s60]]
  %s62 = scalar_lea.smem %s0, 31
  %s63 = sld [smem:[%s62]]
  %s64 = scalar_lea.smem %s0, 32
  %s65 = sld [smem:[%s64]]
  %s66 = sld [smem:[#allocation0]]
  $region245: #{tpu_custom_call.1} parent=0
    _
  %s68 = ssub.s32 1, %s66
  %s69 = scalar_select 0, %s68, %s66
  $region1: #{tpu_custom_call.1} parent=0
    #allocation2 [shape = 'u8[8192]{0}', space=vmem, size = 0x2000, scoped, tag = 'input window, operand 0, single buffered']
    #allocation3 [shape = 's32[2]{0}', space=sflag, size = 0x8, scoped, tag = 'scoped memory for tpu_custom_call.1']
    #allocation4 [shape = 's32[2]{0}', space=sflag, size = 0x8, scoped, tag = 'scoped memory for tpu_custom_call.1']
    #allocation5 [shape = 'u8[8192]{0}', space=vmem, size = 0x2000, scoped, tag = 'input window, operand 1, single buffered']
    #allocation6 [shape = 's32[1]{0}', space=sflag, size = 0x4, scoped, tag = 'scoped memory for tpu_custom_call.1']
    #allocation7 [shape = 'u8[4096]{0}', space=vmem, size = 0x1000, scoped, tag = 'input window, operand 2, single buffered']
    #allocation8 [shape = 'u8[4096]{0}', space=vmem, size = 0x1000, scoped, tag = 'input window, operand 3, single buffered']
    #allocation9 [shape = 's32[1]{0}', space=sflag, size = 0x4, scoped, tag = 'scoped memory for tpu_custom_call.1']
    #allocation10 [shape = 'u8[1024]{0}', space=vmem, size = 0x400, scoped, tag = 'input window, operand 5']
    #allocation11 [shape = 'u8[1024]{0}', space=vmem, size = 0x400, scoped, tag = 'input window, operand 6']
    #allocation12 [shape = 'u8[1024]{0}', space=vmem, size = 0x400, scoped, tag = 'input window, operand 7']
    #allocation13 [shape = 'u8[1024]{0}', space=vmem, size = 0x400, scoped, tag = 'input window, operand 8']
    #allocation14 [shape = 'u8[65536]{0}', space=vmem, size = 0x10000, scoped, tag = 'input window, operand 10']
    #allocation15 [shape = 'u8[65536]{0}', space=vmem, size = 0x10000, scoped, tag = 'input window, operand 12']
    #allocation16 [shape = 'u8[65536]{0}', space=vmem, size = 0x10000, scoped, tag = 'input window, operand 14']
    #allocation17 [shape = 'u8[65536]{0}', space=vmem, size = 0x10000, scoped, tag = 'input window, operand 16']
    #allocation18 [shape = 'u8[65536]{0}', space=vmem, size = 0x10000, scoped, tag = 'input window, operand 18']
    #allocation19 [shape = 'u8[65536]{0}', space=vmem, size = 0x10000, scoped, tag = 'input window, operand 20']
    #allocation20 [shape = 'u8[65536]{0}', space=vmem, size = 0x10000, scoped, tag = 'input window, operand 22']
    #allocation21 [shape = 'u8[65536]{0}', space=vmem, size = 0x10000, scoped, tag = 'input window, operand 24']
    #allocation22 [shape = 'u8[131072]{0}', space=vmem, size = 0x20000, scoped, tag = 'input window, operand 26']
    #allocation23 [shape = 'u8[131072]{0}', space=vmem, size = 0x20000, scoped, tag = 'input window, operand 28']
    #allocation24 [shape = 'u8[8192]{0}', space=vmem, size = 0x2000, scoped, tag = 'output window, operand 0, single buffered']
    %70 = vsyncpa [#allocation3], 0
    %71 = vsyncpa [#allocation6], 0
    %72 = vsyncpa [#allocation9], 0
    %73 = vsyncpa [#allocation4], 0
    loop: start=0, step=1, limit=4
    $region2: #{tpu_custom_call.1} parent=1 // loop_pre_header
      _
    $region3: #{tpu_custom_call.1} parent=1 // loop_header
      %s75 = sphi 0, %s79
      %p76 = scmp.ge.s32.totalorder %s75, 4
      %s83 = sphi 0, %s83
      %s85 = sphi 0, %s83
      %s86 = sphi 0, %s85
      %s100 = sphi 0, %s86
      %s104 = sphi 0, %s104
      %s106 = sphi 0, %s104
      %s107 = sphi 0, %s106
      %s121 = sphi 0, %s107
      %s125 = sphi 0, %s125
      %s127 = sphi 0, %s125
      %s128 = sphi 0, %s127
      %s142 = sphi 0, %s128
      %s146 = sphi 0, %s146
      %s148 = sphi 0, %s146
      %s149 = sphi 0, %s148
      %s163 = sphi 0, %s149
      %s169 = sphi 0, %s171
      %s172 = sphi 0, %s169
      %s173 = sphi 0, %s172
      %s189 = sphi 0, %s173
      %s195 = sphi 0, %s197
      %s198 = sphi 0, %s195
      %s199 = sphi 0, %s198
      %s215 = sphi 0, %s199
      %s221 = sphi 0, %s223
      %s224 = sphi 0, %s221
      %s225 = sphi 0, %s224
      %s241 = sphi 0, %s225
      %s247 = sphi 0, %s249
      %s250 = sphi 0, %s247
      %s251 = sphi 0, %s250
      %s267 = sphi 0, %s251
      %s273 = sphi 0, %s275
      %s276 = sphi 0, %s273
      %s277 = sphi 0, %s276
      %s293 = sphi 0, %s277
      %s299 = sphi 0, %s301
      %s302 = sphi 0, %s299
      %s303 = sphi 0, %s302
      %s319 = sphi 0, %s303
      %s325 = sphi 0, %s327
      %s328 = sphi 0, %s325
      %s329 = sphi 0, %s328
      %s345 = sphi 0, %s329
      %s351 = sphi 0, %s353
      %s354 = sphi 0, %s351
      %s355 = sphi 0, %s354
      %s371 = sphi 0, %s355
      %s377 = sphi 0, %s379
      %s380 = sphi 0, %s377
      %s381 = sphi 0, %s380
      %s397 = sphi 0, %s381
      %s403 = sphi 0, %s405
      %s406 = sphi 0, %s403
      %s407 = sphi 0, %s406
      %s423 = sphi 0, %s407
      %s429 = sphi 0, %s431
      %s432 = sphi 0, %s429
      %s433 = sphi 0, %s432
      %s449 = sphi 0, %s433
      %s455 = sphi 0, %s457
      %s458 = sphi 0, %s455
      %s459 = sphi 0, %s458
      %s475 = sphi 0, %s459
      %s481 = sphi 0, %s483
      %s484 = sphi 0, %s481
      %s485 = sphi 0, %s484
      %s501 = sphi 0, %s485
      %s507 = sphi 0, %s509
      %s510 = sphi 0, %s507
      %s511 = sphi 0, %s510
      %s527 = sphi 0, %s511
      %s533 = sphi 0, %s535
      %s536 = sphi 0, %s533
      %s537 = sphi 0, %s536
      %s553 = sphi 0, %s537
      %s559 = sphi 0, %s561
      %s562 = sphi 0, %s559
      %s563 = sphi 0, %s562
      %s579 = sphi 0, %s563
      %s585 = sphi 0, %s587
      %s588 = sphi 0, %s585
      %s589 = sphi 0, %s588
      %s605 = sphi 0, %s589
      %s611 = sphi 0, %s613
      %s614 = sphi 0, %s611
      %s615 = sphi 0, %s614
      %s631 = sphi 0, %s615
      %s637 = sphi 0, %s639
      %s640 = sphi 0, %s637
      %s641 = sphi 0, %s640
      %s657 = sphi 0, %s641
      %s663 = sphi 0, %s665
      %s666 = sphi 0, %s663
      %s667 = sphi 0, %s666
      %s683 = sphi 0, %s667
      %s689 = sphi 0, %s691
      %s692 = sphi 0, %s689
      %s693 = sphi 0, %s692
      %s709 = sphi 0, %s693
      %s715 = sphi 0, %s717
      %s718 = sphi 0, %s715
      %s719 = sphi 0, %s718
      %s735 = sphi 0, %s719
      %s741 = sphi 0, %s743
      %s744 = sphi 0, %s741
      %s745 = sphi 0, %s744
      %s761 = sphi 0, %s745
      %s767 = sphi 0, %s769
      %s770 = sphi 0, %s767
      %s771 = sphi 0, %s770
      %s787 = sphi 0, %s771
      %s793 = sphi 0, %s795
      %s796 = sphi 0, %s793
      %s797 = sphi 0, %s796
      %s813 = sphi 0, %s797
      %s819 = sphi 0, %s821
      %s822 = sphi 0, %s819
      %s823 = sphi 0, %s822
      %s839 = sphi 0, %s823
      %s843 = sphi 0, %s843
      %s845 = sphi 0, %s843
      %s846 = sphi 0, %s845
      %s860 = sphi 0, %s846
      %s864 = sphi 0, %s864
      %s866 = sphi 0, %s864
      %s867 = sphi 0, %s866
      %s881 = sphi 0, %s867
      %s885 = sphi 0, %s885
      %s887 = sphi 0, %s885
      %s888 = sphi 0, %s887
      %s902 = sphi 0, %s888
    $region4: #{tpu_custom_call.1} parent=1 // loop_header_branch
      %78 = sbr.rel (%p76) target = $region8
    $region5: #{tpu_custom_call.1} parent=1 // loop_body
      %s80 = ssub.s32 %s75, 1
      %s81 = ssub.s32 %s75, 2
      %s82 = sadd.s32 %s75, 1
      %s84 = sadd.s32 %s83, 1
      %p87 = scmp.eq.s32.totalorder %s75, 1
      %p88 = scmp.ne.s32.totalorder %s83, %s85
      %p89 = scmp.eq.s32.totalorder %s75, 0
      %p90 = por %p88, %p89
      %p91 = scmp.ne.s32.totalorder %s83, %s85
      %p92 = scmp.eq.s32.totalorder %s80, 1
      %p93 = por %p91, %p92
      %p94 = scmp.ne.s32.totalorder %s85, %s86
      %p95 = scmp.eq.s32.totalorder %s80, 0
      %p96 = por %p94, %p95
      %p97 = scmp.ne.s32.totalorder %s85, %s86
      %p98 = scmp.eq.s32.totalorder %s81, 1
      %p99 = por %p97, %p98
      %p101 = scmp.ne.s32.totalorder %s86, %s100
      %p102 = scmp.eq.s32.totalorder %s81, 0
      %p103 = por %p101, %p102
      %s105 = sadd.s32 %s104, 1
      %p108 = scmp.eq.s32.totalorder %s75, 1
      %p109 = scmp.ne.s32.totalorder %s104, %s106
      %p110 = scmp.eq.s32.totalorder %s75, 0
      %p111 = por %p109, %p110
      %p112 = scmp.ne.s32.totalorder %s104, %s106
      %p113 = scmp.eq.s32.totalorder %s80, 1
      %p114 = por %p112, %p113
      %p115 = scmp.ne.s32.totalorder %s106, %s107
      %p116 = scmp.eq.s32.totalorder %s80, 0
      %p117 = por %p115, %p116
      %p118 = scmp.ne.s32.totalorder %s106, %s107
      %p119 = scmp.eq.s32.totalorder %s81, 1
      %p120 = por %p118, %p119
      %p122 = scmp.ne.s32.totalorder %s107, %s121
      %p123 = scmp.eq.s32.totalorder %s81, 0
      %p124 = por %p122, %p123
      %s126 = sadd.s32 %s125, 1
      %p129 = scmp.eq.s32.totalorder %s75, 1
      %p130 = scmp.ne.s32.totalorder %s125, %s127
      %p131 = scmp.eq.s32.totalorder %s75, 0
      %p132 = por %p130, %p131
      %p133 = scmp.ne.s32.totalorder %s125, %s127
      %p134 = scmp.eq.s32.totalorder %s80, 1
      %p135 = por %p133, %p134
      %p136 = scmp.ne.s32.totalorder %s127, %s128
      %p137 = scmp.eq.s32.totalorder %s80, 0
      %p138 = por %p136, %p137
      %p139 = scmp.ne.s32.totalorder %s127, %s128
      %p140 = scmp.eq.s32.totalorder %s81, 1
      %p141 = por %p139, %p140
      %p143 = scmp.ne.s32.totalorder %s128, %s142
      %p144 = scmp.eq.s32.totalorder %s81, 0
      %p145 = por %p143, %p144
      %s147 = sadd.s32 %s146, 1
      %p150 = scmp.eq.s32.totalorder %s75, 1
      %p151 = scmp.ne.s32.totalorder %s146, %s148
      %p152 = scmp.eq.s32.totalorder %s75, 0
      %p153 = por %p151, %p152
      %p154 = scmp.ne.s32.totalorder %s146, %s148
      %p155 = scmp.eq.s32.totalorder %s80, 1
      %p156 = por %p154, %p155
      %p157 = scmp.ne.s32.totalorder %s148, %s149
      %p158 = scmp.eq.s32.totalorder %s80, 0
      %p159 = por %p157, %p158
      %p160 = scmp.ne.s32.totalorder %s148, %s149
      %p161 = scmp.eq.s32.totalorder %s81, 1
      %p162 = por %p160, %p161
      %p164 = scmp.ne.s32.totalorder %s149, %s163
      %p165 = scmp.eq.s32.totalorder %s81, 0
      %p166 = por %p164, %p165
      %s167 = ssub.s32 %s75, %s82
      %p168 = scmp.eq.s32.totalorder %s167, 0
      %s170 = sadd.s32 %s169, 1
      %s171 = scalar_select %p168, %s169, %s170
      %p174 = pneg %p168
      %p175 = scmp.eq.s32.totalorder %s75, 1
      %p176 = por %p174, %p175
      %p177 = scmp.ne.s32.totalorder %s169, %s172
      %p178 = scmp.eq.s32.totalorder %s75, 0
      %p179 = por %p177, %p178
      %p180 = scmp.ne.s32.totalorder %s169, %s172
      %p181 = scmp.eq.s32.totalorder %s80, 1
      %p182 = por %p180, %p181
      %p183 = scmp.ne.s32.totalorder %s172, %s173
      %p184 = scmp.eq.s32.totalorder %s80, 0
      %p185 = por %p183, %p184
      %p186 = scmp.ne.s32.totalorder %s172, %s173
      %p187 = scmp.eq.s32.totalorder %s81, 1
      %p188 = por %p186, %p187
      %p190 = scmp.ne.s32.totalorder %s173, %s189
      %p191 = scmp.eq.s32.totalorder %s81, 0
      %p192 = por %p190, %p191
      %s193 = ssub.s32 %s75, %s82
      %p194 = scmp.eq.s32.totalorder %s193, 0
      %s196 = sadd.s32 %s195, 1
      %s197 = scalar_select %p194, %s195, %s196
      %p200 = pneg %p194
      %p201 = scmp.eq.s32.totalorder %s75, 1
      %p202 = por %p200, %p201
      %p203 = scmp.ne.s32.totalorder %s195, %s198
      %p204 = scmp.eq.s32.totalorder %s75, 0
      %p205 = por %p203, %p204
      %p206 = scmp.ne.s32.totalorder %s195, %s198
      %p207 = scmp.eq.s32.totalorder %s80, 1
      %p208 = por %p206, %p207
      %p209 = scmp.ne.s32.totalorder %s198, %s199
      %p210 = scmp.eq.s32.totalorder %s80, 0
      %p211 = por %p209, %p210
      %p212 = scmp.ne.s32.totalorder %s198, %s199
      %p213 = scmp.eq.s32.totalorder %s81, 1
      %p214 = por %p212, %p213
      %p216 = scmp.ne.s32.totalorder %s199, %s215
      %p217 = scmp.eq.s32.totalorder %s81, 0
      %p218 = por %p216, %p217
      %s219 = ssub.s32 %s75, %s82
      %p220 = scmp.eq.s32.totalorder %s219, 0
      %s222 = sadd.s32 %s221, 1
      %s223 = scalar_select %p220, %s221, %s222
      %p226 = pneg %p220
      %p227 = scmp.eq.s32.totalorder %s75, 1
      %p228 = por %p226, %p227
      %p229 = scmp.ne.s32.totalorder %s221, %s224
      %p230 = scmp.eq.s32.totalorder %s75, 0
      %p231 = por %p229, %p230
      %p232 = scmp.ne.s32.totalorder %s221, %s224
      %p233 = scmp.eq.s32.totalorder %s80, 1
      %p234 = por %p232, %p233
      %p235 = scmp.ne.s32.totalorder %s224, %s225
      %p236 = scmp.eq.s32.totalorder %s80, 0
      %p237 = por %p235, %p236
      %p238 = scmp.ne.s32.totalorder %s224, %s225
      %p239 = scmp.eq.s32.totalorder %s81, 1
      %p240 = por %p238, %p239
      %p242 = scmp.ne.s32.totalorder %s225, %s241
      %p243 = scmp.eq.s32.totalorder %s81, 0
      %p244 = por %p242, %p243
      %s245 = ssub.s32 %s75, %s82
      %p246 = scmp.eq.s32.totalorder %s245, 0
      %s248 = sadd.s32 %s247, 1
      %s249 = scalar_select %p246, %s247, %s248
      %p252 = pneg %p246
      %p253 = scmp.eq.s32.totalorder %s75, 1
      %p254 = por %p252, %p253
      %p255 = scmp.ne.s32.totalorder %s247, %s250
      %p256 = scmp.eq.s32.totalorder %s75, 0
      %p257 = por %p255, %p256
      %p258 = scmp.ne.s32.totalorder %s247, %s250
      %p259 = scmp.eq.s32.totalorder %s80, 1
      %p260 = por %p258, %p259
      %p261 = scmp.ne.s32.totalorder %s250, %s251
      %p262 = scmp.eq.s32.totalorder %s80, 0
      %p263 = por %p261, %p262
      %p264 = scmp.ne.s32.totalorder %s250, %s251
      %p265 = scmp.eq.s32.totalorder %s81, 1
      %p266 = por %p264, %p265
      %p268 = scmp.ne.s32.totalorder %s251, %s267
      %p269 = scmp.eq.s32.totalorder %s81, 0
      %p270 = por %p268, %p269
      %s271 = ssub.s32 %s75, %s82
      %p272 = scmp.eq.s32.totalorder %s271, 0
      %s274 = sadd.s32 %s273, 1
      %s275 = scalar_select %p272, %s273, %s274
      %p278 = pneg %p272
      %p279 = scmp.eq.s32.totalorder %s75, 1
      %p280 = por %p278, %p279
      %p281 = scmp.ne.s32.totalorder %s273, %s276
      %p282 = scmp.eq.s32.totalorder %s75, 0
      %p283 = por %p281, %p282
      %p284 = scmp.ne.s32.totalorder %s273, %s276
      %p285 = scmp.eq.s32.totalorder %s80, 1
      %p286 = por %p284, %p285
      %p287 = scmp.ne.s32.totalorder %s276, %s277
      %p288 = scmp.eq.s32.totalorder %s80, 0
      %p289 = por %p287, %p288
      %p290 = scmp.ne.s32.totalorder %s276, %s277
      %p291 = scmp.eq.s32.totalorder %s81, 1
      %p292 = por %p290, %p291
      %p294 = scmp.ne.s32.totalorder %s277, %s293
      %p295 = scmp.eq.s32.totalorder %s81, 0
      %p296 = por %p294, %p295
      %s297 = ssub.s32 %s75, %s82
      %p298 = scmp.eq.s32.totalorder %s297, 0
      %s300 = sadd.s32 %s299, 1
      %s301 = scalar_select %p298, %s299, %s300
      %p304 = pneg %p298
      %p305 = scmp.eq.s32.totalorder %s75, 1
      %p306 = por %p304, %p305
      %p307 = scmp.ne.s32.totalorder %s299, %s302
      %p308 = scmp.eq.s32.totalorder %s75, 0
      %p309 = por %p307, %p308
      %p310 = scmp.ne.s32.totalorder %s299, %s302
      %p311 = scmp.eq.s32.totalorder %s80, 1
      %p312 = por %p310, %p311
      %p313 = scmp.ne.s32.totalorder %s302, %s303
      %p314 = scmp.eq.s32.totalorder %s80, 0
      %p315 = por %p313, %p314
      %p316 = scmp.ne.s32.totalorder %s302, %s303
      %p317 = scmp.eq.s32.totalorder %s81, 1
      %p318 = por %p316, %p317
      %p320 = scmp.ne.s32.totalorder %s303, %s319
      %p321 = scmp.eq.s32.totalorder %s81, 0
      %p322 = por %p320, %p321
      %s323 = ssub.s32 %s75, %s82
      %p324 = scmp.eq.s32.totalorder %s323, 0
      %s326 = sadd.s32 %s325, 1
      %s327 = scalar_select %p324, %s325, %s326
      %p330 = pneg %p324
      %p331 = scmp.eq.s32.totalorder %s75, 1
      %p332 = por %p330, %p331
      %p333 = scmp.ne.s32.totalorder %s325, %s328
      %p334 = scmp.eq.s32.totalorder %s75, 0
      %p335 = por %p333, %p334
      %p336 = scmp.ne.s32.totalorder %s325, %s328
      %p337 = scmp.eq.s32.totalorder %s80, 1
      %p338 = por %p336, %p337
      %p339 = scmp.ne.s32.totalorder %s328, %s329
      %p340 = scmp.eq.s32.totalorder %s80, 0
      %p341 = por %p339, %p340
      %p342 = scmp.ne.s32.totalorder %s328, %s329
      %p343 = scmp.eq.s32.totalorder %s81, 1
      %p344 = por %p342, %p343
      %p346 = scmp.ne.s32.totalorder %s329, %s345
      %p347 = scmp.eq.s32.totalorder %s81, 0
      %p348 = por %p346, %p347
      %s349 = ssub.s32 %s75, %s82
      %p350 = scmp.eq.s32.totalorder %s349, 0
      %s352 = sadd.s32 %s351, 1
      %s353 = scalar_select %p350, %s351, %s352
      %p356 = pneg %p350
      %p357 = scmp.eq.s32.totalorder %s75, 1
      %p358 = por %p356, %p357
      %p359 = scmp.ne.s32.totalorder %s351, %s354
      %p360 = scmp.eq.s32.totalorder %s75, 0
      %p361 = por %p359, %p360
      %p362 = scmp.ne.s32.totalorder %s351, %s354
      %p363 = scmp.eq.s32.totalorder %s80, 1
      %p364 = por %p362, %p363
      %p365 = scmp.ne.s32.totalorder %s354, %s355
      %p366 = scmp.eq.s32.totalorder %s80, 0
      %p367 = por %p365, %p366
      %p368 = scmp.ne.s32.totalorder %s354, %s355
      %p369 = scmp.eq.s32.totalorder %s81, 1
      %p370 = por %p368, %p369
      %p372 = scmp.ne.s32.totalorder %s355, %s371
      %p373 = scmp.eq.s32.totalorder %s81, 0
      %p374 = por %p372, %p373
      %s375 = ssub.s32 %s75, %s82
      %p376 = scmp.eq.s32.totalorder %s375, 0
      %s378 = sadd.s32 %s377, 1
      %s379 = scalar_select %p376, %s377, %s378
      %p382 = pneg %p376
      %p383 = scmp.eq.s32.totalorder %s75, 1
      %p384 = por %p382, %p383
      %p385 = scmp.ne.s32.totalorder %s377, %s380
      %p386 = scmp.eq.s32.totalorder %s75, 0
      %p387 = por %p385, %p386
      %p388 = scmp.ne.s32.totalorder %s377, %s380
      %p389 = scmp.eq.s32.totalorder %s80, 1
      %p390 = por %p388, %p389
      %p391 = scmp.ne.s32.totalorder %s380, %s381
      %p392 = scmp.eq.s32.totalorder %s80, 0
      %p393 = por %p391, %p392
      %p394 = scmp.ne.s32.totalorder %s380, %s381
      %p395 = scmp.eq.s32.totalorder %s81, 1
      %p396 = por %p394, %p395
      %p398 = scmp.ne.s32.totalorder %s381, %s397
      %p399 = scmp.eq.s32.totalorder %s81, 0
      %p400 = por %p398, %p399
      %s401 = ssub.s32 %s75, %s82
      %p402 = scmp.eq.s32.totalorder %s401, 0
      %s404 = sadd.s32 %s403, 1
      %s405 = scalar_select %p402, %s403, %s404
      %p408 = pneg %p402
      %p409 = scmp.eq.s32.totalorder %s75, 1
      %p410 = por %p408, %p409
      %p411 = scmp.ne.s32.totalorder %s403, %s406
      %p412 = scmp.eq.s32.totalorder %s75, 0
      %p413 = por %p411, %p412
      %p414 = scmp.ne.s32.totalorder %s403, %s406
      %p415 = scmp.eq.s32.totalorder %s80, 1
      %p416 = por %p414, %p415
      %p417 = scmp.ne.s32.totalorder %s406, %s407
      %p418 = scmp.eq.s32.totalorder %s80, 0
      %p419 = por %p417, %p418
      %p420 = scmp.ne.s32.totalorder %s406, %s407
      %p421 = scmp.eq.s32.totalorder %s81, 1
      %p422 = por %p420, %p421
      %p424 = scmp.ne.s32.totalorder %s407, %s423
      %p425 = scmp.eq.s32.totalorder %s81, 0
      %p426 = por %p424, %p425
      %s427 = ssub.s32 %s75, %s82
      %p428 = scmp.eq.s32.totalorder %s427, 0
      %s430 = sadd.s32 %s429, 1
      %s431 = scalar_select %p428, %s429, %s430
      %p434 = pneg %p428
      %p435 = scmp.eq.s32.totalorder %s75, 1
      %p436 = por %p434, %p435
      %p437 = scmp.ne.s32.totalorder %s429, %s432
      %p438 = scmp.eq.s32.totalorder %s75, 0
      %p439 = por %p437, %p438
      %p440 = scmp.ne.s32.totalorder %s429, %s432
      %p441 = scmp.eq.s32.totalorder %s80, 1
      %p442 = por %p440, %p441
      %p443 = scmp.ne.s32.totalorder %s432, %s433
      %p444 = scmp.eq.s32.totalorder %s80, 0
      %p445 = por %p443, %p444
      %p446 = scmp.ne.s32.totalorder %s432, %s433
      %p447 = scmp.eq.s32.totalorder %s81, 1
      %p448 = por %p446, %p447
      %p450 = scmp.ne.s32.totalorder %s433, %s449
      %p451 = scmp.eq.s32.totalorder %s81, 0
      %p452 = por %p450, %p451
      %s453 = ssub.s32 %s75, %s82
      %p454 = scmp.eq.s32.totalorder %s453, 0
      %s456 = sadd.s32 %s455, 1
      %s457 = scalar_select %p454, %s455, %s456
      %p460 = pneg %p454
      %p461 = scmp.eq.s32.totalorder %s75, 1
      %p462 = por %p460, %p461
      %p463 = scmp.ne.s32.totalorder %s455, %s458
      %p464 = scmp.eq.s32.totalorder %s75, 0
      %p465 = por %p463, %p464
      %p466 = scmp.ne.s32.totalorder %s455, %s458
      %p467 = scmp.eq.s32.totalorder %s80, 1
      %p468 = por %p466, %p467
      %p469 = scmp.ne.s32.totalorder %s458, %s459
      %p470 = scmp.eq.s32.totalorder %s80, 0
      %p471 = por %p469, %p470
      %p472 = scmp.ne.s32.totalorder %s458, %s459
      %p473 = scmp.eq.s32.totalorder %s81, 1
      %p474 = por %p472, %p473
      %p476 = scmp.ne.s32.totalorder %s459, %s475
      %p477 = scmp.eq.s32.totalorder %s81, 0
      %p478 = por %p476, %p477
      %s479 = ssub.s32 %s75, %s82
      %p480 = scmp.eq.s32.totalorder %s479, 0
      %s482 = sadd.s32 %s481, 1
      %s483 = scalar_select %p480, %s481, %s482
      %p486 = pneg %p480
      %p487 = scmp.eq.s32.totalorder %s75, 1
      %p488 = por %p486, %p487
      %p489 = scmp.ne.s32.totalorder %s481, %s484
      %p490 = scmp.eq.s32.totalorder %s75, 0
      %p491 = por %p489, %p490
      %p492 = scmp.ne.s32.totalorder %s481, %s484
      %p493 = scmp.eq.s32.totalorder %s80, 1
      %p494 = por %p492, %p493
      %p495 = scmp.ne.s32.totalorder %s484, %s485
      %p496 = scmp.eq.s32.totalorder %s80, 0
      %p497 = por %p495, %p496
      %p498 = scmp.ne.s32.totalorder %s484, %s485
      %p499 = scmp.eq.s32.totalorder %s81, 1
      %p500 = por %p498, %p499
      %p502 = scmp.ne.s32.totalorder %s485, %s501
      %p503 = scmp.eq.s32.totalorder %s81, 0
      %p504 = por %p502, %p503
      %s505 = ssub.s32 %s75, %s82
      %p506 = scmp.eq.s32.totalorder %s505, 0
      %s508 = sadd.s32 %s507, 1
      %s509 = scalar_select %p506, %s507, %s508
      %p512 = pneg %p506
      %p513 = scmp.eq.s32.totalorder %s75, 1
      %p514 = por %p512, %p513
      %p515 = scmp.ne.s32.totalorder %s507, %s510
      %p516 = scmp.eq.s32.totalorder %s75, 0
      %p517 = por %p515, %p516
      %p518 = scmp.ne.s32.totalorder %s507, %s510
      %p519 = scmp.eq.s32.totalorder %s80, 1
      %p520 = por %p518, %p519
      %p521 = scmp.ne.s32.totalorder %s510, %s511
      %p522 = scmp.eq.s32.totalorder %s80, 0
      %p523 = por %p521, %p522
      %p524 = scmp.ne.s32.totalorder %s510, %s511
      %p525 = scmp.eq.s32.totalorder %s81, 1
      %p526 = por %p524, %p525
      %p528 = scmp.ne.s32.totalorder %s511, %s527
      %p529 = scmp.eq.s32.totalorder %s81, 0
      %p530 = por %p528, %p529
      %s531 = ssub.s32 %s75, %s82
      %p532 = scmp.eq.s32.totalorder %s531, 0
      %s534 = sadd.s32 %s533, 1
      %s535 = scalar_select %p532, %s533, %s534
      %p538 = pneg %p532
      %p539 = scmp.eq.s32.totalorder %s75, 1
      %p540 = por %p538, %p539
      %p541 = scmp.ne.s32.totalorder %s533, %s536
      %p542 = scmp.eq.s32.totalorder %s75, 0
      %p543 = por %p541, %p542
      %p544 = scmp.ne.s32.totalorder %s533, %s536
      %p545 = scmp.eq.s32.totalorder %s80, 1
      %p546 = por %p544, %p545
      %p547 = scmp.ne.s32.totalorder %s536, %s537
      %p548 = scmp.eq.s32.totalorder %s80, 0
      %p549 = por %p547, %p548
      %p550 = scmp.ne.s32.totalorder %s536, %s537
      %p551 = scmp.eq.s32.totalorder %s81, 1
      %p552 = por %p550, %p551
      %p554 = scmp.ne.s32.totalorder %s537, %s553
      %p555 = scmp.eq.s32.totalorder %s81, 0
      %p556 = por %p554, %p555
      %s557 = ssub.s32 %s75, %s82
      %p558 = scmp.eq.s32.totalorder %s557, 0
      %s560 = sadd.s32 %s559, 1
      %s561 = scalar_select %p558, %s559, %s560
      %p564 = pneg %p558
      %p565 = scmp.eq.s32.totalorder %s75, 1
      %p566 = por %p564, %p565
      %p567 = scmp.ne.s32.totalorder %s559, %s562
      %p568 = scmp.eq.s32.totalorder %s75, 0
      %p569 = por %p567, %p568
      %p570 = scmp.ne.s32.totalorder %s559, %s562
      %p571 = scmp.eq.s32.totalorder %s80, 1
      %p572 = por %p570, %p571
      %p573 = scmp.ne.s32.totalorder %s562, %s563
      %p574 = scmp.eq.s32.totalorder %s80, 0
      %p575 = por %p573, %p574
      %p576 = scmp.ne.s32.totalorder %s562, %s563
      %p577 = scmp.eq.s32.totalorder %s81, 1
      %p578 = por %p576, %p577
      %p580 = scmp.ne.s32.totalorder %s563, %s579
      %p581 = scmp.eq.s32.totalorder %s81, 0
      %p582 = por %p580, %p581
      %s583 = ssub.s32 %s75, %s82
      %p584 = scmp.eq.s32.totalorder %s583, 0
      %s586 = sadd.s32 %s585, 1
      %s587 = scalar_select %p584, %s585, %s586
      %p590 = pneg %p584
      %p591 = scmp.eq.s32.totalorder %s75, 1
      %p592 = por %p590, %p591
      %p593 = scmp.ne.s32.totalorder %s585, %s588
      %p594 = scmp.eq.s32.totalorder %s75, 0
      %p595 = por %p593, %p594
      %p596 = scmp.ne.s32.totalorder %s585, %s588
      %p597 = scmp.eq.s32.totalorder %s80, 1
      %p598 = por %p596, %p597
      %p599 = scmp.ne.s32.totalorder %s588, %s589
      %p600 = scmp.eq.s32.totalorder %s80, 0
      %p601 = por %p599, %p600
      %p602 = scmp.ne.s32.totalorder %s588, %s589
      %p603 = scmp.eq.s32.totalorder %s81, 1
      %p604 = por %p602, %p603
      %p606 = scmp.ne.s32.totalorder %s589, %s605
      %p607 = scmp.eq.s32.totalorder %s81, 0
      %p608 = por %p606, %p607
      %s609 = ssub.s32 %s75, %s82
      %p610 = scmp.eq.s32.totalorder %s609, 0
      %s612 = sadd.s32 %s611, 1
      %s613 = scalar_select %p610, %s611, %s612
      %p616 = pneg %p610
      %p617 = scmp.eq.s32.totalorder %s75, 1
      %p618 = por %p616, %p617
      %p619 = scmp.ne.s32.totalorder %s611, %s614
      %p620 = scmp.eq.s32.totalorder %s75, 0
      %p621 = por %p619, %p620
      %p622 = scmp.ne.s32.totalorder %s611, %s614
      %p623 = scmp.eq.s32.totalorder %s80, 1
      %p624 = por %p622, %p623
      %p625 = scmp.ne.s32.totalorder %s614, %s615
      %p626 = scmp.eq.s32.totalorder %s80, 0
      %p627 = por %p625, %p626
      %p628 = scmp.ne.s32.totalorder %s614, %s615
      %p629 = scmp.eq.s32.totalorder %s81, 1
      %p630 = por %p628, %p629
      %p632 = scmp.ne.s32.totalorder %s615, %s631
      %p633 = scmp.eq.s32.totalorder %s81, 0
      %p634 = por %p632, %p633
      %s635 = ssub.s32 %s75, %s82
      %p636 = scmp.eq.s32.totalorder %s635, 0
      %s638 = sadd.s32 %s637, 1
      %s639 = scalar_select %p636, %s637, %s638
      %p642 = pneg %p636
      %p643 = scmp.eq.s32.totalorder %s75, 1
      %p644 = por %p642, %p643
      %p645 = scmp.ne.s32.totalorder %s637, %s640
      %p646 = scmp.eq.s32.totalorder %s75, 0
      %p647 = por %p645, %p646
      %p648 = scmp.ne.s32.totalorder %s637, %s640
      %p649 = scmp.eq.s32.totalorder %s80, 1
      %p650 = por %p648, %p649
      %p651 = scmp.ne.s32.totalorder %s640, %s641
      %p652 = scmp.eq.s32.totalorder %s80, 0
      %p653 = por %p651, %p652
      %p654 = scmp.ne.s32.totalorder %s640, %s641
      %p655 = scmp.eq.s32.totalorder %s81, 1
      %p656 = por %p654, %p655
      %p658 = scmp.ne.s32.totalorder %s641, %s657
      %p659 = scmp.eq.s32.totalorder %s81, 0
      %p660 = por %p658, %p659
      %s661 = ssub.s32 %s75, %s82
      %p662 = scmp.eq.s32.totalorder %s661, 0
      %s664 = sadd.s32 %s663, 1
      %s665 = scalar_select %p662, %s663, %s664
      %p668 = pneg %p662
      %p669 = scmp.eq.s32.totalorder %s75, 1
      %p670 = por %p668, %p669
      %p671 = scmp.ne.s32.totalorder %s663, %s666
      %p672 = scmp.eq.s32.totalorder %s75, 0
      %p673 = por %p671, %p672
      %p674 = scmp.ne.s32.totalorder %s663, %s666
      %p675 = scmp.eq.s32.totalorder %s80, 1
      %p676 = por %p674, %p675
      %p677 = scmp.ne.s32.totalorder %s666, %s667
      %p678 = scmp.eq.s32.totalorder %s80, 0
      %p679 = por %p677, %p678
      %p680 = scmp.ne.s32.totalorder %s666, %s667
      %p681 = scmp.eq.s32.totalorder %s81, 1
      %p682 = por %p680, %p681
      %p684 = scmp.ne.s32.totalorder %s667, %s683
      %p685 = scmp.eq.s32.totalorder %s81, 0
      %p686 = por %p684, %p685
      %s687 = ssub.s32 %s75, %s82
      %p688 = scmp.eq.s32.totalorder %s687, 0
      %s690 = sadd.s32 %s689, 1
      %s691 = scalar_select %p688, %s689, %s690
      %p694 = pneg %p688
      %p695 = scmp.eq.s32.totalorder %s75, 1
      %p696 = por %p694, %p695
      %p697 = scmp.ne.s32.totalorder %s689, %s692
      %p698 = scmp.eq.s32.totalorder %s75, 0
      %p699 = por %p697, %p698
      %p700 = scmp.ne.s32.totalorder %s689, %s692
      %p701 = scmp.eq.s32.totalorder %s80, 1
      %p702 = por %p700, %p701
      %p703 = scmp.ne.s32.totalorder %s692, %s693
      %p704 = scmp.eq.s32.totalorder %s80, 0
      %p705 = por %p703, %p704
      %p706 = scmp.ne.s32.totalorder %s692, %s693
      %p707 = scmp.eq.s32.totalorder %s81, 1
      %p708 = por %p706, %p707
      %p710 = scmp.ne.s32.totalorder %s693, %s709
      %p711 = scmp.eq.s32.totalorder %s81, 0
      %p712 = por %p710, %p711
      %s713 = ssub.s32 %s75, %s82
      %p714 = scmp.eq.s32.totalorder %s713, 0
      %s716 = sadd.s32 %s715, 1
      %s717 = scalar_select %p714, %s715, %s716
      %p720 = pneg %p714
      %p721 = scmp.eq.s32.totalorder %s75, 1
      %p722 = por %p720, %p721
      %p723 = scmp.ne.s32.totalorder %s715, %s718
      %p724 = scmp.eq.s32.totalorder %s75, 0
      %p725 = por %p723, %p724
      %p726 = scmp.ne.s32.totalorder %s715, %s718
      %p727 = scmp.eq.s32.totalorder %s80, 1
      %p728 = por %p726, %p727
      %p729 = scmp.ne.s32.totalorder %s718, %s719
      %p730 = scmp.eq.s32.totalorder %s80, 0
      %p731 = por %p729, %p730
      %p732 = scmp.ne.s32.totalorder %s718, %s719
      %p733 = scmp.eq.s32.totalorder %s81, 1
      %p734 = por %p732, %p733
      %p736 = scmp.ne.s32.totalorder %s719, %s735
      %p737 = scmp.eq.s32.totalorder %s81, 0
      %p738 = por %p736, %p737
      %s739 = ssub.s32 %s75, %s82
      %p740 = scmp.eq.s32.totalorder %s739, 0
      %s742 = sadd.s32 %s741, 1
      %s743 = scalar_select %p740, %s741, %s742
      %p746 = pneg %p740
      %p747 = scmp.eq.s32.totalorder %s75, 1
      %p748 = por %p746, %p747
      %p749 = scmp.ne.s32.totalorder %s741, %s744
      %p750 = scmp.eq.s32.totalorder %s75, 0
      %p751 = por %p749, %p750
      %p752 = scmp.ne.s32.totalorder %s741, %s744
      %p753 = scmp.eq.s32.totalorder %s80, 1
      %p754 = por %p752, %p753
      %p755 = scmp.ne.s32.totalorder %s744, %s745
      %p756 = scmp.eq.s32.totalorder %s80, 0
      %p757 = por %p755, %p756
      %p758 = scmp.ne.s32.totalorder %s744, %s745
      %p759 = scmp.eq.s32.totalorder %s81, 1
      %p760 = por %p758, %p759
      %p762 = scmp.ne.s32.totalorder %s745, %s761
      %p763 = scmp.eq.s32.totalorder %s81, 0
      %p764 = por %p762, %p763
      %s765 = ssub.s32 %s75, %s82
      %p766 = scmp.eq.s32.totalorder %s765, 0
      %s768 = sadd.s32 %s767, 1
      %s769 = scalar_select %p766, %s767, %s768
      %p772 = pneg %p766
      %p773 = scmp.eq.s32.totalorder %s75, 1
      %p774 = por %p772, %p773
      %p775 = scmp.ne.s32.totalorder %s767, %s770
      %p776 = scmp.eq.s32.totalorder %s75, 0
      %p777 = por %p775, %p776
      %p778 = scmp.ne.s32.totalorder %s767, %s770
      %p779 = scmp.eq.s32.totalorder %s80, 1
      %p780 = por %p778, %p779
      %p781 = scmp.ne.s32.totalorder %s770, %s771
      %p782 = scmp.eq.s32.totalorder %s80, 0
      %p783 = por %p781, %p782
      %p784 = scmp.ne.s32.totalorder %s770, %s771
      %p785 = scmp.eq.s32.totalorder %s81, 1
      %p786 = por %p784, %p785
      %p788 = scmp.ne.s32.totalorder %s771, %s787
      %p789 = scmp.eq.s32.totalorder %s81, 0
      %p790 = por %p788, %p789
      %s791 = ssub.s32 %s75, %s82
      %p792 = scmp.eq.s32.totalorder %s791, 0
      %s794 = sadd.s32 %s793, 1
      %s795 = scalar_select %p792, %s793, %s794
      %p798 = pneg %p792
      %p799 = scmp.eq.s32.totalorder %s75, 1
      %p800 = por %p798, %p799
      %p801 = scmp.ne.s32.totalorder %s793, %s796
      %p802 = scmp.eq.s32.totalorder %s75, 0
      %p803 = por %p801, %p802
      %p804 = scmp.ne.s32.totalorder %s793, %s796
      %p805 = scmp.eq.s32.totalorder %s80, 1
      %p806 = por %p804, %p805
      %p807 = scmp.ne.s32.totalorder %s796, %s797
      %p808 = scmp.eq.s32.totalorder %s80, 0
      %p809 = por %p807, %p808
      %p810 = scmp.ne.s32.totalorder %s796, %s797
      %p811 = scmp.eq.s32.totalorder %s81, 1
      %p812 = por %p810, %p811
      %p814 = scmp.ne.s32.totalorder %s797, %s813
      %p815 = scmp.eq.s32.totalorder %s81, 0
      %p816 = por %p814, %p815
      %s817 = ssub.s32 %s75, %s82
      %p818 = scmp.eq.s32.totalorder %s817, 0
      %s820 = sadd.s32 %s819, 1
      %s821 = scalar_select %p818, %s819, %s820
      %p824 = pneg %p818
      %p825 = scmp.eq.s32.totalorder %s75, 1
      %p826 = por %p824, %p825
      %p827 = scmp.ne.s32.totalorder %s819, %s822
      %p828 = scmp.eq.s32.totalorder %s75, 0
      %p829 = por %p827, %p828
      %p830 = scmp.ne.s32.totalorder %s819, %s822
      %p831 = scmp.eq.s32.totalorder %s80, 1
      %p832 = por %p830, %p831
      %p833 = scmp.ne.s32.totalorder %s822, %s823
      %p834 = scmp.eq.s32.totalorder %s80, 0
      %p835 = por %p833, %p834
      %p836 = scmp.ne.s32.totalorder %s822, %s823
      %p837 = scmp.eq.s32.totalorder %s81, 1
      %p838 = por %p836, %p837
      %p840 = scmp.ne.s32.totalorder %s823, %s839
      %p841 = scmp.eq.s32.totalorder %s81, 0
      %p842 = por %p840, %p841
      %s844 = sadd.s32 %s843, 1
      %p847 = scmp.eq.s32.totalorder %s75, 1
      %p848 = scmp.ne.s32.totalorder %s843, %s845
      %p849 = scmp.eq.s32.totalorder %s75, 0
      %p850 = por %p848, %p849
      %p851 = scmp.ne.s32.totalorder %s843, %s845
      %p852 = scmp.eq.s32.totalorder %s80, 1
      %p853 = por %p851, %p852
      %p854 = scmp.ne.s32.totalorder %s845, %s846
      %p855 = scmp.eq.s32.totalorder %s80, 0
      %p856 = por %p854, %p855
      %p857 = scmp.ne.s32.totalorder %s845, %s846
      %p858 = scmp.eq.s32.totalorder %s81, 1
      %p859 = por %p857, %p858
      %p861 = scmp.ne.s32.totalorder %s846, %s860
      %p862 = scmp.eq.s32.totalorder %s81, 0
      %p863 = por %p861, %p862
      %s865 = sadd.s32 %s864, 1
      %p868 = scmp.eq.s32.totalorder %s75, 1
      %p869 = scmp.ne.s32.totalorder %s864, %s866
      %p870 = scmp.eq.s32.totalorder %s75, 0
      %p871 = por %p869, %p870
      %p872 = scmp.ne.s32.totalorder %s864, %s866
      %p873 = scmp.eq.s32.totalorder %s80, 1
      %p874 = por %p872, %p873
      %p875 = scmp.ne.s32.totalorder %s866, %s867
      %p876 = scmp.eq.s32.totalorder %s80, 0
      %p877 = por %p875, %p876
      %p878 = scmp.ne.s32.totalorder %s866, %s867
      %p879 = scmp.eq.s32.totalorder %s81, 1
      %p880 = por %p878, %p879
      %p882 = scmp.ne.s32.totalorder %s867, %s881
      %p883 = scmp.eq.s32.totalorder %s81, 0
      %p884 = por %p882, %p883
      %s886 = sadd.s32 %s885, 1
      %p889 = scmp.eq.s32.totalorder %s75, 1
      %p890 = scmp.ne.s32.totalorder %s885, %s887
      %p891 = scmp.eq.s32.totalorder %s75, 0
      %p892 = por %p890, %p891
      %p893 = scmp.ne.s32.totalorder %s885, %s887
      %p894 = scmp.eq.s32.totalorder %s80, 1
      %p895 = por %p893, %p894
      %p896 = scmp.ne.s32.totalorder %s887, %s888
      %p897 = scmp.eq.s32.totalorder %s80, 0
      %p898 = por %p896, %p897
      %p899 = scmp.ne.s32.totalorder %s887, %s888
      %p900 = scmp.eq.s32.totalorder %s81, 1
      %p901 = por %p899, %p900
      %p903 = scmp.ne.s32.totalorder %s888, %s902
      %p904 = scmp.eq.s32.totalorder %s81, 0
      %p905 = por %p903, %p904
      %p906 = scmp.le.s32.totalorder 1, %s75
      %p907 = scmp.lt.s32.totalorder %s75, 3
      %p908 = pnand %p906, %p907
      %p909 = pneg %p908
      // Predicated region
      $region9: #{tpu_custom_call.1} parent=5 // pred_check
        _
      $region10: #{tpu_custom_call.1} parent=5 // pred_check_branch
        %911 = sbr.rel (%p908) target = $region12
      $region11: #{tpu_custom_call.1} parent=5 // pred_region
        %s912 = ssub.s32 %s75, 1
        // Predicated region
        $region13: #{tpu_custom_call.1} parent=11 // pred_check
          %p913 = pneg %p96
        $region14: #{tpu_custom_call.1} parent=11 // pred_check_branch
          %915 = sbr.rel (%p913) target = $region16
        $region15: #{tpu_custom_call.1} parent=11 // pred_region
          %917 = vsyncadd [#allocation3], 0
          %s918 = sshll.u32 %s1, 4
          %s919 = int_to_ptr.hbm [resolvable:$true] %s918
          %s920 = sshll.u32 [#allocation2], 4
          %s921 = int_to_ptr.vmem [resolvable:$true] %s920
          %926 = dma.hbm_to_vmem [thread:$0]  %s919, 256, %s921, [#allocation3], 128, 128, 8
        $region16: #{tpu_custom_call.1} parent=11 // pred_fallthru
          _
        // Predicated region
        $region17: #{tpu_custom_call.1} parent=11 // pred_check
          %p927 = pneg %p117
        $region18: #{tpu_custom_call.1} parent=11 // pred_check_branch
          %929 = sbr.rel (%p927) target = $region20
        $region19: #{tpu_custom_call.1} parent=11 // pred_region
          %931 = vsyncadd [#allocation6], 0
          %s932 = sshll.u32 %s3, 4
          %s933 = int_to_ptr.hbm [resolvable:$true] %s932
          %s934 = sshll.u32 [#allocation5], 4
          %s935 = int_to_ptr.vmem [resolvable:$true] %s934
          %940 = dma.hbm_to_vmem [thread:$0]  %s933, 256, %s935, [#allocation6], 128, 128, 8
        $region20: #{tpu_custom_call.1} parent=11 // pred_fallthru
          _
        // Predicated region
        $region21: #{tpu_custom_call.1} parent=11 // pred_check
          %p941 = pneg %p138
        $region22: #{tpu_custom_call.1} parent=11 // pred_check_branch
          %943 = sbr.rel (%p941) target = $region24
        $region23: #{tpu_custom_call.1} parent=11 // pred_region
          %945 = vsyncadd [#allocation6], 0
          %s947 = sshll.u32 %s5, 4
          %s948 = int_to_ptr.hbm [resolvable:$true] %s947
          %s949 = sshll.u32 [#allocation7], 4
          %s950 = int_to_ptr.vmem [resolvable:$true] %s949
          %952 = dma.hbm_to_vmem [thread:$0]  %s948, 128, %s950, [#allocation6]
        $region24: #{tpu_custom_call.1} parent=11 // pred_fallthru
          _
        // Predicated region
        $region25: #{tpu_custom_call.1} parent=11 // pred_check
          %p953 = pneg %p159
        $region26: #{tpu_custom_call.1} parent=11 // pred_check_branch
          %955 = sbr.rel (%p953) target = $region28
        $region27: #{tpu_custom_call.1} parent=11 // pred_region
          %957 = vsyncadd [#allocation9], 0
          %s959 = sshll.u32 %s7, 4
          %s960 = int_to_ptr.hbm [resolvable:$true] %s959
          %s961 = sshll.u32 [#allocation8], 4
          %s962 = int_to_ptr.vmem [resolvable:$true] %s961
          %964 = dma.hbm_to_vmem [thread:$0]  %s960, 128, %s962, [#allocation9]
        $region28: #{tpu_custom_call.1} parent=11 // pred_fallthru
          _
        // Predicated region
        $region29: #{tpu_custom_call.1} parent=11 // pred_check
          %p965 = pneg %p856
        $region30: #{tpu_custom_call.1} parent=11 // pred_check_branch
          %967 = sbr.rel (%p965) target = $region32
        $region31: #{tpu_custom_call.1} parent=11 // pred_region
          _
        $region32: #{tpu_custom_call.1} parent=11 // pred_fallthru
          _
        // Predicated region
        $region33: #{tpu_custom_call.1} parent=11 // pred_check
          %p968 = pneg %p877
        $region34: #{tpu_custom_call.1} parent=11 // pred_check_branch
          %970 = sbr.rel (%p968) target = $region36
        $region35: #{tpu_custom_call.1} parent=11 // pred_region
          _
        $region36: #{tpu_custom_call.1} parent=11 // pred_fallthru
          _
      $region12: #{tpu_custom_call.1} parent=5 // pred_fallthru
        _
      %p971 = scmp.lt.s32.totalorder %s75, 2
      // Predicated region
      $region37: #{tpu_custom_call.1} parent=5 // pred_check
        %p972 = pneg %p971
      $region38: #{tpu_custom_call.1} parent=5 // pred_check_branch
        %974 = sbr.rel (%p972) target = $region40
      $region39: #{tpu_custom_call.1} parent=5 // pred_region
        // Predicated region
        $region41: #{tpu_custom_call.1} parent=39 // pred_check
          %p975 = pneg %p179
        $region42: #{tpu_custom_call.1} parent=39 // pred_check_branch
          %977 = sbr.rel (%p975) target = $region44
        $region43: #{tpu_custom_call.1} parent=39 // pred_region
          %p978 = scmp.lt.s32.totalorder %s75, 1
          %s979 = scalar_select %p978, %s75, 1
          %s980 = scalar_lea.vmem %s9, %s979
        $region44: #{tpu_custom_call.1} parent=39 // pred_fallthru
          _
        // Predicated region
        $region45: #{tpu_custom_call.1} parent=39 // pred_check
          %p981 = pneg %p205
        $region46: #{tpu_custom_call.1} parent=39 // pred_check_branch
          %983 = sbr.rel (%p981) target = $region48
        $region47: #{tpu_custom_call.1} parent=39 // pred_region
          %s984 = sand.u32 %s75, 1
          %s985 = scalar_lea.sflag [#allocation3], %s984
          %s986 = sand.u32 %s195, 1
          %s987 = scalar_lea.vmem [#allocation10], %s986
          %989 = vsyncadd %s985, 0
          %s990 = scalar_lea.hbm %s11, %s75
          %s992 = sshll.u32 %s990, 4
          %s993 = int_to_ptr.hbm [resolvable:$true] %s992
          %s994 = sshll.u32 %s987, 4
          %s995 = int_to_ptr.vmem [resolvable:$true] %s994
          %997 = dma.hbm_to_vmem [thread:$0]  %s993, 16, %s995, %s985
        $region48: #{tpu_custom_call.1} parent=39 // pred_fallthru
          _
        // Predicated region
        $region49: #{tpu_custom_call.1} parent=39 // pred_check
          %p998 = pneg %p231
        $region50: #{tpu_custom_call.1} parent=39 // pred_check_branch
          %1000 = sbr.rel (%p998) target = $region52
        $region51: #{tpu_custom_call.1} parent=39 // pred_region
          %s1001 = sand.u32 %s75, 1
          %s1002 = scalar_lea.sflag [#allocation3], %s1001
          %s1003 = sand.u32 %s221, 1
          %s1004 = scalar_lea.vmem [#allocation11], %s1003
          %1006 = vsyncadd %s1002, 0
          %s1007 = scalar_lea.hbm %s13, %s75
          %s1009 = sshll.u32 %s1007, 4
          %s1010 = int_to_ptr.hbm [resolvable:$true] %s1009
          %s1011 = sshll.u32 %s1004, 4
          %s1012 = int_to_ptr.vmem [resolvable:$true] %s1011
          %1014 = dma.hbm_to_vmem [thread:$0]  %s1010, 16, %s1012, %s1002
        $region52: #{tpu_custom_call.1} parent=39 // pred_fallthru
          _
        // Predicated region
        $region53: #{tpu_custom_call.1} parent=39 // pred_check
          %p1015 = pneg %p257
        $region54: #{tpu_custom_call.1} parent=39 // pred_check_branch
          %1017 = sbr.rel (%p1015) target = $region56
        $region55: #{tpu_custom_call.1} parent=39 // pred_region
          %s1018 = sand.u32 %s75, 1
          %s1019 = scalar_lea.sflag [#allocation3], %s1018
          %s1020 = sand.u32 %s247, 1
          %s1021 = scalar_lea.vmem [#allocation12], %s1020
          %1023 = vsyncadd %s1019, 0
          %s1024 = scalar_lea.hbm %s15, %s75
          %s1026 = sshll.u32 %s1024, 4
          %s1027 = int_to_ptr.hbm [resolvable:$true] %s1026
          %s1028 = sshll.u32 %s1021, 4
          %s1029 = int_to_ptr.vmem [resolvable:$true] %s1028
          %1031 = dma.hbm_to_vmem [thread:$0]  %s1027, 16, %s1029, %s1019
        $region56: #{tpu_custom_call.1} parent=39 // pred_fallthru
          _
        // Predicated region
        $region57: #{tpu_custom_call.1} parent=39 // pred_check
          %p1032 = pneg %p283
        $region58: #{tpu_custom_call.1} parent=39 // pred_check_branch
          %1034 = sbr.rel (%p1032) target = $region60
        $region59: #{tpu_custom_call.1} parent=39 // pred_region
          %s1035 = sand.u32 %s75, 1
          %s1036 = scalar_lea.sflag [#allocation3], %s1035
          %s1037 = sand.u32 %s273, 1
          %s1038 = scalar_lea.vmem [#allocation13], %s1037
          %1040 = vsyncadd %s1036, 0
          %s1041 = scalar_lea.hbm %s17, %s75
          %s1043 = sshll.u32 %s1041, 4
          %s1044 = int_to_ptr.hbm [resolvable:$true] %s1043
          %s1045 = sshll.u32 %s1038, 4
          %s1046 = int_to_ptr.vmem [resolvable:$true] %s1045
          %1048 = dma.hbm_to_vmem [thread:$0]  %s1044, 16, %s1046, %s1036
        $region60: #{tpu_custom_call.1} parent=39 // pred_fallthru
          _
        // Predicated region
        $region61: #{tpu_custom_call.1} parent=39 // pred_check
          %p1049 = pneg %p309
        $region62: #{tpu_custom_call.1} parent=39 // pred_check_branch
          %1051 = sbr.rel (%p1049) target = $region64
        $region63: #{tpu_custom_call.1} parent=39 // pred_region
          %p1052 = scmp.lt.s32.totalorder %s75, 1
          %s1053 = scalar_select %p1052, %s75, 1
          %s1054 = scalar_lea.vmem %s19, %s1053
        $region64: #{tpu_custom_call.1} parent=39 // pred_fallthru
          _
        // Predicated region
        $region65: #{tpu_custom_call.1} parent=39 // pred_check
          %p1055 = pneg %p335
        $region66: #{tpu_custom_call.1} parent=39 // pred_check_branch
          %1057 = sbr.rel (%p1055) target = $region68
        $region67: #{tpu_custom_call.1} parent=39 // pred_region
          %s1058 = sand.u32 %s75, 1
          %s1059 = scalar_lea.sflag [#allocation3], %s1058
          %s1060 = sand.u32 %s325, 1
          %s1061 = smul.addr %s1060, 64
          %s1062 = scalar_lea.vmem [#allocation14], %s1061
          %1064 = vsyncadd %s1059, 0
          %s1065 = smul.addr %s75, 16
          %s1066 = smul.addr %s1065, 4
          %s1067 = scalar_lea.hbm %s21, %s1066
          %s1068 = sshll.u32 %s1067, 4
          %s1069 = int_to_ptr.hbm [resolvable:$true] %s1068
          %s1070 = sshll.u32 %s1062, 4
          %s1071 = int_to_ptr.vmem [resolvable:$true] %s1070
          %1076 = dma.hbm_to_vmem [thread:$0]  %s1069, 1024, %s1071, %s1059, 64, 64, 4
        $region68: #{tpu_custom_call.1} parent=39 // pred_fallthru
          _
        // Predicated region
        $region69: #{tpu_custom_call.1} parent=39 // pred_check
          %p1077 = pneg %p361
        $region70: #{tpu_custom_call.1} parent=39 // pred_check_branch
          %1079 = sbr.rel (%p1077) target = $region72
        $region71: #{tpu_custom_call.1} parent=39 // pred_region
          %p1080 = scmp.lt.s32.totalorder %s75, 1
          %s1081 = scalar_select %p1080, %s75, 1
          %s1082 = scalar_lea.vmem %s23, %s1081
        $region72: #{tpu_custom_call.1} parent=39 // pred_fallthru
          _
        // Predicated region
        $region73: #{tpu_custom_call.1} parent=39 // pred_check
          %p1083 = pneg %p387
        $region74: #{tpu_custom_call.1} parent=39 // pred_check_branch
          %1085 = sbr.rel (%p1083) target = $region76
        $region75: #{tpu_custom_call.1} parent=39 // pred_region
          %s1086 = sand.u32 %s75, 1
          %s1087 = scalar_lea.sflag [#allocation3], %s1086
          %s1088 = sand.u32 %s377, 1
          %s1089 = smul.addr %s1088, 64
          %s1090 = scalar_lea.vmem [#allocation15], %s1089
          %1092 = vsyncadd %s1087, 0
          %s1093 = smul.addr %s75, 16
          %s1094 = smul.addr %s1093, 4
          %s1095 = scalar_lea.hbm %s25, %s1094
          %s1096 = sshll.u32 %s1095, 4
          %s1097 = int_to_ptr.hbm [resolvable:$true] %s1096
          %s1098 = sshll.u32 %s1090, 4
          %s1099 = int_to_ptr.vmem [resolvable:$true] %s1098
          %1104 = dma.hbm_to_vmem [thread:$0]  %s1097, 1024, %s1099, %s1087, 64, 64, 4
        $region76: #{tpu_custom_call.1} parent=39 // pred_fallthru
          _
        // Predicated region
        $region77: #{tpu_custom_call.1} parent=39 // pred_check
          %p1105 = pneg %p413
        $region78: #{tpu_custom_call.1} parent=39 // pred_check_branch
          %1107 = sbr.rel (%p1105) target = $region80
        $region79: #{tpu_custom_call.1} parent=39 // pred_region
          %p1108 = scmp.lt.s32.totalorder %s75, 1
          %s1109 = scalar_select %p1108, %s75, 1
          %s1110 = scalar_lea.vmem %s27, %s1109
        $region80: #{tpu_custom_call.1} parent=39 // pred_fallthru
          _
        // Predicated region
        $region81: #{tpu_custom_call.1} parent=39 // pred_check
          %p1111 = pneg %p439
        $region82: #{tpu_custom_call.1} parent=39 // pred_check_branch
          %1113 = sbr.rel (%p1111) target = $region84
        $region83: #{tpu_custom_call.1} parent=39 // pred_region
          %s1114 = sand.u32 %s75, 1
          %s1115 = scalar_lea.sflag [#allocation3], %s1114
          %s1116 = sand.u32 %s429, 1
          %s1117 = smul.addr %s1116, 64
          %s1118 = scalar_lea.vmem [#allocation16], %s1117
          %1120 = vsyncadd %s1115, 0
          %s1121 = smul.addr %s75, 16
          %s1122 = smul.addr %s1121, 4
          %s1123 = scalar_lea.hbm %s29, %s1122
          %s1124 = sshll.u32 %s1123, 4
          %s1125 = int_to_ptr.hbm [resolvable:$true] %s1124
          %s1126 = sshll.u32 %s1118, 4
          %s1127 = int_to_ptr.vmem [resolvable:$true] %s1126
          %1132 = dma.hbm_to_vmem [thread:$0]  %s1125, 1024, %s1127, %s1115, 64, 64, 4
        $region84: #{tpu_custom_call.1} parent=39 // pred_fallthru
          _
        // Predicated region
        $region85: #{tpu_custom_call.1} parent=39 // pred_check
          %p1133 = pneg %p465
        $region86: #{tpu_custom_call.1} parent=39 // pred_check_branch
          %1135 = sbr.rel (%p1133) target = $region88
        $region87: #{tpu_custom_call.1} parent=39 // pred_region
          %p1136 = scmp.lt.s32.totalorder %s75, 1
          %s1137 = scalar_select %p1136, %s75, 1
          %s1138 = scalar_lea.vmem %s31, %s1137
        $region88: #{tpu_custom_call.1} parent=39 // pred_fallthru
          _
        // Predicated region
        $region89: #{tpu_custom_call.1} parent=39 // pred_check
          %p1139 = pneg %p491
        $region90: #{tpu_custom_call.1} parent=39 // pred_check_branch
          %1141 = sbr.rel (%p1139) target = $region92
        $region91: #{tpu_custom_call.1} parent=39 // pred_region
          %s1142 = sand.u32 %s75, 1
          %s1143 = scalar_lea.sflag [#allocation3], %s1142
          %s1144 = sand.u32 %s481, 1
          %s1145 = smul.addr %s1144, 64
          %s1146 = scalar_lea.vmem [#allocation17], %s1145
          %1148 = vsyncadd %s1143, 0
          %s1149 = smul.addr %s75, 16
          %s1150 = smul.addr %s1149, 4
          %s1151 = scalar_lea.hbm %s33, %s1150
          %s1152 = sshll.u32 %s1151, 4
          %s1153 = int_to_ptr.hbm [resolvable:$true] %s1152
          %s1154 = sshll.u32 %s1146, 4
          %s1155 = int_to_ptr.vmem [resolvable:$true] %s1154
          %1160 = dma.hbm_to_vmem [thread:$0]  %s1153, 1024, %s1155, %s1143, 64, 64, 4
        $region92: #{tpu_custom_call.1} parent=39 // pred_fallthru
          _
        // Predicated region
        $region93: #{tpu_custom_call.1} parent=39 // pred_check
          %p1161 = pneg %p517
        $region94: #{tpu_custom_call.1} parent=39 // pred_check_branch
          %1163 = sbr.rel (%p1161) target = $region96
        $region95: #{tpu_custom_call.1} parent=39 // pred_region
          %p1164 = scmp.lt.s32.totalorder %s75, 1
          %s1165 = scalar_select %p1164, %s75, 1
          %s1166 = scalar_lea.vmem %s35, %s1165
        $region96: #{tpu_custom_call.1} parent=39 // pred_fallthru
          _
        // Predicated region
        $region97: #{tpu_custom_call.1} parent=39 // pred_check
          %p1167 = pneg %p543
        $region98: #{tpu_custom_call.1} parent=39 // pred_check_branch
          %1169 = sbr.rel (%p1167) target = $region100
        $region99: #{tpu_custom_call.1} parent=39 // pred_region
          %s1170 = sand.u32 %s75, 1
          %s1171 = scalar_lea.sflag [#allocation3], %s1170
          %s1172 = sand.u32 %s533, 1
          %s1173 = smul.addr %s1172, 64
          %s1174 = scalar_lea.vmem [#allocation18], %s1173
          %1176 = vsyncadd %s1171, 0
          %s1177 = smul.addr %s75, 16
          %s1178 = smul.addr %s1177, 4
          %s1179 = scalar_lea.hbm %s37, %s1178
          %s1180 = sshll.u32 %s1179, 4
          %s1181 = int_to_ptr.hbm [resolvable:$true] %s1180
          %s1182 = sshll.u32 %s1174, 4
          %s1183 = int_to_ptr.vmem [resolvable:$true] %s1182
          %1188 = dma.hbm_to_vmem [thread:$0]  %s1181, 1024, %s1183, %s1171, 64, 64, 4
        $region100: #{tpu_custom_call.1} parent=39 // pred_fallthru
          _
        // Predicated region
        $region101: #{tpu_custom_call.1} parent=39 // pred_check
          %p1189 = pneg %p569
        $region102: #{tpu_custom_call.1} parent=39 // pred_check_branch
          %1191 = sbr.rel (%p1189) target = $region104
        $region103: #{tpu_custom_call.1} parent=39 // pred_region
          %p1192 = scmp.lt.s32.totalorder %s75, 1
          %s1193 = scalar_select %p1192, %s75, 1
          %s1194 = scalar_lea.vmem %s39, %s1193
        $region104: #{tpu_custom_call.1} parent=39 // pred_fallthru
          _
        // Predicated region
        $region105: #{tpu_custom_call.1} parent=39 // pred_check
          %p1195 = pneg %p595
        $region106: #{tpu_custom_call.1} parent=39 // pred_check_branch
          %1197 = sbr.rel (%p1195) target = $region108
        $region107: #{tpu_custom_call.1} parent=39 // pred_region
          %s1198 = sand.u32 %s75, 1
          %s1199 = scalar_lea.sflag [#allocation3], %s1198
          %s1200 = sand.u32 %s585, 1
          %s1201 = smul.addr %s1200, 64
          %s1202 = scalar_lea.vmem [#allocation19], %s1201
          %1204 = vsyncadd %s1199, 0
          %s1205 = smul.addr %s75, 16
          %s1206 = smul.addr %s1205, 4
          %s1207 = scalar_lea.hbm %s41, %s1206
          %s1208 = sshll.u32 %s1207, 4
          %s1209 = int_to_ptr.hbm [resolvable:$true] %s1208
          %s1210 = sshll.u32 %s1202, 4
          %s1211 = int_to_ptr.vmem [resolvable:$true] %s1210
          %1216 = dma.hbm_to_vmem [thread:$0]  %s1209, 1024, %s1211, %s1199, 64, 64, 4
        $region108: #{tpu_custom_call.1} parent=39 // pred_fallthru
          _
        // Predicated region
        $region109: #{tpu_custom_call.1} parent=39 // pred_check
          %p1217 = pneg %p621
        $region110: #{tpu_custom_call.1} parent=39 // pred_check_branch
          %1219 = sbr.rel (%p1217) target = $region112
        $region111: #{tpu_custom_call.1} parent=39 // pred_region
          %p1220 = scmp.lt.s32.totalorder %s75, 1
          %s1221 = scalar_select %p1220, %s75, 1
          %s1222 = scalar_lea.vmem %s43, %s1221
        $region112: #{tpu_custom_call.1} parent=39 // pred_fallthru
          _
        // Predicated region
        $region113: #{tpu_custom_call.1} parent=39 // pred_check
          %p1223 = pneg %p647
        $region114: #{tpu_custom_call.1} parent=39 // pred_check_branch
          %1225 = sbr.rel (%p1223) target = $region116
        $region115: #{tpu_custom_call.1} parent=39 // pred_region
          %s1226 = sand.u32 %s75, 1
          %s1227 = scalar_lea.sflag [#allocation3], %s1226
          %s1228 = sand.u32 %s637, 1
          %s1229 = smul.addr %s1228, 64
          %s1230 = scalar_lea.vmem [#allocation20], %s1229
          %1232 = vsyncadd %s1227, 0
          %s1233 = smul.addr %s75, 16
          %s1234 = smul.addr %s1233, 4
          %s1235 = scalar_lea.hbm %s45, %s1234
          %s1236 = sshll.u32 %s1235, 4
          %s1237 = int_to_ptr.hbm [resolvable:$true] %s1236
          %s1238 = sshll.u32 %s1230, 4
          %s1239 = int_to_ptr.vmem [resolvable:$true] %s1238
          %1244 = dma.hbm_to_vmem [thread:$0]  %s1237, 1024, %s1239, %s1227, 64, 64, 4
        $region116: #{tpu_custom_call.1} parent=39 // pred_fallthru
          _
        // Predicated region
        $region117: #{tpu_custom_call.1} parent=39 // pred_check
          %p1245 = pneg %p673
        $region118: #{tpu_custom_call.1} parent=39 // pred_check_branch
          %1247 = sbr.rel (%p1245) target = $region120
        $region119: #{tpu_custom_call.1} parent=39 // pred_region
          %p1248 = scmp.lt.s32.totalorder %s75, 1
          %s1249 = scalar_select %p1248, %s75, 1
          %s1250 = scalar_lea.vmem %s47, %s1249
        $region120: #{tpu_custom_call.1} parent=39 // pred_fallthru
          _
        // Predicated region
        $region121: #{tpu_custom_call.1} parent=39 // pred_check
          %p1251 = pneg %p699
        $region122: #{tpu_custom_call.1} parent=39 // pred_check_branch
          %1253 = sbr.rel (%p1251) target = $region124
        $region123: #{tpu_custom_call.1} parent=39 // pred_region
          %s1254 = sand.u32 %s75, 1
          %s1255 = scalar_lea.sflag [#allocation3], %s1254
          %s1256 = sand.u32 %s689, 1
          %s1257 = smul.addr %s1256, 64
          %s1258 = scalar_lea.vmem [#allocation21], %s1257
          %1260 = vsyncadd %s1255, 0
          %s1261 = smul.addr %s75, 16
          %s1262 = smul.addr %s1261, 4
          %s1263 = scalar_lea.hbm %s49, %s1262
          %s1264 = sshll.u32 %s1263, 4
          %s1265 = int_to_ptr.hbm [resolvable:$true] %s1264
          %s1266 = sshll.u32 %s1258, 4
          %s1267 = int_to_ptr.vmem [resolvable:$true] %s1266
          %1272 = dma.hbm_to_vmem [thread:$0]  %s1265, 1024, %s1267, %s1255, 64, 64, 4
        $region124: #{tpu_custom_call.1} parent=39 // pred_fallthru
          _
        // Predicated region
        $region125: #{tpu_custom_call.1} parent=39 // pred_check
          %p1273 = pneg %p725
        $region126: #{tpu_custom_call.1} parent=39 // pred_check_branch
          %1275 = sbr.rel (%p1273) target = $region128
        $region127: #{tpu_custom_call.1} parent=39 // pred_region
          %p1276 = scmp.lt.s32.totalorder %s75, 1
          %s1277 = scalar_select %p1276, %s75, 1
          %s1278 = scalar_lea.vmem %s51, %s1277
        $region128: #{tpu_custom_call.1} parent=39 // pred_fallthru
          _
        // Predicated region
        $region129: #{tpu_custom_call.1} parent=39 // pred_check
          %p1279 = pneg %p751
        $region130: #{tpu_custom_call.1} parent=39 // pred_check_branch
          %1281 = sbr.rel (%p1279) target = $region132
        $region131: #{tpu_custom_call.1} parent=39 // pred_region
          %s1282 = sand.u32 %s75, 1
          %s1283 = scalar_lea.sflag [#allocation3], %s1282
          %s1284 = sand.u32 %s741, 1
          %s1285 = smul.addr %s1284, 128
          %s1286 = scalar_lea.vmem [#allocation22], %s1285
          %1288 = vsyncadd %s1283, 0
          %s1289 = smul.addr %s75, 32
          %s1290 = smul.addr %s1289, 4
          %s1291 = scalar_lea.hbm %s53, %s1290
          %s1292 = sshll.u32 %s1291, 4
          %s1293 = int_to_ptr.hbm [resolvable:$true] %s1292
          %s1294 = sshll.u32 %s1286, 4
          %s1295 = int_to_ptr.vmem [resolvable:$true] %s1294
          %1300 = dma.hbm_to_vmem [thread:$0]  %s1293, 2048, %s1295, %s1283, 128, 128, 8
        $region132: #{tpu_custom_call.1} parent=39 // pred_fallthru
          _
        // Predicated region
        $region133: #{tpu_custom_call.1} parent=39 // pred_check
          %p1301 = pneg %p777
        $region134: #{tpu_custom_call.1} parent=39 // pred_check_branch
          %1303 = sbr.rel (%p1301) target = $region136
        $region135: #{tpu_custom_call.1} parent=39 // pred_region
          %p1304 = scmp.lt.s32.totalorder %s75, 1
          %s1305 = scalar_select %p1304, %s75, 1
          %s1306 = smul.addr %s1305, 2
          %s1307 = scalar_lea.vmem %s55, %s1306
        $region136: #{tpu_custom_call.1} parent=39 // pred_fallthru
          _
        // Predicated region
        $region137: #{tpu_custom_call.1} parent=39 // pred_check
          %p1308 = pneg %p803
        $region138: #{tpu_custom_call.1} parent=39 // pred_check_branch
          %1310 = sbr.rel (%p1308) target = $region140
        $region139: #{tpu_custom_call.1} parent=39 // pred_region
          %s1311 = sand.u32 %s75, 1
          %s1312 = scalar_lea.sflag [#allocation3], %s1311
          %s1313 = sand.u32 %s793, 1
          %s1314 = smul.addr %s1313, 128
          %s1315 = scalar_lea.vmem [#allocation23], %s1314
          %1317 = vsyncadd %s1312, 0
          %s1318 = smul.addr %s75, 32
          %s1319 = smul.addr %s1318, 4
          %s1320 = scalar_lea.hbm %s57, %s1319
          %s1321 = sshll.u32 %s1320, 4
          %s1322 = int_to_ptr.hbm [resolvable:$true] %s1321
          %s1323 = sshll.u32 %s1315, 4
          %s1324 = int_to_ptr.vmem [resolvable:$true] %s1323
          %1329 = dma.hbm_to_vmem [thread:$0]  %s1322, 2048, %s1324, %s1312, 64, 64, 4
        $region140: #{tpu_custom_call.1} parent=39 // pred_fallthru
          _
        // Predicated region
        $region141: #{tpu_custom_call.1} parent=39 // pred_check
          %p1330 = pneg %p829
        $region142: #{tpu_custom_call.1} parent=39 // pred_check_branch
          %1332 = sbr.rel (%p1330) target = $region144
        $region143: #{tpu_custom_call.1} parent=39 // pred_region
          %p1333 = scmp.lt.s32.totalorder %s75, 1
          %s1334 = scalar_select %p1333, %s75, 1
          %s1335 = scalar_lea.vmem %s59, %s1334
        $region144: #{tpu_custom_call.1} parent=39 // pred_fallthru
          _
      $region40: #{tpu_custom_call.1} parent=5 // pred_fallthru
        _
      %p1336 = scmp.le.s32.totalorder 1, %s75
      %p1337 = scmp.lt.s32.totalorder %s75, 3
      %p1338 = pnand %p1336, %p1337
      %p1339 = pneg %p1338
      // Predicated region
      $region145: #{tpu_custom_call.1} parent=5 // pred_check
        _
      $region146: #{tpu_custom_call.1} parent=5 // pred_check_branch
        %1341 = sbr.rel (%p1338) target = $region148
      $region147: #{tpu_custom_call.1} parent=5 // pred_region
        %s1342 = ssub.s32 %s75, 1
        // Predicated region
        $region149: #{tpu_custom_call.1} parent=147 // pred_check
          %p1343 = pneg %p96
        $region150: #{tpu_custom_call.1} parent=147 // pred_check_branch
          %1345 = sbr.rel (%p1343) target = $region152
        $region151: #{tpu_custom_call.1} parent=147 // pred_region
          %1347 = dma.done [#allocation3], 256
        $region152: #{tpu_custom_call.1} parent=147 // pred_fallthru
          _
        // Predicated region
        $region153: #{tpu_custom_call.1} parent=147 // pred_check
          %p1348 = pneg %p117
        $region154: #{tpu_custom_call.1} parent=147 // pred_check_branch
          %1350 = sbr.rel (%p1348) target = $region156
        $region155: #{tpu_custom_call.1} parent=147 // pred_region
          %1352 = dma.done [#allocation6], 256
        $region156: #{tpu_custom_call.1} parent=147 // pred_fallthru
          _
        // Predicated region
        $region157: #{tpu_custom_call.1} parent=147 // pred_check
          %p1353 = pneg %p138
        $region158: #{tpu_custom_call.1} parent=147 // pred_check_branch
          %1355 = sbr.rel (%p1353) target = $region160
        $region159: #{tpu_custom_call.1} parent=147 // pred_region
          %1357 = dma.done [#allocation6], 128
        $region160: #{tpu_custom_call.1} parent=147 // pred_fallthru
          _
        // Predicated region
        $region161: #{tpu_custom_call.1} parent=147 // pred_check
          %p1358 = pneg %p159
        $region162: #{tpu_custom_call.1} parent=147 // pred_check_branch
          %1360 = sbr.rel (%p1358) target = $region164
        $region163: #{tpu_custom_call.1} parent=147 // pred_region
          %1362 = dma.done [#allocation9], 128
        $region164: #{tpu_custom_call.1} parent=147 // pred_fallthru
          _
        %s1363 = sand.u32 %s80, 1
        %s1364 = scalar_lea.sflag [#allocation3], %s1363
        %s1365 = sand.u32 %s198, 1
        %s1366 = scalar_lea.vmem [#allocation10], %s1365
        // Predicated region
        $region165: #{tpu_custom_call.1} parent=147 // pred_check
          %p1367 = pneg %p211
        $region166: #{tpu_custom_call.1} parent=147 // pred_check_branch
          %1369 = sbr.rel (%p1367) target = $region168
        $region167: #{tpu_custom_call.1} parent=147 // pred_region
          %1371 = dma.done %s1364, 16
        $region168: #{tpu_custom_call.1} parent=147 // pred_fallthru
          _
        %s1372 = sand.u32 %s80, 1
        %s1373 = scalar_lea.sflag [#allocation3], %s1372
        %s1374 = sand.u32 %s224, 1
        %s1375 = scalar_lea.vmem [#allocation11], %s1374
        // Predicated region
        $region169: #{tpu_custom_call.1} parent=147 // pred_check
          %p1376 = pneg %p237
        $region170: #{tpu_custom_call.1} parent=147 // pred_check_branch
          %1378 = sbr.rel (%p1376) target = $region172
        $region171: #{tpu_custom_call.1} parent=147 // pred_region
          %1380 = dma.done %s1373, 16
        $region172: #{tpu_custom_call.1} parent=147 // pred_fallthru
          _
        %s1381 = sand.u32 %s80, 1
        %s1382 = scalar_lea.sflag [#allocation3], %s1381
        %s1383 = sand.u32 %s250, 1
        %s1384 = scalar_lea.vmem [#allocation12], %s1383
        // Predicated region
        $region173: #{tpu_custom_call.1} parent=147 // pred_check
          %p1385 = pneg %p263
        $region174: #{tpu_custom_call.1} parent=147 // pred_check_branch
          %1387 = sbr.rel (%p1385) target = $region176
        $region175: #{tpu_custom_call.1} parent=147 // pred_region
          %1389 = dma.done %s1382, 16
        $region176: #{tpu_custom_call.1} parent=147 // pred_fallthru
          _
        %s1390 = sand.u32 %s80, 1
        %s1391 = scalar_lea.sflag [#allocation3], %s1390
        %s1392 = sand.u32 %s276, 1
        %s1393 = scalar_lea.vmem [#allocation13], %s1392
        // Predicated region
        $region177: #{tpu_custom_call.1} parent=147 // pred_check
          %p1394 = pneg %p289
        $region178: #{tpu_custom_call.1} parent=147 // pred_check_branch
          %1396 = sbr.rel (%p1394) target = $region180
        $region179: #{tpu_custom_call.1} parent=147 // pred_region
          %1398 = dma.done %s1391, 16
        $region180: #{tpu_custom_call.1} parent=147 // pred_fallthru
          _
        %s1399 = sand.u32 %s80, 1
        %s1400 = scalar_lea.sflag [#allocation3], %s1399
        %s1401 = sand.u32 %s328, 1
        %s1402 = smul.addr %s1401, 64
        %s1403 = scalar_lea.vmem [#allocation14], %s1402
        // Predicated region
        $region181: #{tpu_custom_call.1} parent=147 // pred_check
          %p1404 = pneg %p341
        $region182: #{tpu_custom_call.1} parent=147 // pred_check_branch
          %1406 = sbr.rel (%p1404) target = $region184
        $region183: #{tpu_custom_call.1} parent=147 // pred_region
          %1408 = dma.done %s1400, 1024
        $region184: #{tpu_custom_call.1} parent=147 // pred_fallthru
          _
        %s1409 = sand.u32 %s80, 1
        %s1410 = scalar_lea.sflag [#allocation3], %s1409
        %s1411 = sand.u32 %s380, 1
        %s1412 = smul.addr %s1411, 64
        %s1413 = scalar_lea.vmem [#allocation15], %s1412
        // Predicated region
        $region185: #{tpu_custom_call.1} parent=147 // pred_check
          %p1414 = pneg %p393
        $region186: #{tpu_custom_call.1} parent=147 // pred_check_branch
          %1416 = sbr.rel (%p1414) target = $region188
        $region187: #{tpu_custom_call.1} parent=147 // pred_region
          %1418 = dma.done %s1410, 1024
        $region188: #{tpu_custom_call.1} parent=147 // pred_fallthru
          _
        %s1419 = sand.u32 %s80, 1
        %s1420 = scalar_lea.sflag [#allocation3], %s1419
        %s1421 = sand.u32 %s432, 1
        %s1422 = smul.addr %s1421, 64
        %s1423 = scalar_lea.vmem [#allocation16], %s1422
        // Predicated region
        $region189: #{tpu_custom_call.1} parent=147 // pred_check
          %p1424 = pneg %p445
        $region190: #{tpu_custom_call.1} parent=147 // pred_check_branch
          %1426 = sbr.rel (%p1424) target = $region192
        $region191: #{tpu_custom_call.1} parent=147 // pred_region
          %1428 = dma.done %s1420, 1024
        $region192: #{tpu_custom_call.1} parent=147 // pred_fallthru
          _
        %s1429 = sand.u32 %s80, 1
        %s1430 = scalar_lea.sflag [#allocation3], %s1429
        %s1431 = sand.u32 %s484, 1
        %s1432 = smul.addr %s1431, 64
        %s1433 = scalar_lea.vmem [#allocation17], %s1432
        // Predicated region
        $region193: #{tpu_custom_call.1} parent=147 // pred_check
          %p1434 = pneg %p497
        $region194: #{tpu_custom_call.1} parent=147 // pred_check_branch
          %1436 = sbr.rel (%p1434) target = $region196
        $region195: #{tpu_custom_call.1} parent=147 // pred_region
          %1438 = dma.done %s1430, 1024
        $region196: #{tpu_custom_call.1} parent=147 // pred_fallthru
          _
        %s1439 = sand.u32 %s80, 1
        %s1440 = scalar_lea.sflag [#allocation3], %s1439
        %s1441 = sand.u32 %s536, 1
        %s1442 = smul.addr %s1441, 64
        %s1443 = scalar_lea.vmem [#allocation18], %s1442
        // Predicated region
        $region197: #{tpu_custom_call.1} parent=147 // pred_check
          %p1444 = pneg %p549
        $region198: #{tpu_custom_call.1} parent=147 // pred_check_branch
          %1446 = sbr.rel (%p1444) target = $region200
        $region199: #{tpu_custom_call.1} parent=147 // pred_region
          %1448 = dma.done %s1440, 1024
        $region200: #{tpu_custom_call.1} parent=147 // pred_fallthru
          _
        %s1449 = sand.u32 %s80, 1
        %s1450 = scalar_lea.sflag [#allocation3], %s1449
        %s1451 = sand.u32 %s588, 1
        %s1452 = smul.addr %s1451, 64
        %s1453 = scalar_lea.vmem [#allocation19], %s1452
        // Predicated region
        $region201: #{tpu_custom_call.1} parent=147 // pred_check
          %p1454 = pneg %p601
        $region202: #{tpu_custom_call.1} parent=147 // pred_check_branch
          %1456 = sbr.rel (%p1454) target = $region204
        $region203: #{tpu_custom_call.1} parent=147 // pred_region
          %1458 = dma.done %s1450, 1024
        $region204: #{tpu_custom_call.1} parent=147 // pred_fallthru
          _
        %s1459 = sand.u32 %s80, 1
        %s1460 = scalar_lea.sflag [#allocation3], %s1459
        %s1461 = sand.u32 %s640, 1
        %s1462 = smul.addr %s1461, 64
        %s1463 = scalar_lea.vmem [#allocation20], %s1462
        // Predicated region
        $region205: #{tpu_custom_call.1} parent=147 // pred_check
          %p1464 = pneg %p653
        $region206: #{tpu_custom_call.1} parent=147 // pred_check_branch
          %1466 = sbr.rel (%p1464) target = $region208
        $region207: #{tpu_custom_call.1} parent=147 // pred_region
          %1468 = dma.done %s1460, 1024
        $region208: #{tpu_custom_call.1} parent=147 // pred_fallthru
          _
        %s1469 = sand.u32 %s80, 1
        %s1470 = scalar_lea.sflag [#allocation3], %s1469
        %s1471 = sand.u32 %s692, 1
        %s1472 = smul.addr %s1471, 64
        %s1473 = scalar_lea.vmem [#allocation21], %s1472
        // Predicated region
        $region209: #{tpu_custom_call.1} parent=147 // pred_check
          %p1474 = pneg %p705
        $region210: #{tpu_custom_call.1} parent=147 // pred_check_branch
          %1476 = sbr.rel (%p1474) target = $region212
        $region211: #{tpu_custom_call.1} parent=147 // pred_region
          %1478 = dma.done %s1470, 1024
        $region212: #{tpu_custom_call.1} parent=147 // pred_fallthru
          _
        %s1479 = sand.u32 %s80, 1
        %s1480 = scalar_lea.sflag [#allocation3], %s1479
        %s1481 = sand.u32 %s744, 1
        %s1482 = smul.addr %s1481, 128
        %s1483 = scalar_lea.vmem [#allocation22], %s1482
        // Predicated region
        $region213: #{tpu_custom_call.1} parent=147 // pred_check
          %p1484 = pneg %p757
        $region214: #{tpu_custom_call.1} parent=147 // pred_check_branch
          %1486 = sbr.rel (%p1484) target = $region216
        $region215: #{tpu_custom_call.1} parent=147 // pred_region
          %1488 = dma.done %s1480, 2048
        $region216: #{tpu_custom_call.1} parent=147 // pred_fallthru
          _
        %s1489 = sand.u32 %s80, 1
        %s1490 = scalar_lea.sflag [#allocation3], %s1489
        %s1491 = sand.u32 %s796, 1
        %s1492 = smul.addr %s1491, 128
        %s1493 = scalar_lea.vmem [#allocation23], %s1492
        // Predicated region
        $region217: #{tpu_custom_call.1} parent=147 // pred_check
          %p1494 = pneg %p809
        $region218: #{tpu_custom_call.1} parent=147 // pred_check_branch
          %1496 = sbr.rel (%p1494) target = $region220
        $region219: #{tpu_custom_call.1} parent=147 // pred_region
          %1498 = dma.done %s1490, 2048
        $region220: #{tpu_custom_call.1} parent=147 // pred_fallthru
          _
        %p1499 = pneg %p96
        %p1500 = pneg %p93
        %p1501 = pneg %p117
        %p1502 = pneg %p114
        %p1503 = pneg %p138
        %p1504 = pneg %p135
        %p1505 = pneg %p159
        %p1506 = pneg %p156
        %p1507 = scmp.lt.s32.totalorder %s80, 1
        %s1508 = scalar_select %p1507, %s80, 1
        %s1509 = scalar_lea.vmem %s9, %s1508
        %p1510 = pneg %p185
        %p1511 = pneg %p182
        %s1512 = sand.u32 %s80, 1
        %s1513 = scalar_lea.sflag [#allocation3], %s1512
        %s1514 = sand.u32 %s198, 1
        %s1515 = scalar_lea.vmem [#allocation10], %s1514
        %p1516 = pneg %p211
        %p1517 = pneg %p208
        %s1518 = sand.u32 %s80, 1
        %s1519 = scalar_lea.sflag [#allocation3], %s1518
        %s1520 = sand.u32 %s224, 1
        %s1521 = scalar_lea.vmem [#allocation11], %s1520
        %p1522 = pneg %p237
        %p1523 = pneg %p234
        %s1524 = sand.u32 %s80, 1
        %s1525 = scalar_lea.sflag [#allocation3], %s1524
        %s1526 = sand.u32 %s250, 1
        %s1527 = scalar_lea.vmem [#allocation12], %s1526
        %p1528 = pneg %p263
        %p1529 = pneg %p260
        %s1530 = sand.u32 %s80, 1
        %s1531 = scalar_lea.sflag [#allocation3], %s1530
        %s1532 = sand.u32 %s276, 1
        %s1533 = scalar_lea.vmem [#allocation13], %s1532
        %p1534 = pneg %p289
        %p1535 = pneg %p286
        %p1536 = scmp.lt.s32.totalorder %s80, 1
        %s1537 = scalar_select %p1536, %s80, 1
        %s1538 = scalar_lea.vmem %s19, %s1537
        %p1539 = pneg %p315
        %p1540 = pneg %p312
        %s1541 = sand.u32 %s80, 1
        %s1542 = scalar_lea.sflag [#allocation3], %s1541
        %s1543 = sand.u32 %s328, 1
        %s1544 = smul.addr %s1543, 64
        %s1545 = scalar_lea.vmem [#allocation14], %s1544
        %p1546 = pneg %p341
        %p1547 = pneg %p338
        %p1548 = scmp.lt.s32.totalorder %s80, 1
        %s1549 = scalar_select %p1548, %s80, 1
        %s1550 = scalar_lea.vmem %s23, %s1549
        %p1551 = pneg %p367
        %p1552 = pneg %p364
        %s1553 = sand.u32 %s80, 1
        %s1554 = scalar_lea.sflag [#allocation3], %s1553
        %s1555 = sand.u32 %s380, 1
        %s1556 = smul.addr %s1555, 64
        %s1557 = scalar_lea.vmem [#allocation15], %s1556
        %p1558 = pneg %p393
        %p1559 = pneg %p390
        %p1560 = scmp.lt.s32.totalorder %s80, 1
        %s1561 = scalar_select %p1560, %s80, 1
        %s1562 = scalar_lea.vmem %s27, %s1561
        %p1563 = pneg %p419
        %p1564 = pneg %p416
        %s1565 = sand.u32 %s80, 1
        %s1566 = scalar_lea.sflag [#allocation3], %s1565
        %s1567 = sand.u32 %s432, 1
        %s1568 = smul.addr %s1567, 64
        %s1569 = scalar_lea.vmem [#allocation16], %s1568
        %p1570 = pneg %p445
        %p1571 = pneg %p442
        %p1572 = scmp.lt.s32.totalorder %s80, 1
        %s1573 = scalar_select %p1572, %s80, 1
        %s1574 = scalar_lea.vmem %s31, %s1573
        %p1575 = pneg %p471
        %p1576 = pneg %p468
        %s1577 = sand.u32 %s80, 1
        %s1578 = scalar_lea.sflag [#allocation3], %s1577
        %s1579 = sand.u32 %s484, 1
        %s1580 = smul.addr %s1579, 64
        %s1581 = scalar_lea.vmem [#allocation17], %s1580
        %p1582 = pneg %p497
        %p1583 = pneg %p494
        %p1584 = scmp.lt.s32.totalorder %s80, 1
        %s1585 = scalar_select %p1584, %s80, 1
        %s1586 = scalar_lea.vmem %s35, %s1585
        %p1587 = pneg %p523
        %p1588 = pneg %p520
        %s1589 = sand.u32 %s80, 1
        %s1590 = scalar_lea.sflag [#allocation3], %s1589
        %s1591 = sand.u32 %s536, 1
        %s1592 = smul.addr %s1591, 64
        %s1593 = scalar_lea.vmem [#allocation18], %s1592
        %p1594 = pneg %p549
        %p1595 = pneg %p546
        %p1596 = scmp.lt.s32.totalorder %s80, 1
        %s1597 = scalar_select %p1596, %s80, 1
        %s1598 = scalar_lea.vmem %s39, %s1597
        %p1599 = pneg %p575
        %p1600 = pneg %p572
        %s1601 = sand.u32 %s80, 1
        %s1602 = scalar_lea.sflag [#allocation3], %s1601
        %s1603 = sand.u32 %s588, 1
        %s1604 = smul.addr %s1603, 64
        %s1605 = scalar_lea.vmem [#allocation19], %s1604
        %p1606 = pneg %p601
        %p1607 = pneg %p598
        %p1608 = scmp.lt.s32.totalorder %s80, 1
        %s1609 = scalar_select %p1608, %s80, 1
        %s1610 = scalar_lea.vmem %s43, %s1609
        %p1611 = pneg %p627
        %p1612 = pneg %p624
        %s1613 = sand.u32 %s80, 1
        %s1614 = scalar_lea.sflag [#allocation3], %s1613
        %s1615 = sand.u32 %s640, 1
        %s1616 = smul.addr %s1615, 64
        %s1617 = scalar_lea.vmem [#allocation20], %s1616
        %p1618 = pneg %p653
        %p1619 = pneg %p650
        %p1620 = scmp.lt.s32.totalorder %s80, 1
        %s1621 = scalar_select %p1620, %s80, 1
        %s1622 = scalar_lea.vmem %s47, %s1621
        %p1623 = pneg %p679
        %p1624 = pneg %p676
        %s1625 = sand.u32 %s80, 1
        %s1626 = scalar_lea.sflag [#allocation3], %s1625
        %s1627 = sand.u32 %s692, 1
        %s1628 = smul.addr %s1627, 64
        %s1629 = scalar_lea.vmem [#allocation21], %s1628
        %p1630 = pneg %p705
        %p1631 = pneg %p702
        %p1632 = scmp.lt.s32.totalorder %s80, 1
        %s1633 = scalar_select %p1632, %s80, 1
        %s1634 = scalar_lea.vmem %s51, %s1633
        %p1635 = pneg %p731
        %p1636 = pneg %p728
        %s1637 = sand.u32 %s80, 1
        %s1638 = scalar_lea.sflag [#allocation3], %s1637
        %s1639 = sand.u32 %s744, 1
        %s1640 = smul.addr %s1639, 128
        %s1641 = scalar_lea.vmem [#allocation22], %s1640
        %p1642 = pneg %p757
        %p1643 = pneg %p754
        %p1644 = scmp.lt.s32.totalorder %s80, 1
        %s1645 = scalar_select %p1644, %s80, 1
        %s1646 = smul.addr %s1645, 2
        %s1647 = scalar_lea.vmem %s55, %s1646
        %p1648 = pneg %p783
        %p1649 = pneg %p780
        %s1650 = sand.u32 %s80, 1
        %s1651 = scalar_lea.sflag [#allocation3], %s1650
        %s1652 = sand.u32 %s796, 1
        %s1653 = smul.addr %s1652, 128
        %s1654 = scalar_lea.vmem [#allocation23], %s1653
        %p1655 = pneg %p809
        %p1656 = pneg %p806
        %p1657 = scmp.lt.s32.totalorder %s80, 1
        %s1658 = scalar_select %p1657, %s80, 1
        %s1659 = scalar_lea.vmem %s59, %s1658
        %p1660 = pneg %p835
        %p1661 = pneg %p832
        %p1662 = pneg %p856
        %p1663 = pneg %p853
        %p1664 = pneg %p877
        %p1665 = pneg %p874
        %p1666 = pneg %p898
        %p1667 = pneg %p895
        %p1668 = scmp.lt.s32.totalorder %s80, 1
        %s1669 = scalar_select %p1668, %s80, 1
        %s1670 = scalar_lea.vmem %s9, %s1669
        %p1671 = scmp.lt.s32.totalorder %s80, 1
        %s1672 = scalar_select %p1671, %s80, 1
        %s1673 = scalar_lea.vmem %s19, %s1672
        %p1674 = scmp.lt.s32.totalorder %s80, 1
        %s1675 = scalar_select %p1674, %s80, 1
        %s1676 = scalar_lea.vmem %s23, %s1675
        %p1677 = scmp.lt.s32.totalorder %s80, 1
        %s1678 = scalar_select %p1677, %s80, 1
        %s1679 = scalar_lea.vmem %s27, %s1678
        %p1680 = scmp.lt.s32.totalorder %s80, 1
        %s1681 = scalar_select %p1680, %s80, 1
        %s1682 = scalar_lea.vmem %s31, %s1681
        %p1683 = scmp.lt.s32.totalorder %s80, 1
        %s1684 = scalar_select %p1683, %s80, 1
        %s1685 = scalar_lea.vmem %s35, %s1684
        %p1686 = scmp.lt.s32.totalorder %s80, 1
        %s1687 = scalar_select %p1686, %s80, 1
        %s1688 = scalar_lea.vmem %s39, %s1687
        %p1689 = scmp.lt.s32.totalorder %s80, 1
        %s1690 = scalar_select %p1689, %s80, 1
        %s1691 = scalar_lea.vmem %s43, %s1690
        %p1692 = scmp.lt.s32.totalorder %s80, 1
        %s1693 = scalar_select %p1692, %s80, 1
        %s1694 = scalar_lea.vmem %s47, %s1693
        %p1695 = scmp.lt.s32.totalorder %s80, 1
        %s1696 = scalar_select %p1695, %s80, 1
        %s1697 = scalar_lea.vmem %s51, %s1696
        %p1698 = scmp.lt.s32.totalorder %s80, 1
        %s1699 = scalar_select %p1698, %s80, 1
        %s1700 = smul.addr %s1699, 2
        %s1701 = scalar_lea.vmem %s55, %s1700
        %p1702 = scmp.lt.s32.totalorder %s80, 1
        %s1703 = scalar_select %p1702, %s80, 1
        %s1704 = scalar_lea.vmem %s59, %s1703
        %p1706 = scmp.eq.s32.totalorder %s80, 0
        // Predicated region
        $region221: #{tpu_custom_call.1} parent=147 // pred_check
          %p1707 = pneg %p1706
        $region222: #{tpu_custom_call.1} parent=147 // pred_check_branch
          %1709 = sbr.rel (%p1707) target = $region224
        $region223: #{tpu_custom_call.1} parent=147 // pred_region
          %v1710 = vld [vmem:[#allocation2] sm:$0xff]
          %v1711 = vld [vmem:[#allocation2 + $0x8] sm:$0xff]
          %1712 = vst [vmem:[#allocation24] sm:$0xff] %v1710
          %1713 = vst [vmem:[#allocation24 + $0x8] sm:$0xff] %v1711
        $region224: #{tpu_custom_call.1} parent=147 // pred_fallthru
          _
        %v1714 = vld [vmem:[#allocation24] sm:$0xff]
        %v1715 = vld [vmem:[#allocation24 + $0x8] sm:$0xff]
        %v1716 = vld [vmem:[#allocation5] sm:$0xff]
        %v1717 = vld [vmem:[#allocation5 + $0x8] sm:$0xff]
        %v1718 = vld [vmem:[#allocation7] sm:$0xff]
        %v1719 = vld [vmem:[#allocation8] sm:$0xff]
        %v1720 = vld [vmem:[%s1670] sm:$0x1]
        %v1721 = vld [vmem:[%s1366] sm:$0x1]
        %1722 = vadd.xlane.f32.xlu0 %v1714
        %v1723 = vpop.xlane.xlu0 %1722
        %1724 = vadd.xlane.f32.xlu0 %v1715
        %v1725 = vpop.xlane.xlu0 %1724
        %v1726 = vrcp.pop 128.0
        %v1727 = vmul.f32 128.0, %v1726
        %v1728 = vsub.f32 1.0, %v1727
        %v1729 = vmul.f32 %v1726, %v1728
        %v1730 = vadd.f32 %v1726, %v1729
        %vm1731 = vweird.f32 %v1726
        %v1732 = vsel %vm1731, %v1726, %v1730
        %v1733 = vmul.f32 %v1723, %v1732
        %v1734 = vmul.f32 %v1725, %v1732
        %v1735 = vsub.f32 %v1714, %v1733
        %v1736 = vsub.f32 %v1715, %v1734
        %v1737 = vmul.f32 %v1735, %v1735
        %v1738 = vmul.f32 %v1736, %v1736
        %1739 = vadd.xlane.f32.xlu0 %v1737
        %v1740 = vpop.xlane.xlu0 %1739
        %1741 = vadd.xlane.f32.xlu0 %v1738
        %v1742 = vpop.xlane.xlu0 %1741
        %v1743 = vmul.f32 %v1740, %v1732
        %v1744 = vmul.f32 %v1742, %v1732
        %v1745 = vadd.f32 %v1743, 1e-05
        %v1746 = vadd.f32 %v1744, 1e-05
        %v1747 = vrsqrt.pop %v1745
        %v1748 = vmul.f32 %v1747, %v1745
        %v1749 = vmul.f32 %v1748, %v1747
        %v1750 = vmul.f32 0.5, %v1749
        %v1751 = vsub.f32 1.5, %v1750
        %v1752 = vmul.f32 %v1747, %v1751
        %vm1753 = vweird.f32 %v1745
        %vm1754 = vweird.f32 %v1747
        %vm1755 = vmor %vm1753, %vm1754
        %v1756 = vsel %vm1755, %v1747, %v1752
        %v1757 = vrsqrt.pop %v1746
        %v1758 = vmul.f32 %v1757, %v1746
        %v1759 = vmul.f32 %v1758, %v1757
        %v1760 = vmul.f32 0.5, %v1759
        %v1761 = vsub.f32 1.5, %v1760
        %v1762 = vmul.f32 %v1757, %v1761
        %vm1763 = vweird.f32 %v1746
        %vm1764 = vweird.f32 %v1757
        %vm1765 = vmor %vm1763, %vm1764
        %v1766 = vsel %vm1765, %v1757, %v1762
        %v1767 = vmul.f32 %v1735, %v1756
        %v1768 = vmul.f32 %v1736, %v1766
        %v1770 = vperm.slane %v1720, 0
        %v1772 = vmul.f32 %v1767, %v1770
        %v1773 = vmul.f32 %v1768, %v1770
        %v1775 = vperm.slane %v1721, 0
        %v1777 = vadd.f32 %v1772, %v1775
        %v1778 = vadd.f32 %v1773, %v1775
        %v1779 = vld [vmem:[%s1403] sm:$0xf]
        %v1780 = vld [vmem:[%s1403 + $0x4] sm:$0xf]
        %v1781 = vld [vmem:[%s1403 + $0x8] sm:$0xf]
        %v1782 = vld [vmem:[%s1403 + $0xc] sm:$0xf]
        %v1783 = vld [vmem:[%s1403 + $0x10] sm:$0xf]
        %v1784 = vld [vmem:[%s1403 + $0x14] sm:$0xf]
        %v1785 = vld [vmem:[%s1403 + $0x18] sm:$0xf]
        %v1786 = vld [vmem:[%s1403 + $0x1c] sm:$0xf]
        %v1787 = vld [vmem:[%s1403 + $0x20] sm:$0xf]
        %v1788 = vld [vmem:[%s1403 + $0x24] sm:$0xf]
        %v1789 = vld [vmem:[%s1403 + $0x28] sm:$0xf]
        %v1790 = vld [vmem:[%s1403 + $0x2c] sm:$0xf]
        %v1791 = vld [vmem:[%s1403 + $0x30] sm:$0xf]
        %v1792 = vld [vmem:[%s1403 + $0x34] sm:$0xf]
        %v1793 = vld [vmem:[%s1403 + $0x38] sm:$0xf]
        %v1794 = vld [vmem:[%s1403 + $0x3c] sm:$0xf]
        %v1795 = vld [vmem:[%s1676] sm:$0x1]
        %v1796 = vld [vmem:[%s1413] sm:$0xf]
        %v1797 = vld [vmem:[%s1413 + $0x4] sm:$0xf]
        %v1798 = vld [vmem:[%s1413 + $0x8] sm:$0xf]
        %v1799 = vld [vmem:[%s1413 + $0xc] sm:$0xf]
        %v1800 = vld [vmem:[%s1413 + $0x10] sm:$0xf]
        %v1801 = vld [vmem:[%s1413 + $0x14] sm:$0xf]
        %v1802 = vld [vmem:[%s1413 + $0x18] sm:$0xf]
        %v1803 = vld [vmem:[%s1413 + $0x1c] sm:$0xf]
        %v1804 = vld [vmem:[%s1413 + $0x20] sm:$0xf]
        %v1805 = vld [vmem:[%s1413 + $0x24] sm:$0xf]
        %v1806 = vld [vmem:[%s1413 + $0x28] sm:$0xf]
        %v1807 = vld [vmem:[%s1413 + $0x2c] sm:$0xf]
        %v1808 = vld [vmem:[%s1413 + $0x30] sm:$0xf]
        %v1809 = vld [vmem:[%s1413 + $0x34] sm:$0xf]
        %v1810 = vld [vmem:[%s1413 + $0x38] sm:$0xf]
        %v1811 = vld [vmem:[%s1413 + $0x3c] sm:$0xf]
        %v1812 = vld [vmem:[%s1679] sm:$0x1]
        %v1813 = vld [vmem:[%s1423] sm:$0xf]
        %v1814 = vld [vmem:[%s1423 + $0x4] sm:$0xf]
        %v1815 = vld [vmem:[%s1423 + $0x8] sm:$0xf]
        %v1816 = vld [vmem:[%s1423 + $0xc] sm:$0xf]
        %v1817 = vld [vmem:[%s1423 + $0x10] sm:$0xf]
        %v1818 = vld [vmem:[%s1423 + $0x14] sm:$0xf]
        %v1819 = vld [vmem:[%s1423 + $0x18] sm:$0xf]
        %v1820 = vld [vmem:[%s1423 + $0x1c] sm:$0xf]
        %v1821 = vld [vmem:[%s1423 + $0x20] sm:$0xf]
        %v1822 = vld [vmem:[%s1423 + $0x24] sm:$0xf]
        %v1823 = vld [vmem:[%s1423 + $0x28] sm:$0xf]
        %v1824 = vld [vmem:[%s1423 + $0x2c] sm:$0xf]
        %v1825 = vld [vmem:[%s1423 + $0x30] sm:$0xf]
        %v1826 = vld [vmem:[%s1423 + $0x34] sm:$0xf]
        %v1827 = vld [vmem:[%s1423 + $0x38] sm:$0xf]
        %v1828 = vld [vmem:[%s1423 + $0x3c] sm:$0xf]
        %v1829 = vld [vmem:[%s1682] sm:$0x1]
        %v1830 = vld [vmem:[%s1433] sm:$0xf]
        %v1831 = vld [vmem:[%s1433 + $0x4] sm:$0xf]
        %v1832 = vld [vmem:[%s1433 + $0x8] sm:$0xf]
        %v1833 = vld [vmem:[%s1433 + $0xc] sm:$0xf]
        %v1834 = vld [vmem:[%s1433 + $0x10] sm:$0xf]
        %v1835 = vld [vmem:[%s1433 + $0x14] sm:$0xf]
        %v1836 = vld [vmem:[%s1433 + $0x18] sm:$0xf]
        %v1837 = vld [vmem:[%s1433 + $0x1c] sm:$0xf]
        %v1838 = vld [vmem:[%s1433 + $0x20] sm:$0xf]
        %v1839 = vld [vmem:[%s1433 + $0x24] sm:$0xf]
        %v1840 = vld [vmem:[%s1433 + $0x28] sm:$0xf]
        %v1841 = vld [vmem:[%s1433 + $0x2c] sm:$0xf]
        %v1842 = vld [vmem:[%s1433 + $0x30] sm:$0xf]
        %v1843 = vld [vmem:[%s1433 + $0x34] sm:$0xf]
        %v1844 = vld [vmem:[%s1433 + $0x38] sm:$0xf]
        %v1845 = vld [vmem:[%s1433 + $0x3c] sm:$0xf]
        %v1846 = vld [vmem:[%s1685] sm:$0x1]
        %v1847 = vpack.c.bf16 %v1778, %v1777
        %v1849 = vperm.slane %v1795, 0
        %v1867 = vunpack.c.l.b16 %v1779
        %v1868 = vunpack.c.l.b16 %v1780
        %v1869 = vunpack.c.l.b16 %v1781
        %v1870 = vunpack.c.l.b16 %v1782
        %v1871 = vunpack.c.l.b16 %v1783
        %v1872 = vunpack.c.l.b16 %v1784
        %v1873 = vunpack.c.l.b16 %v1785
        %v1874 = vunpack.c.l.b16 %v1786
        %v1875 = vunpack.c.l.b16 %v1787
        %v1876 = vunpack.c.l.b16 %v1788
        %v1877 = vunpack.c.l.b16 %v1789
        %v1878 = vunpack.c.l.b16 %v1790
        %v1879 = vunpack.c.l.b16 %v1791
        %v1880 = vunpack.c.l.b16 %v1792
        %v1881 = vunpack.c.l.b16 %v1793
        %v1882 = vunpack.c.l.b16 %v1794
        %v1883 = vpack.c.b16 %v1868, %v1867
        %v1884 = vpack.c.b16 %v1870, %v1869
        %v1885 = vpack.c.b16 %v1872, %v1871
        %v1886 = vpack.c.b16 %v1874, %v1873
        %v1887 = vpack.c.b16 %v1876, %v1875
        %v1888 = vpack.c.b16 %v1878, %v1877
        %v1889 = vpack.c.b16 %v1880, %v1879
        %v1890 = vpack.c.b16 %v1882, %v1881
        %1899 = vmatpush.bf16.msra.mxu0 %v1890
        %1900 = vmatpush.bf16.msra.mxu0 %v1889
        %1901 = vmatpush.bf16.msra.mxu0 %v1888
        %1902 = vmatpush.bf16.msra.mxu0 %v1887
        %1903 = vmatpush.bf16.msra.mxu0 %v1886
        %1904 = vmatpush.bf16.msra.mxu0 %v1885
        %1905 = vmatpush.bf16.msra.mxu0 %v1884
        %1906 = vmatpush.bf16.msra.mxu0 %v1883
        %1907 = vmatmul.bf16.gmra.mxu0 %v1847
        %v1908 = vpop.f32.mrf.mxu0
        %v1909 = vadd.f32 %v1849, %v1908
        %v1910 = vpop.f32.mrf.mxu0
        %v1911 = vadd.f32 %v1849, %v1910
        %1912 = vdwg.mxu0
        %v1914 = vperm.slane %v1812, 0
        %v1932 = vunpack.c.l.b16 %v1796
        %v1933 = vunpack.c.l.b16 %v1797
        %v1934 = vunpack.c.l.b16 %v1798
        %v1935 = vunpack.c.l.b16 %v1799
        %v1936 = vunpack.c.l.b16 %v1800
        %v1937 = vunpack.c.l.b16 %v1801
        %v1938 = vunpack.c.l.b16 %v1802
        %v1939 = vunpack.c.l.b16 %v1803
        %v1940 = vunpack.c.l.b16 %v1804
        %v1941 = vunpack.c.l.b16 %v1805
        %v1942 = vunpack.c.l.b16 %v1806
        %v1943 = vunpack.c.l.b16 %v1807
        %v1944 = vunpack.c.l.b16 %v1808
        %v1945 = vunpack.c.l.b16 %v1809
        %v1946 = vunpack.c.l.b16 %v1810
        %v1947 = vunpack.c.l.b16 %v1811
        %v1948 = vpack.c.b16 %v1933, %v1932
        %v1949 = vpack.c.b16 %v1935, %v1934
        %v1950 = vpack.c.b16 %v1937, %v1936
        %v1951 = vpack.c.b16 %v1939, %v1938
        %v1952 = vpack.c.b16 %v1941, %v1940
        %v1953 = vpack.c.b16 %v1943, %v1942
        %v1954 = vpack.c.b16 %v1945, %v1944
        %v1955 = vpack.c.b16 %v1947, %v1946
        %1964 = vmatpush.bf16.msra.mxu0 %v1955
        %1965 = vmatpush.bf16.msra.mxu0 %v1954
        %1966 = vmatpush.bf16.msra.mxu0 %v1953
        %1967 = vmatpush.bf16.msra.mxu0 %v1952
        %1968 = vmatpush.bf16.msra.mxu0 %v1951
        %1969 = vmatpush.bf16.msra.mxu0 %v1950
        %1970 = vmatpush.bf16.msra.mxu0 %v1949
        %1971 = vmatpush.bf16.msra.mxu0 %v1948
        %1972 = vmatmul.bf16.gmra.mxu0 %v1847
        %v1973 = vpop.f32.mrf.mxu0
        %v1974 = vadd.f32 %v1914, %v1973
        %v1975 = vpop.f32.mrf.mxu0
        %v1976 = vadd.f32 %v1914, %v1975
        %1977 = vdwg.mxu0
        %v1979 = vperm.slane %v1829, 0
        %v1997 = vunpack.c.l.b16 %v1813
        %v1998 = vunpack.c.l.b16 %v1814
        %v1999 = vunpack.c.l.b16 %v1815
        %v2000 = vunpack.c.l.b16 %v1816
        %v2001 = vunpack.c.l.b16 %v1817
        %v2002 = vunpack.c.l.b16 %v1818
        %v2003 = vunpack.c.l.b16 %v1819
        %v2004 = vunpack.c.l.b16 %v1820
        %v2005 = vunpack.c.l.b16 %v1821
        %v2006 = vunpack.c.l.b16 %v1822
        %v2007 = vunpack.c.l.b16 %v1823
        %v2008 = vunpack.c.l.b16 %v1824
        %v2009 = vunpack.c.l.b16 %v1825
        %v2010 = vunpack.c.l.b16 %v1826
        %v2011 = vunpack.c.l.b16 %v1827
        %v2012 = vunpack.c.l.b16 %v1828
        %v2013 = vpack.c.b16 %v1998, %v1997
        %v2014 = vpack.c.b16 %v2000, %v1999
        %v2015 = vpack.c.b16 %v2002, %v2001
        %v2016 = vpack.c.b16 %v2004, %v2003
        %v2017 = vpack.c.b16 %v2006, %v2005
        %v2018 = vpack.c.b16 %v2008, %v2007
        %v2019 = vpack.c.b16 %v2010, %v2009
        %v2020 = vpack.c.b16 %v2012, %v2011
        %2029 = vmatpush.bf16.msra.mxu0 %v2020
        %2030 = vmatpush.bf16.msra.mxu0 %v2019
        %2031 = vmatpush.bf16.msra.mxu0 %v2018
        %2032 = vmatpush.bf16.msra.mxu0 %v2017
        %2033 = vmatpush.bf16.msra.mxu0 %v2016
        %2034 = vmatpush.bf16.msra.mxu0 %v2015
        %2035 = vmatpush.bf16.msra.mxu0 %v2014
        %2036 = vmatpush.bf16.msra.mxu0 %v2013
        %2037 = vmatmul.bf16.gmra.mxu0 %v1847
        %v2038 = vpop.f32.mrf.mxu0
        %v2039 = vadd.f32 %v1979, %v2038
        %v2040 = vpop.f32.mrf.mxu0
        %v2041 = vadd.f32 %v1979, %v2040
        %2042 = vdwg.mxu0
        %v2043 = vpack.c.bf16 %v1909, %v1909
        %v2044 = vpack.c.bf16 %v1911, %v1911
        %v2045 = vpack.c.bf16 %v1974, %v1974
        %v2046 = vpack.c.bf16 %v1976, %v1976
        %v2047 = vpack.c.bf16 %v2039, %v2039
        %v2048 = vpack.c.bf16 %v2041, %v2041
        %vm2049 = vcmask 261120
        %v2051 = vsel %vm2049, %v2043, 0
        %v2054 = vsel %vm2049, %v2045, 0
        %2056 = vmatpush.bf16.xpose.msra.mxu0 0
        %2057 = vmatpush.bf16.xpose.msra.mxu0 0
        %2058 = vmatpush.bf16.xpose.msra.mxu0 0
        %2059 = vmatpush.bf16.xpose.msra.mxu0 0
        %2060 = vmatpush.bf16.xpose.msra.mxu0 0
        %2061 = vmatpush.bf16.xpose.msra.mxu0 0
        %2062 = vmatpush.bf16.xpose.msra.mxu0 0
        %2063 = vmatpush.bf16.xpose.msra.mxu0 %v2054
        %2064 = vmatmul.bf16.gmra.mxu0 %v2051
        %v2065 = vpop.f32.mrf.mxu0
        %v2066 = vadd.f32 0.0, %v2065
        %v2067 = vpop.f32.mrf.mxu0
        %2068 = vdwg.mxu0
        %v2070 = vsel %vm2049, %v2044, 0
        %v2073 = vsel %vm2049, %v2046, 0
        %2075 = vmatpush.bf16.xpose.msra.mxu0 0
        %2076 = vmatpush.bf16.xpose.msra.mxu0 0
        %2077 = vmatpush.bf16.xpose.msra.mxu0 0
        %2078 = vmatpush.bf16.xpose.msra.mxu0 0
        %2079 = vmatpush.bf16.xpose.msra.mxu0 0
        %2080 = vmatpush.bf16.xpose.msra.mxu0 0
        %2081 = vmatpush.bf16.xpose.msra.mxu0 0
        %2082 = vmatpush.bf16.xpose.msra.mxu0 %v2073
        %2083 = vmatmul.bf16.gmra.mxu0 %v2070
        %v2084 = vpop.f32.mrf.mxu0
        %v2085 = vadd.f32 0.0, %v2084
        %v2086 = vpop.f32.mrf.mxu0
        %2087 = vdwg.mxu0
        %v2088 = vmul.f32 %v2066, 0.17677669
        %v2089 = vmul.f32 %v2085, 0.17677669
        %v2090 = vadd.f32 %v2088, %v1718
        %v2091 = vadd.f32 %v2089, %v1718
        %vm2092 = vcmask 64512
        %v2093 = vsel %vm2092, %v2090, -inf
        %2094 = vmax.xlane.f32.xlu0 %v2093
        %v2095 = vpop.xlane.xlu0 %2094
        %v2096 = vsel %vm2092, %v2091, -inf
        %2097 = vmax.xlane.f32.xlu0 %v2096
        %v2098 = vpop.xlane.xlu0 %2097
        %v2099 = vsub.f32 %v2090, %v2095
        %v2100 = vsub.f32 %v2091, %v2098
        %v2101 = vmul.f32 %v2099, 1.442695
        %v2102 = vpow.pop %v2101
        %v2103 = vmul.f32 %v2100, 1.442695
        %v2104 = vpow.pop %v2103
        %v2105 = vsel %vm2092, %v2102, 0.0
        %2106 = vadd.xlane.f32.xlu0 %v2105
        %v2107 = vpop.xlane.xlu0 %2106
        %v2108 = vsel %vm2092, %v2104, 0.0
        %2109 = vadd.xlane.f32.xlu0 %v2108
        %v2110 = vpop.xlane.xlu0 %2109
        %v2111 = vrcp.pop %v2107
        %v2112 = vmul.f32 %v2107, %v2111
        %v2113 = vsub.f32 1.0, %v2112
        %v2114 = vmul.f32 %v2111, %v2113
        %v2115 = vadd.f32 %v2111, %v2114
        %vm2116 = vweird.f32 %v2107
        %vm2117 = vweird.f32 %v2111
        %vm2118 = vmor %vm2116, %vm2117
        %v2119 = vsel %vm2118, %v2111, %v2115
        %v2120 = vand.u32 2147483647, %v2107
        %vm2121 = vcmp.eq.f32.partialorder %v2120, 8.507059e+37
        %v2122 = vand.u32 %v2107, 2147483648
        %v2123 = vor.u32 1.1754944e-38, %v2122
        %v2124 = vsel %vm2121, %v2123, %v2119
        %v2125 = vmul.f32 %v2102, %v2124
        %v2126 = vrcp.pop %v2110
        %v2127 = vmul.f32 %v2110, %v2126
        %v2128 = vsub.f32 1.0, %v2127
        %v2129 = vmul.f32 %v2126, %v2128
        %v2130 = vadd.f32 %v2126, %v2129
        %vm2131 = vweird.f32 %v2110
        %vm2132 = vweird.f32 %v2126
        %vm2133 = vmor %vm2131, %vm2132
        %v2134 = vsel %vm2133, %v2126, %v2130
        %v2135 = vand.u32 2147483647, %v2110
        %vm2136 = vcmp.eq.f32.partialorder %v2135, 8.507059e+37
        %v2137 = vand.u32 %v2110, 2147483648
        %v2138 = vor.u32 1.1754944e-38, %v2137
        %v2139 = vsel %vm2136, %v2138, %v2134
        %v2140 = vmul.f32 %v2104, %v2139
        %v2141 = vpack.c.bf16 %v2125, %v2125
        %v2142 = vpack.c.bf16 %v2140, %v2140
        %v2144 = vsel %vm2092, %v2141, 0
        %vm2146 = vcmask 1043456
        %v2148 = vsel %vm2146, %v2047, 0
        %2150 = vmatpush.bf16.msra.mxu0 0
        %2151 = vmatpush.bf16.msra.mxu0 0
        %2152 = vmatpush.bf16.msra.mxu0 0
        %2153 = vmatpush.bf16.msra.mxu0 0
        %2154 = vmatpush.bf16.msra.mxu0 0
        %2155 = vmatpush.bf16.msra.mxu0 0
        %2156 = vmatpush.bf16.msra.mxu0 0
        %2157 = vmatpush.bf16.msra.mxu0 %v2148
        %2158 = vmatmul.bf16.gmra.mxu0 %v2144
        %v2159 = vpop.f32.mrf.mxu0
        %v2160 = vadd.f32 0.0, %v2159
        %v2161 = vpop.f32.mrf.mxu0
        %2162 = vdwg.mxu0
        %v2164 = vsel %vm2092, %v2142, 0
        %v2167 = vsel %vm2146, %v2048, 0
        %2169 = vmatpush.bf16.msra.mxu0 0
        %2170 = vmatpush.bf16.msra.mxu0 0
        %2171 = vmatpush.bf16.msra.mxu0 0
        %2172 = vmatpush.bf16.msra.mxu0 0
        %2173 = vmatpush.bf16.msra.mxu0 0
        %2174 = vmatpush.bf16.msra.mxu0 0
        %2175 = vmatpush.bf16.msra.mxu0 0
        %2176 = vmatpush.bf16.msra.mxu0 %v2167
        %2177 = vmatmul.bf16.gmra.mxu0 %v2164
        %v2178 = vpop.f32.mrf.mxu0
        %v2179 = vadd.f32 0.0, %v2178
        %v2180 = vpop.f32.mrf.mxu0
        %2181 = vdwg.mxu0
        %v2182 = vpack.c.bf16 %v2179, %v2160
        %v2184 = vunpack.c.l.b16 %v2043
        %v2185 = vpack.c.b16 %v2184, %v2184
        %2186 = vrot.lane.b32.xlu0 %v2185, 96
        %v2187 = vpop.permute.xlu0 %2186
        %v2189 = vunpack.c.l.b16 %v2045
        %v2190 = vpack.c.b16 %v2189, %v2189
        %2191 = vrot.lane.b32.xlu0 %v2190, 96
        %v2192 = vpop.permute.xlu0 %2191
        %v2194 = vsel %vm2049, %v2187, 0
        %v2197 = vsel %vm2049, %v2192, 0
        %2199 = vmatpush.bf16.xpose.msra.mxu0 0
        %2200 = vmatpush.bf16.xpose.msra.mxu0 0
        %2201 = vmatpush.bf16.xpose.msra.mxu0 0
        %2202 = vmatpush.bf16.xpose.msra.mxu0 0
        %2203 = vmatpush.bf16.xpose.msra.mxu0 0
        %2204 = vmatpush.bf16.xpose.msra.mxu0 0
        %2205 = vmatpush.bf16.xpose.msra.mxu0 0
        %2206 = vmatpush.bf16.xpose.msra.mxu0 %v2197
        %2207 = vmatmul.bf16.gmra.mxu0 %v2194
        %v2208 = vpop.f32.mrf.mxu0
        %v2209 = vadd.f32 0.0, %v2208
        %v2210 = vpop.f32.mrf.mxu0
        %2211 = vdwg.mxu0
        %v2213 = vunpack.c.l.b16 %v2044
        %v2214 = vpack.c.b16 %v2213, %v2213
        %2215 = vrot.lane.b32.xlu0 %v2214, 96
        %v2216 = vpop.permute.xlu0 %2215
        %v2218 = vunpack.c.l.b16 %v2046
        %v2219 = vpack.c.b16 %v2218, %v2218
        %2220 = vrot.lane.b32.xlu0 %v2219, 96
        %v2221 = vpop.permute.xlu0 %2220
        %v2223 = vsel %vm2049, %v2216, 0
        %v2226 = vsel %vm2049, %v2221, 0
        %2228 = vmatpush.bf16.xpose.msra.mxu0 0
        %2229 = vmatpush.bf16.xpose.msra.mxu0 0
        %2230 = vmatpush.bf16.xpose.msra.mxu0 0
        %2231 = vmatpush.bf16.xpose.msra.mxu0 0
        %2232 = vmatpush.bf16.xpose.msra.mxu0 0
        %2233 = vmatpush.bf16.xpose.msra.mxu0 0
        %2234 = vmatpush.bf16.xpose.msra.mxu0 0
        %2235 = vmatpush.bf16.xpose.msra.mxu0 %v2226
        %2236 = vmatmul.bf16.gmra.mxu0 %v2223
        %v2237 = vpop.f32.mrf.mxu0
        %v2238 = vadd.f32 0.0, %v2237
        %v2239 = vpop.f32.mrf.mxu0
        %2240 = vdwg.mxu0
        %v2241 = vmul.f32 %v2209, 0.17677669
        %v2242 = vmul.f32 %v2238, 0.17677669
        %v2243 = vadd.f32 %v2241, %v1718
        %v2244 = vadd.f32 %v2242, %v1718
        %v2245 = vsel %vm2092, %v2243, -inf
        %2246 = vmax.xlane.f32.xlu0 %v2245
        %v2247 = vpop.xlane.xlu0 %2246
        %v2248 = vsel %vm2092, %v2244, -inf
        %2249 = vmax.xlane.f32.xlu0 %v2248
        %v2250 = vpop.xlane.xlu0 %2249
        %v2251 = vsub.f32 %v2243, %v2247
        %v2252 = vsub.f32 %v2244, %v2250
        %v2253 = vmul.f32 %v2251, 1.442695
        %v2254 = vpow.pop %v2253
        %v2255 = vmul.f32 %v2252, 1.442695
        %v2256 = vpow.pop %v2255
        %v2257 = vsel %vm2092, %v2254, 0.0
        %2258 = vadd.xlane.f32.xlu0 %v2257
        %v2259 = vpop.xlane.xlu0 %2258
        %v2260 = vsel %vm2092, %v2256, 0.0
        %2261 = vadd.xlane.f32.xlu0 %v2260
        %v2262 = vpop.xlane.xlu0 %2261
        %v2263 = vrcp.pop %v2259
        %v2264 = vmul.f32 %v2259, %v2263
        %v2265 = vsub.f32 1.0, %v2264
        %v2266 = vmul.f32 %v2263, %v2265
        %v2267 = vadd.f32 %v2263, %v2266
        %vm2268 = vweird.f32 %v2259
        %vm2269 = vweird.f32 %v2263
        %vm2270 = vmor %vm2268, %vm2269
        %v2271 = vsel %vm2270, %v2263, %v2267
        %v2272 = vand.u32 2147483647, %v2259
        %vm2273 = vcmp.eq.f32.partialorder %v2272, 8.507059e+37
        %v2274 = vand.u32 %v2259, 2147483648
        %v2275 = vor.u32 1.1754944e-38, %v2274
        %v2276 = vsel %vm2273, %v2275, %v2271
        %v2277 = vmul.f32 %v2254, %v2276
        %v2278 = vrcp.pop %v2262
        %v2279 = vmul.f32 %v2262, %v2278
        %v2280 = vsub.f32 1.0, %v2279
        %v2281 = vmul.f32 %v2278, %v2280
        %v2282 = vadd.f32 %v2278, %v2281
        %vm2283 = vweird.f32 %v2262
        %vm2284 = vweird.f32 %v2278
        %vm2285 = vmor %vm2283, %vm2284
        %v2286 = vsel %vm2285, %v2278, %v2282
        %v2287 = vand.u32 2147483647, %v2262
        %vm2288 = vcmp.eq.f32.partialorder %v2287, 8.507059e+37
        %v2289 = vand.u32 %v2262, 2147483648
        %v2290 = vor.u32 1.1754944e-38, %v2289
        %v2291 = vsel %vm2288, %v2290, %v2286
        %v2292 = vmul.f32 %v2256, %v2291
        %v2293 = vpack.c.bf16 %v2277, %v2277
        %v2294 = vpack.c.bf16 %v2292, %v2292
        %v2296 = vunpack.c.l.b16 %v2047
        %v2297 = vpack.c.b16 %v2296, %v2296
        %2298 = vrot.lane.b32.xlu0 %v2297, 96
        %v2299 = vpop.permute.xlu0 %2298
        %v2301 = vsel %vm2092, %v2293, 0
        %v2304 = vsel %vm2146, %v2299, 0
        %2306 = vmatpush.bf16.msra.mxu0 0
        %2307 = vmatpush.bf16.msra.mxu0 0
        %2308 = vmatpush.bf16.msra.mxu0 0
        %2309 = vmatpush.bf16.msra.mxu0 0
        %2310 = vmatpush.bf16.msra.mxu0 0
        %2311 = vmatpush.bf16.msra.mxu0 0
        %2312 = vmatpush.bf16.msra.mxu0 0
        %2313 = vmatpush.bf16.msra.mxu0 %v2304
        %2314 = vmatmul.bf16.gmra.mxu0 %v2301
        %v2315 = vpop.f32.mrf.mxu0
        %v2316 = vadd.f32 0.0, %v2315
        %v2317 = vpop.f32.mrf.mxu0
        %2318 = vdwg.mxu0
        %v2320 = vunpack.c.l.b16 %v2048
        %v2321 = vpack.c.b16 %v2320, %v2320
        %2322 = vrot.lane.b32.xlu0 %v2321, 96
        %v2323 = vpop.permute.xlu0 %2322
        %v2325 = vsel %vm2092, %v2294, 0
        %v2328 = vsel %vm2146, %v2323, 0
        %2330 = vmatpush.bf16.msra.mxu0 0
        %2331 = vmatpush.bf16.msra.mxu0 0
        %2332 = vmatpush.bf16.msra.mxu0 0
        %2333 = vmatpush.bf16.msra.mxu0 0
        %2334 = vmatpush.bf16.msra.mxu0 0
        %2335 = vmatpush.bf16.msra.mxu0 0
        %2336 = vmatpush.bf16.msra.mxu0 0
        %2337 = vmatpush.bf16.msra.mxu0 %v2328
        %2338 = vmatmul.bf16.gmra.mxu0 %v2325
        %v2339 = vpop.f32.mrf.mxu0
        %v2340 = vadd.f32 0.0, %v2339
        %v2341 = vpop.f32.mrf.mxu0
        %2342 = vdwg.mxu0
        %v2343 = vpack.c.bf16 %v2340, %v2316
        %v2348 = vunpack.c.l.b16 %v1834
        %v2349 = vunpack.c.l.b16 %v1835
        %v2350 = vunpack.c.l.b16 %v1836
        %v2351 = vunpack.c.l.b16 %v1837
        %v2352 = vpack.c.b16 %v2349, %v2348
        %v2353 = vpack.c.b16 %v2351, %v2350
        %v2357 = vsel %vm2049, %v2343, 0
        %2359 = vmatpush.bf16.msra.mxu0 0
        %2360 = vmatpush.bf16.msra.mxu0 0
        %2361 = vmatpush.bf16.msra.mxu0 0
        %2362 = vmatpush.bf16.msra.mxu0 0
        %2363 = vmatpush.bf16.msra.mxu0 0
        %2364 = vmatpush.bf16.msra.mxu0 0
        %2365 = vmatpush.bf16.msra.mxu0 %v2353
        %2366 = vmatpush.bf16.msra.mxu0 %v2352
        %2367 = vmatmul.bf16.gmra.mxu0 %v2357
        %v2368 = vpop.f32.mrf.mxu0
        %v2369 = vadd.f32 0.0, %v2368
        %v2370 = vpop.f32.mrf.mxu0
        %v2371 = vadd.f32 0.0, %v2370
        %2372 = vdwg.mxu0
        %v2377 = vunpack.c.l.b16 %v1830
        %v2378 = vunpack.c.l.b16 %v1831
        %v2379 = vunpack.c.l.b16 %v1832
        %v2380 = vunpack.c.l.b16 %v1833
        %v2381 = vpack.c.b16 %v2378, %v2377
        %v2382 = vpack.c.b16 %v2380, %v2379
        %v2386 = vsel %vm2049, %v2182, 0
        %2388 = vmatpush.bf16.msra.mxu0 0
        %2389 = vmatpush.bf16.msra.mxu0 0
        %2390 = vmatpush.bf16.msra.mxu0 0
        %2391 = vmatpush.bf16.msra.mxu0 0
        %2392 = vmatpush.bf16.msra.mxu0 0
        %2393 = vmatpush.bf16.msra.mxu0 0
        %2394 = vmatpush.bf16.msra.mxu0 %v2382
        %2395 = vmatpush.bf16.msra.mxu0 %v2381
        %2396 = vmatmul.bf16.gmra.mxu0 %v2386
        %v2397 = vpop.f32.mrf.mxu0
        %v2398 = vadd.f32 %v2369, %v2397
        %v2399 = vpop.f32.mrf.mxu0
        %v2400 = vadd.f32 %v2371, %v2399
        %2401 = vdwg.mxu0
        %2402 = vrot.lane.b32.xlu0 %v2185, 64
        %v2403 = vpop.permute.xlu0 %2402
        %2404 = vrot.lane.b32.xlu0 %v2190, 64
        %v2405 = vpop.permute.xlu0 %2404
        %v2407 = vsel %vm2049, %v2403, 0
        %v2410 = vsel %vm2049, %v2405, 0
        %2412 = vmatpush.bf16.xpose.msra.mxu0 0
        %2413 = vmatpush.bf16.xpose.msra.mxu0 0
        %2414 = vmatpush.bf16.xpose.msra.mxu0 0
        %2415 = vmatpush.bf16.xpose.msra.mxu0 0
        %2416 = vmatpush.bf16.xpose.msra.mxu0 0
        %2417 = vmatpush.bf16.xpose.msra.mxu0 0
        %2418 = vmatpush.bf16.xpose.msra.mxu0 0
        %2419 = vmatpush.bf16.xpose.msra.mxu0 %v2410
        %2420 = vmatmul.bf16.gmra.mxu0 %v2407
        %v2421 = vpop.f32.mrf.mxu0
        %v2422 = vadd.f32 0.0, %v2421
        %v2423 = vpop.f32.mrf.mxu0
        %2424 = vdwg.mxu0
        %2425 = vrot.lane.b32.xlu0 %v2214, 64
        %v2426 = vpop.permute.xlu0 %2425
        %2427 = vrot.lane.b32.xlu0 %v2219, 64
        %v2428 = vpop.permute.xlu0 %2427
        %v2430 = vsel %vm2049, %v2426, 0
        %v2433 = vsel %vm2049, %v2428, 0
        %2435 = vmatpush.bf16.xpose.msra.mxu0 0
        %2436 = vmatpush.bf16.xpose.msra.mxu0 0
        %2437 = vmatpush.bf16.xpose.msra.mxu0 0
        %2438 = vmatpush.bf16.xpose.msra.mxu0 0
        %2439 = vmatpush.bf16.xpose.msra.mxu0 0
        %2440 = vmatpush.bf16.xpose.msra.mxu0 0
        %2441 = vmatpush.bf16.xpose.msra.mxu0 0
        %2442 = vmatpush.bf16.xpose.msra.mxu0 %v2433
        %2443 = vmatmul.bf16.gmra.mxu0 %v2430
        %v2444 = vpop.f32.mrf.mxu0
        %v2445 = vadd.f32 0.0, %v2444
        %v2446 = vpop.f32.mrf.mxu0
        %2447 = vdwg.mxu0
        %v2448 = vmul.f32 %v2422, 0.17677669
        %v2449 = vmul.f32 %v2445, 0.17677669
        %v2450 = vadd.f32 %v2448, %v1718
        %v2451 = vadd.f32 %v2449, %v1718
        %v2452 = vsel %vm2092, %v2450, -inf
        %2453 = vmax.xlane.f32.xlu0 %v2452
        %v2454 = vpop.xlane.xlu0 %2453
        %v2455 = vsel %vm2092, %v2451, -inf
        %2456 = vmax.xlane.f32.xlu0 %v2455
        %v2457 = vpop.xlane.xlu0 %2456
        %v2458 = vsub.f32 %v2450, %v2454
        %v2459 = vsub.f32 %v2451, %v2457
        %v2460 = vmul.f32 %v2458, 1.442695
        %v2461 = vpow.pop %v2460
        %v2462 = vmul.f32 %v2459, 1.442695
        %v2463 = vpow.pop %v2462
        %v2464 = vsel %vm2092, %v2461, 0.0
        %2465 = vadd.xlane.f32.xlu0 %v2464
        %v2466 = vpop.xlane.xlu0 %2465
        %v2467 = vsel %vm2092, %v2463, 0.0
        %2468 = vadd.xlane.f32.xlu0 %v2467
        %v2469 = vpop.xlane.xlu0 %2468
        %v2470 = vrcp.pop %v2466
        %v2471 = vmul.f32 %v2466, %v2470
        %v2472 = vsub.f32 1.0, %v2471
        %v2473 = vmul.f32 %v2470, %v2472
        %v2474 = vadd.f32 %v2470, %v2473
        %vm2475 = vweird.f32 %v2466
        %vm2476 = vweird.f32 %v2470
        %vm2477 = vmor %vm2475, %vm2476
        %v2478 = vsel %vm2477, %v2470, %v2474
        %v2479 = vand.u32 2147483647, %v2466
        %vm2480 = vcmp.eq.f32.partialorder %v2479, 8.507059e+37
        %v2481 = vand.u32 %v2466, 2147483648
        %v2482 = vor.u32 1.1754944e-38, %v2481
        %v2483 = vsel %vm2480, %v2482, %v2478
        %v2484 = vmul.f32 %v2461, %v2483
        %v2485 = vrcp.pop %v2469
        %v2486 = vmul.f32 %v2469, %v2485
        %v2487 = vsub.f32 1.0, %v2486
        %v2488 = vmul.f32 %v2485, %v2487
        %v2489 = vadd.f32 %v2485, %v2488
        %vm2490 = vweird.f32 %v2469
        %vm2491 = vweird.f32 %v2485
        %vm2492 = vmor %vm2490, %vm2491
        %v2493 = vsel %vm2492, %v2485, %v2489
        %v2494 = vand.u32 2147483647, %v2469
        %vm2495 = vcmp.eq.f32.partialorder %v2494, 8.507059e+37
        %v2496 = vand.u32 %v2469, 2147483648
        %v2497 = vor.u32 1.1754944e-38, %v2496
        %v2498 = vsel %vm2495, %v2497, %v2493
        %v2499 = vmul.f32 %v2463, %v2498
        %v2500 = vpack.c.bf16 %v2484, %v2484
        %v2501 = vpack.c.bf16 %v2499, %v2499
        %2502 = vrot.lane.b32.xlu0 %v2297, 64
        %v2503 = vpop.permute.xlu0 %2502
        %v2505 = vsel %vm2092, %v2500, 0
        %v2508 = vsel %vm2146, %v2503, 0
        %2510 = vmatpush.bf16.msra.mxu0 0
        %2511 = vmatpush.bf16.msra.mxu0 0
        %2512 = vmatpush.bf16.msra.mxu0 0
        %2513 = vmatpush.bf16.msra.mxu0 0
        %2514 = vmatpush.bf16.msra.mxu0 0
        %2515 = vmatpush.bf16.msra.mxu0 0
        %2516 = vmatpush.bf16.msra.mxu0 0
        %2517 = vmatpush.bf16.msra.mxu0 %v2508
        %2518 = vmatmul.bf16.gmra.mxu0 %v2505
        %v2519 = vpop.f32.mrf.mxu0
        %v2520 = vadd.f32 0.0, %v2519
        %v2521 = vpop.f32.mrf.mxu0
        %2522 = vdwg.mxu0
        %2523 = vrot.lane.b32.xlu0 %v2321, 64
        %v2524 = vpop.permute.xlu0 %2523
        %v2526 = vsel %vm2092, %v2501, 0
        %v2529 = vsel %vm2146, %v2524, 0
        %2531 = vmatpush.bf16.msra.mxu0 0
        %2532 = vmatpush.bf16.msra.mxu0 0
        %2533 = vmatpush.bf16.msra.mxu0 0
        %2534 = vmatpush.bf16.msra.mxu0 0
        %2535 = vmatpush.bf16.msra.mxu0 0
        %2536 = vmatpush.bf16.msra.mxu0 0
        %2537 = vmatpush.bf16.msra.mxu0 0
        %2538 = vmatpush.bf16.msra.mxu0 %v2529
        %2539 = vmatmul.bf16.gmra.mxu0 %v2526
        %v2540 = vpop.f32.mrf.mxu0
        %v2541 = vadd.f32 0.0, %v2540
        %v2542 = vpop.f32.mrf.mxu0
        %2543 = vdwg.mxu0
        %v2544 = vpack.c.bf16 %v2541, %v2520
        %v2549 = vunpack.c.l.b16 %v1838
        %v2550 = vunpack.c.l.b16 %v1839
        %v2551 = vunpack.c.l.b16 %v1840
        %v2552 = vunpack.c.l.b16 %v1841
        %v2553 = vpack.c.b16 %v2550, %v2549
        %v2554 = vpack.c.b16 %v2552, %v2551
        %v2558 = vsel %vm2049, %v2544, 0
        %2560 = vmatpush.bf16.msra.mxu0 0
        %2561 = vmatpush.bf16.msra.mxu0 0
        %2562 = vmatpush.bf16.msra.mxu0 0
        %2563 = vmatpush.bf16.msra.mxu0 0
        %2564 = vmatpush.bf16.msra.mxu0 0
        %2565 = vmatpush.bf16.msra.mxu0 0
        %2566 = vmatpush.bf16.msra.mxu0 %v2554
        %2567 = vmatpush.bf16.msra.mxu0 %v2553
        %2568 = vmatmul.bf16.gmra.mxu0 %v2558
        %v2569 = vpop.f32.mrf.mxu0
        %v2570 = vadd.f32 0.0, %v2569
        %v2571 = vpop.f32.mrf.mxu0
        %v2572 = vadd.f32 0.0, %v2571
        %2573 = vdwg.mxu0
        %v2574 = vadd.f32 %v2398, %v2570
        %v2575 = vadd.f32 %v2400, %v2572
        %2576 = vrot.lane.b32.xlu0 %v2185, 32
        %v2577 = vpop.permute.xlu0 %2576
        %2578 = vrot.lane.b32.xlu0 %v2190, 32
        %v2579 = vpop.permute.xlu0 %2578
        %v2581 = vsel %vm2049, %v2577, 0
        %v2584 = vsel %vm2049, %v2579, 0
        %2586 = vmatpush.bf16.xpose.msra.mxu0 0
        %2587 = vmatpush.bf16.xpose.msra.mxu0 0
        %2588 = vmatpush.bf16.xpose.msra.mxu0 0
        %2589 = vmatpush.bf16.xpose.msra.mxu0 0
        %2590 = vmatpush.bf16.xpose.msra.mxu0 0
        %2591 = vmatpush.bf16.xpose.msra.mxu0 0
        %2592 = vmatpush.bf16.xpose.msra.mxu0 0
        %2593 = vmatpush.bf16.xpose.msra.mxu0 %v2584
        %2594 = vmatmul.bf16.gmra.mxu0 %v2581
        %v2595 = vpop.f32.mrf.mxu0
        %v2596 = vadd.f32 0.0, %v2595
        %v2597 = vpop.f32.mrf.mxu0
        %2598 = vdwg.mxu0
        %2599 = vrot.lane.b32.xlu0 %v2214, 32
        %v2600 = vpop.permute.xlu0 %2599
        %2601 = vrot.lane.b32.xlu0 %v2219, 32
        %v2602 = vpop.permute.xlu0 %2601
        %v2604 = vsel %vm2049, %v2600, 0
        %v2607 = vsel %vm2049, %v2602, 0
        %2609 = vmatpush.bf16.xpose.msra.mxu0 0
        %2610 = vmatpush.bf16.xpose.msra.mxu0 0
        %2611 = vmatpush.bf16.xpose.msra.mxu0 0
        %2612 = vmatpush.bf16.xpose.msra.mxu0 0
        %2613 = vmatpush.bf16.xpose.msra.mxu0 0
        %2614 = vmatpush.bf16.xpose.msra.mxu0 0
        %2615 = vmatpush.bf16.xpose.msra.mxu0 0
        %2616 = vmatpush.bf16.xpose.msra.mxu0 %v2607
        %2617 = vmatmul.bf16.gmra.mxu0 %v2604
        %v2618 = vpop.f32.mrf.mxu0
        %v2619 = vadd.f32 0.0, %v2618
        %v2620 = vpop.f32.mrf.mxu0
        %2621 = vdwg.mxu0
        %v2622 = vmul.f32 %v2596, 0.17677669
        %v2623 = vmul.f32 %v2619, 0.17677669
        %v2624 = vadd.f32 %v2622, %v1718
        %v2625 = vadd.f32 %v2623, %v1718
        %v2626 = vsel %vm2092, %v2624, -inf
        %2627 = vmax.xlane.f32.xlu0 %v2626
        %v2628 = vpop.xlane.xlu0 %2627
        %v2629 = vsel %vm2092, %v2625, -inf
        %2630 = vmax.xlane.f32.xlu0 %v2629
        %v2631 = vpop.xlane.xlu0 %2630
        %v2632 = vsub.f32 %v2624, %v2628
        %v2633 = vsub.f32 %v2625, %v2631
        %v2634 = vmul.f32 %v2632, 1.442695
        %v2635 = vpow.pop %v2634
        %v2636 = vmul.f32 %v2633, 1.442695
        %v2637 = vpow.pop %v2636
        %v2638 = vsel %vm2092, %v2635, 0.0
        %2639 = vadd.xlane.f32.xlu0 %v2638
        %v2640 = vpop.xlane.xlu0 %2639
        %v2641 = vsel %vm2092, %v2637, 0.0
        %2642 = vadd.xlane.f32.xlu0 %v2641
        %v2643 = vpop.xlane.xlu0 %2642
        %v2644 = vrcp.pop %v2640
        %v2645 = vmul.f32 %v2640, %v2644
        %v2646 = vsub.f32 1.0, %v2645
        %v2647 = vmul.f32 %v2644, %v2646
        %v2648 = vadd.f32 %v2644, %v2647
        %vm2649 = vweird.f32 %v2640
        %vm2650 = vweird.f32 %v2644
        %vm2651 = vmor %vm2649, %vm2650
        %v2652 = vsel %vm2651, %v2644, %v2648
        %v2653 = vand.u32 2147483647, %v2640
        %vm2654 = vcmp.eq.f32.partialorder %v2653, 8.507059e+37
        %v2655 = vand.u32 %v2640, 2147483648
        %v2656 = vor.u32 1.1754944e-38, %v2655
        %v2657 = vsel %vm2654, %v2656, %v2652
        %v2658 = vmul.f32 %v2635, %v2657
        %v2659 = vrcp.pop %v2643
        %v2660 = vmul.f32 %v2643, %v2659
        %v2661 = vsub.f32 1.0, %v2660
        %v2662 = vmul.f32 %v2659, %v2661
        %v2663 = vadd.f32 %v2659, %v2662
        %vm2664 = vweird.f32 %v2643
        %vm2665 = vweird.f32 %v2659
        %vm2666 = vmor %vm2664, %vm2665
        %v2667 = vsel %vm2666, %v2659, %v2663
        %v2668 = vand.u32 2147483647, %v2643
        %vm2669 = vcmp.eq.f32.partialorder %v2668, 8.507059e+37
        %v2670 = vand.u32 %v2643, 2147483648
        %v2671 = vor.u32 1.1754944e-38, %v2670
        %v2672 = vsel %vm2669, %v2671, %v2667
        %v2673 = vmul.f32 %v2637, %v2672
        %v2674 = vpack.c.bf16 %v2658, %v2658
        %v2675 = vpack.c.bf16 %v2673, %v2673
        %2676 = vrot.lane.b32.xlu0 %v2297, 32
        %v2677 = vpop.permute.xlu0 %2676
        %v2679 = vsel %vm2092, %v2674, 0
        %v2682 = vsel %vm2146, %v2677, 0
        %2684 = vmatpush.bf16.msra.mxu0 0
        %2685 = vmatpush.bf16.msra.mxu0 0
        %2686 = vmatpush.bf16.msra.mxu0 0
        %2687 = vmatpush.bf16.msra.mxu0 0
        %2688 = vmatpush.bf16.msra.mxu0 0
        %2689 = vmatpush.bf16.msra.mxu0 0
        %2690 = vmatpush.bf16.msra.mxu0 0
        %2691 = vmatpush.bf16.msra.mxu0 %v2682
        %2692 = vmatmul.bf16.gmra.mxu0 %v2679
        %v2693 = vpop.f32.mrf.mxu0
        %v2694 = vadd.f32 0.0, %v2693
        %v2695 = vpop.f32.mrf.mxu0
        %2696 = vdwg.mxu0
        %2697 = vrot.lane.b32.xlu0 %v2321, 32
        %v2698 = vpop.permute.xlu0 %2697
        %v2700 = vsel %vm2092, %v2675, 0
        %v2703 = vsel %vm2146, %v2698, 0
        %2705 = vmatpush.bf16.msra.mxu0 0
        %2706 = vmatpush.bf16.msra.mxu0 0
        %2707 = vmatpush.bf16.msra.mxu0 0
        %2708 = vmatpush.bf16.msra.mxu0 0
        %2709 = vmatpush.bf16.msra.mxu0 0
        %2710 = vmatpush.bf16.msra.mxu0 0
        %2711 = vmatpush.bf16.msra.mxu0 0
        %2712 = vmatpush.bf16.msra.mxu0 %v2703
        %2713 = vmatmul.bf16.gmra.mxu0 %v2700
        %v2714 = vpop.f32.mrf.mxu0
        %v2715 = vadd.f32 0.0, %v2714
        %v2716 = vpop.f32.mrf.mxu0
        %2717 = vdwg.mxu0
        %v2718 = vpack.c.bf16 %v2715, %v2694
        %v2723 = vunpack.c.l.b16 %v1842
        %v2724 = vunpack.c.l.b16 %v1843
        %v2725 = vunpack.c.l.b16 %v1844
        %v2726 = vunpack.c.l.b16 %v1845
        %v2727 = vpack.c.b16 %v2724, %v2723
        %v2728 = vpack.c.b16 %v2726, %v2725
        %v2732 = vsel %vm2049, %v2718, 0
        %2734 = vmatpush.bf16.msra.mxu0 0
        %2735 = vmatpush.bf16.msra.mxu0 0
        %2736 = vmatpush.bf16.msra.mxu0 0
        %2737 = vmatpush.bf16.msra.mxu0 0
        %2738 = vmatpush.bf16.msra.mxu0 0
        %2739 = vmatpush.bf16.msra.mxu0 0
        %2740 = vmatpush.bf16.msra.mxu0 %v2728
        %2741 = vmatpush.bf16.msra.mxu0 %v2727
        %2742 = vmatmul.bf16.gmra.mxu0 %v2732
        %v2743 = vpop.f32.mrf.mxu0
        %v2744 = vadd.f32 0.0, %v2743
        %v2745 = vpop.f32.mrf.mxu0
        %v2746 = vadd.f32 0.0, %v2745
        %2747 = vdwg.mxu0
        %v2748 = vadd.f32 %v2574, %v2744
        %v2749 = vadd.f32 %v2575, %v2746
        %v2751 = vperm.slane %v1846, 0
        %v2753 = vadd.f32 %v2748, %v2751
        %v2754 = vadd.f32 %v2749, %v2751
        %v2755 = vadd.f32 %v1777, %v2753
        %v2756 = vadd.f32 %v1778, %v2754
        %v2757 = vld [vmem:[%s1375] sm:$0x1]
        %v2758 = vld [vmem:[%s1384] sm:$0x1]
        %2759 = vadd.xlane.f32.xlu0 %v2755
        %v2760 = vpop.xlane.xlu0 %2759
        %2761 = vadd.xlane.f32.xlu0 %v2756
        %v2762 = vpop.xlane.xlu0 %2761
        %v2763 = vmul.f32 %v2760, %v1732
        %v2764 = vmul.f32 %v2762, %v1732
        %v2765 = vsub.f32 %v2755, %v2763
        %v2766 = vsub.f32 %v2756, %v2764
        %v2767 = vmul.f32 %v2765, %v2765
        %v2768 = vmul.f32 %v2766, %v2766
        %2769 = vadd.xlane.f32.xlu0 %v2767
        %v2770 = vpop.xlane.xlu0 %2769
        %2771 = vadd.xlane.f32.xlu0 %v2768
        %v2772 = vpop.xlane.xlu0 %2771
        %v2773 = vmul.f32 %v2770, %v1732
        %v2774 = vmul.f32 %v2772, %v1732
        %v2775 = vadd.f32 %v2773, 1e-05
        %v2776 = vadd.f32 %v2774, 1e-05
        %v2777 = vrsqrt.pop %v2775
        %v2778 = vmul.f32 %v2777, %v2775
        %v2779 = vmul.f32 %v2778, %v2777
        %v2780 = vmul.f32 0.5, %v2779
        %v2781 = vsub.f32 1.5, %v2780
        %v2782 = vmul.f32 %v2777, %v2781
        %vm2783 = vweird.f32 %v2775
        %vm2784 = vweird.f32 %v2777
        %vm2785 = vmor %vm2783, %vm2784
        %v2786 = vsel %vm2785, %v2777, %v2782
        %v2787 = vrsqrt.pop %v2776
        %v2788 = vmul.f32 %v2787, %v2776
        %v2789 = vmul.f32 %v2788, %v2787
        %v2790 = vmul.f32 0.5, %v2789
        %v2791 = vsub.f32 1.5, %v2790
        %v2792 = vmul.f32 %v2787, %v2791
        %vm2793 = vweird.f32 %v2776
        %vm2794 = vweird.f32 %v2787
        %vm2795 = vmor %vm2793, %vm2794
        %v2796 = vsel %vm2795, %v2787, %v2792
        %v2797 = vmul.f32 %v2765, %v2786
        %v2798 = vmul.f32 %v2766, %v2796
        %v2800 = vperm.slane %v2757, 0
        %v2802 = vmul.f32 %v2797, %v2800
        %v2803 = vmul.f32 %v2798, %v2800
        %v2805 = vperm.slane %v2758, 0
        %v2807 = vadd.f32 %v2802, %v2805
        %v2808 = vadd.f32 %v2803, %v2805
        %v2809 = vld [vmem:[%s1443] sm:$0xf]
        %v2810 = vld [vmem:[%s1443 + $0x4] sm:$0xf]
        %v2811 = vld [vmem:[%s1443 + $0x8] sm:$0xf]
        %v2812 = vld [vmem:[%s1443 + $0xc] sm:$0xf]
        %v2813 = vld [vmem:[%s1443 + $0x10] sm:$0xf]
        %v2814 = vld [vmem:[%s1443 + $0x14] sm:$0xf]
        %v2815 = vld [vmem:[%s1443 + $0x18] sm:$0xf]
        %v2816 = vld [vmem:[%s1443 + $0x1c] sm:$0xf]
        %v2817 = vld [vmem:[%s1443 + $0x20] sm:$0xf]
        %v2818 = vld [vmem:[%s1443 + $0x24] sm:$0xf]
        %v2819 = vld [vmem:[%s1443 + $0x28] sm:$0xf]
        %v2820 = vld [vmem:[%s1443 + $0x2c] sm:$0xf]
        %v2821 = vld [vmem:[%s1443 + $0x30] sm:$0xf]
        %v2822 = vld [vmem:[%s1443 + $0x34] sm:$0xf]
        %v2823 = vld [vmem:[%s1443 + $0x38] sm:$0xf]
        %v2824 = vld [vmem:[%s1443 + $0x3c] sm:$0xf]
        %v2825 = vld [vmem:[%s1688] sm:$0x1]
        %v2826 = vld [vmem:[%s1453] sm:$0xf]
        %v2827 = vld [vmem:[%s1453 + $0x4] sm:$0xf]
        %v2828 = vld [vmem:[%s1453 + $0x8] sm:$0xf]
        %v2829 = vld [vmem:[%s1453 + $0xc] sm:$0xf]
        %v2830 = vld [vmem:[%s1453 + $0x10] sm:$0xf]
        %v2831 = vld [vmem:[%s1453 + $0x14] sm:$0xf]
        %v2832 = vld [vmem:[%s1453 + $0x18] sm:$0xf]
        %v2833 = vld [vmem:[%s1453 + $0x1c] sm:$0xf]
        %v2834 = vld [vmem:[%s1453 + $0x20] sm:$0xf]
        %v2835 = vld [vmem:[%s1453 + $0x24] sm:$0xf]
        %v2836 = vld [vmem:[%s1453 + $0x28] sm:$0xf]
        %v2837 = vld [vmem:[%s1453 + $0x2c] sm:$0xf]
        %v2838 = vld [vmem:[%s1453 + $0x30] sm:$0xf]
        %v2839 = vld [vmem:[%s1453 + $0x34] sm:$0xf]
        %v2840 = vld [vmem:[%s1453 + $0x38] sm:$0xf]
        %v2841 = vld [vmem:[%s1453 + $0x3c] sm:$0xf]
        %v2842 = vld [vmem:[%s1691] sm:$0x1]
        %v2843 = vld [vmem:[%s1463] sm:$0xf]
        %v2844 = vld [vmem:[%s1463 + $0x4] sm:$0xf]
        %v2845 = vld [vmem:[%s1463 + $0x8] sm:$0xf]
        %v2846 = vld [vmem:[%s1463 + $0xc] sm:$0xf]
        %v2847 = vld [vmem:[%s1463 + $0x10] sm:$0xf]
        %v2848 = vld [vmem:[%s1463 + $0x14] sm:$0xf]
        %v2849 = vld [vmem:[%s1463 + $0x18] sm:$0xf]
        %v2850 = vld [vmem:[%s1463 + $0x1c] sm:$0xf]
        %v2851 = vld [vmem:[%s1463 + $0x20] sm:$0xf]
        %v2852 = vld [vmem:[%s1463 + $0x24] sm:$0xf]
        %v2853 = vld [vmem:[%s1463 + $0x28] sm:$0xf]
        %v2854 = vld [vmem:[%s1463 + $0x2c] sm:$0xf]
        %v2855 = vld [vmem:[%s1463 + $0x30] sm:$0xf]
        %v2856 = vld [vmem:[%s1463 + $0x34] sm:$0xf]
        %v2857 = vld [vmem:[%s1463 + $0x38] sm:$0xf]
        %v2858 = vld [vmem:[%s1463 + $0x3c] sm:$0xf]
        %v2859 = vld [vmem:[%s1694] sm:$0x1]
        %v2860 = vld [vmem:[%s1473] sm:$0xf]
        %v2861 = vld [vmem:[%s1473 + $0x4] sm:$0xf]
        %v2862 = vld [vmem:[%s1473 + $0x8] sm:$0xf]
        %v2863 = vld [vmem:[%s1473 + $0xc] sm:$0xf]
        %v2864 = vld [vmem:[%s1473 + $0x10] sm:$0xf]
        %v2865 = vld [vmem:[%s1473 + $0x14] sm:$0xf]
        %v2866 = vld [vmem:[%s1473 + $0x18] sm:$0xf]
        %v2867 = vld [vmem:[%s1473 + $0x1c] sm:$0xf]
        %v2868 = vld [vmem:[%s1473 + $0x20] sm:$0xf]
        %v2869 = vld [vmem:[%s1473 + $0x24] sm:$0xf]
        %v2870 = vld [vmem:[%s1473 + $0x28] sm:$0xf]
        %v2871 = vld [vmem:[%s1473 + $0x2c] sm:$0xf]
        %v2872 = vld [vmem:[%s1473 + $0x30] sm:$0xf]
        %v2873 = vld [vmem:[%s1473 + $0x34] sm:$0xf]
        %v2874 = vld [vmem:[%s1473 + $0x38] sm:$0xf]
        %v2875 = vld [vmem:[%s1473 + $0x3c] sm:$0xf]
        %v2876 = vld [vmem:[%s1697] sm:$0x1]
        %v2877 = vpack.c.bf16 %v2808, %v2807
        %v2879 = vperm.slane %v2825, 0
        %v2897 = vunpack.c.l.b16 %v2809
        %v2898 = vunpack.c.l.b16 %v2810
        %v2899 = vunpack.c.l.b16 %v2811
        %v2900 = vunpack.c.l.b16 %v2812
        %v2901 = vunpack.c.l.b16 %v2813
        %v2902 = vunpack.c.l.b16 %v2814
        %v2903 = vunpack.c.l.b16 %v2815
        %v2904 = vunpack.c.l.b16 %v2816
        %v2905 = vunpack.c.l.b16 %v2817
        %v2906 = vunpack.c.l.b16 %v2818
        %v2907 = vunpack.c.l.b16 %v2819
        %v2908 = vunpack.c.l.b16 %v2820
        %v2909 = vunpack.c.l.b16 %v2821
        %v2910 = vunpack.c.l.b16 %v2822
        %v2911 = vunpack.c.l.b16 %v2823
        %v2912 = vunpack.c.l.b16 %v2824
        %v2913 = vpack.c.b16 %v2898, %v2897
        %v2914 = vpack.c.b16 %v2900, %v2899
        %v2915 = vpack.c.b16 %v2902, %v2901
        %v2916 = vpack.c.b16 %v2904, %v2903
        %v2917 = vpack.c.b16 %v2906, %v2905
        %v2918 = vpack.c.b16 %v2908, %v2907
        %v2919 = vpack.c.b16 %v2910, %v2909
        %v2920 = vpack.c.b16 %v2912, %v2911
        %2929 = vmatpush.bf16.msra.mxu0 %v2920
        %2930 = vmatpush.bf16.msra.mxu0 %v2919
        %2931 = vmatpush.bf16.msra.mxu0 %v2918
        %2932 = vmatpush.bf16.msra.mxu0 %v2917
        %2933 = vmatpush.bf16.msra.mxu0 %v2916
        %2934 = vmatpush.bf16.msra.mxu0 %v2915
        %2935 = vmatpush.bf16.msra.mxu0 %v2914
        %2936 = vmatpush.bf16.msra.mxu0 %v2913
        %2937 = vmatmul.bf16.gmra.mxu0 %v2877
        %v2938 = vpop.f32.mrf.mxu0
        %v2939 = vadd.f32 %v2879, %v2938
        %v2940 = vpop.f32.mrf.mxu0
        %v2941 = vadd.f32 %v2879, %v2940
        %2942 = vdwg.mxu0
        %v2943 = vpack.c.bf16 %v1717, %v1716
        %v2945 = vperm.slane %v2842, 0
        %v2963 = vunpack.c.l.b16 %v2826
        %v2964 = vunpack.c.l.b16 %v2827
        %v2965 = vunpack.c.l.b16 %v2828
        %v2966 = vunpack.c.l.b16 %v2829
        %v2967 = vunpack.c.l.b16 %v2830
        %v2968 = vunpack.c.l.b16 %v2831
        %v2969 = vunpack.c.l.b16 %v2832
        %v2970 = vunpack.c.l.b16 %v2833
        %v2971 = vunpack.c.l.b16 %v2834
        %v2972 = vunpack.c.l.b16 %v2835
        %v2973 = vunpack.c.l.b16 %v2836
        %v2974 = vunpack.c.l.b16 %v2837
        %v2975 = vunpack.c.l.b16 %v2838
        %v2976 = vunpack.c.l.b16 %v2839
        %v2977 = vunpack.c.l.b16 %v2840
        %v2978 = vunpack.c.l.b16 %v2841
        %v2979 = vpack.c.b16 %v2964, %v2963
        %v2980 = vpack.c.b16 %v2966, %v2965
        %v2981 = vpack.c.b16 %v2968, %v2967
        %v2982 = vpack.c.b16 %v2970, %v2969
        %v2983 = vpack.c.b16 %v2972, %v2971
        %v2984 = vpack.c.b16 %v2974, %v2973
        %v2985 = vpack.c.b16 %v2976, %v2975
        %v2986 = vpack.c.b16 %v2978, %v2977
        %2995 = vmatpush.bf16.msra.mxu0 %v2986
        %2996 = vmatpush.bf16.msra.mxu0 %v2985
        %2997 = vmatpush.bf16.msra.mxu0 %v2984
        %2998 = vmatpush.bf16.msra.mxu0 %v2983
        %2999 = vmatpush.bf16.msra.mxu0 %v2982
        %3000 = vmatpush.bf16.msra.mxu0 %v2981
        %3001 = vmatpush.bf16.msra.mxu0 %v2980
        %3002 = vmatpush.bf16.msra.mxu0 %v2979
        %3003 = vmatmul.bf16.gmra.mxu0 %v2943
        %v3004 = vpop.f32.mrf.mxu0
        %v3005 = vadd.f32 %v2945, %v3004
        %v3006 = vpop.f32.mrf.mxu0
        %v3007 = vadd.f32 %v2945, %v3006
        %3008 = vdwg.mxu0
        %v3010 = vperm.slane %v2859, 0
        %v3028 = vunpack.c.l.b16 %v2843
        %v3029 = vunpack.c.l.b16 %v2844
        %v3030 = vunpack.c.l.b16 %v2845
        %v3031 = vunpack.c.l.b16 %v2846
        %v3032 = vunpack.c.l.b16 %v2847
        %v3033 = vunpack.c.l.b16 %v2848
        %v3034 = vunpack.c.l.b16 %v2849
        %v3035 = vunpack.c.l.b16 %v2850
        %v3036 = vunpack.c.l.b16 %v2851
        %v3037 = vunpack.c.l.b16 %v2852
        %v3038 = vunpack.c.l.b16 %v2853
        %v3039 = vunpack.c.l.b16 %v2854
        %v3040 = vunpack.c.l.b16 %v2855
        %v3041 = vunpack.c.l.b16 %v2856
        %v3042 = vunpack.c.l.b16 %v2857
        %v3043 = vunpack.c.l.b16 %v2858
        %v3044 = vpack.c.b16 %v3029, %v3028
        %v3045 = vpack.c.b16 %v3031, %v3030
        %v3046 = vpack.c.b16 %v3033, %v3032
        %v3047 = vpack.c.b16 %v3035, %v3034
        %v3048 = vpack.c.b16 %v3037, %v3036
        %v3049 = vpack.c.b16 %v3039, %v3038
        %v3050 = vpack.c.b16 %v3041, %v3040
        %v3051 = vpack.c.b16 %v3043, %v3042
        %3060 = vmatpush.bf16.msra.mxu0 %v3051
        %3061 = vmatpush.bf16.msra.mxu0 %v3050
        %3062 = vmatpush.bf16.msra.mxu0 %v3049
        %3063 = vmatpush.bf16.msra.mxu0 %v3048
        %3064 = vmatpush.bf16.msra.mxu0 %v3047
        %3065 = vmatpush.bf16.msra.mxu0 %v3046
        %3066 = vmatpush.bf16.msra.mxu0 %v3045
        %3067 = vmatpush.bf16.msra.mxu0 %v3044
        %3068 = vmatmul.bf16.gmra.mxu0 %v2943
        %v3069 = vpop.f32.mrf.mxu0
        %v3070 = vadd.f32 %v3010, %v3069
        %v3071 = vpop.f32.mrf.mxu0
        %v3072 = vadd.f32 %v3010, %v3071
        %3073 = vdwg.mxu0
        %v3074 = vpack.c.bf16 %v2939, %v2939
        %v3075 = vpack.c.bf16 %v2941, %v2941
        %v3076 = vpack.c.bf16 %v3005, %v3005
        %v3077 = vpack.c.bf16 %v3007, %v3007
        %v3078 = vpack.c.bf16 %v3070, %v3070
        %v3079 = vpack.c.bf16 %v3072, %v3072
        %v3081 = vsel %vm2049, %v3074, 0
        %v3084 = vsel %vm2049, %v3076, 0
        %3086 = vmatpush.bf16.xpose.msra.mxu0 0
        %3087 = vmatpush.bf16.xpose.msra.mxu0 0
        %3088 = vmatpush.bf16.xpose.msra.mxu0 0
        %3089 = vmatpush.bf16.xpose.msra.mxu0 0
        %3090 = vmatpush.bf16.xpose.msra.mxu0 0
        %3091 = vmatpush.bf16.xpose.msra.mxu0 0
        %3092 = vmatpush.bf16.xpose.msra.mxu0 0
        %3093 = vmatpush.bf16.xpose.msra.mxu0 %v3084
        %3094 = vmatmul.bf16.gmra.mxu0 %v3081
        %v3095 = vpop.f32.mrf.mxu0
        %v3096 = vadd.f32 0.0, %v3095
        %v3097 = vpop.f32.mrf.mxu0
        %3098 = vdwg.mxu0
        %v3100 = vsel %vm2049, %v3075, 0
        %v3103 = vsel %vm2049, %v3077, 0
        %3105 = vmatpush.bf16.xpose.msra.mxu0 0
        %3106 = vmatpush.bf16.xpose.msra.mxu0 0
        %3107 = vmatpush.bf16.xpose.msra.mxu0 0
        %3108 = vmatpush.bf16.xpose.msra.mxu0 0
        %3109 = vmatpush.bf16.xpose.msra.mxu0 0
        %3110 = vmatpush.bf16.xpose.msra.mxu0 0
        %3111 = vmatpush.bf16.xpose.msra.mxu0 0
        %3112 = vmatpush.bf16.xpose.msra.mxu0 %v3103
        %3113 = vmatmul.bf16.gmra.mxu0 %v3100
        %v3114 = vpop.f32.mrf.mxu0
        %v3115 = vadd.f32 0.0, %v3114
        %v3116 = vpop.f32.mrf.mxu0
        %3117 = vdwg.mxu0
        %v3118 = vmul.f32 %v3096, 0.17677669
        %v3119 = vmul.f32 %v3115, 0.17677669
        %v3120 = vadd.f32 %v3118, %v1719
        %v3121 = vadd.f32 %v3119, %v1719
        %v3122 = vsel %vm2092, %v3120, -inf
        %3123 = vmax.xlane.f32.xlu0 %v3122
        %v3124 = vpop.xlane.xlu0 %3123
        %v3125 = vsel %vm2092, %v3121, -inf
        %3126 = vmax.xlane.f32.xlu0 %v3125
        %v3127 = vpop.xlane.xlu0 %3126
        %v3128 = vsub.f32 %v3120, %v3124
        %v3129 = vsub.f32 %v3121, %v3127
        %v3130 = vmul.f32 %v3128, 1.442695
        %v3131 = vpow.pop %v3130
        %v3132 = vmul.f32 %v3129, 1.442695
        %v3133 = vpow.pop %v3132
        %v3134 = vsel %vm2092, %v3131, 0.0
        %3135 = vadd.xlane.f32.xlu0 %v3134
        %v3136 = vpop.xlane.xlu0 %3135
        %v3137 = vsel %vm2092, %v3133, 0.0
        %3138 = vadd.xlane.f32.xlu0 %v3137
        %v3139 = vpop.xlane.xlu0 %3138
        %v3140 = vrcp.pop %v3136
        %v3141 = vmul.f32 %v3136, %v3140
        %v3142 = vsub.f32 1.0, %v3141
        %v3143 = vmul.f32 %v3140, %v3142
        %v3144 = vadd.f32 %v3140, %v3143
        %vm3145 = vweird.f32 %v3136
        %vm3146 = vweird.f32 %v3140
        %vm3147 = vmor %vm3145, %vm3146
        %v3148 = vsel %vm3147, %v3140, %v3144
        %v3149 = vand.u32 2147483647, %v3136
        %vm3150 = vcmp.eq.f32.partialorder %v3149, 8.507059e+37
        %v3151 = vand.u32 %v3136, 2147483648
        %v3152 = vor.u32 1.1754944e-38, %v3151
        %v3153 = vsel %vm3150, %v3152, %v3148
        %v3154 = vmul.f32 %v3131, %v3153
        %v3155 = vrcp.pop %v3139
        %v3156 = vmul.f32 %v3139, %v3155
        %v3157 = vsub.f32 1.0, %v3156
        %v3158 = vmul.f32 %v3155, %v3157
        %v3159 = vadd.f32 %v3155, %v3158
        %vm3160 = vweird.f32 %v3139
        %vm3161 = vweird.f32 %v3155
        %vm3162 = vmor %vm3160, %vm3161
        %v3163 = vsel %vm3162, %v3155, %v3159
        %v3164 = vand.u32 2147483647, %v3139
        %vm3165 = vcmp.eq.f32.partialorder %v3164, 8.507059e+37
        %v3166 = vand.u32 %v3139, 2147483648
        %v3167 = vor.u32 1.1754944e-38, %v3166
        %v3168 = vsel %vm3165, %v3167, %v3163
        %v3169 = vmul.f32 %v3133, %v3168
        %v3170 = vpack.c.bf16 %v3154, %v3154
        %v3171 = vpack.c.bf16 %v3169, %v3169
        %v3173 = vsel %vm2092, %v3170, 0
        %v3176 = vsel %vm2146, %v3078, 0
        %3178 = vmatpush.bf16.msra.mxu0 0
        %3179 = vmatpush.bf16.msra.mxu0 0
        %3180 = vmatpush.bf16.msra.mxu0 0
        %3181 = vmatpush.bf16.msra.mxu0 0
        %3182 = vmatpush.bf16.msra.mxu0 0
        %3183 = vmatpush.bf16.msra.mxu0 0
        %3184 = vmatpush.bf16.msra.mxu0 0
        %3185 = vmatpush.bf16.msra.mxu0 %v3176
        %3186 = vmatmul.bf16.gmra.mxu0 %v3173
        %v3187 = vpop.f32.mrf.mxu0
        %v3188 = vadd.f32 0.0, %v3187
        %v3189 = vpop.f32.mrf.mxu0
        %3190 = vdwg.mxu0
        %v3192 = vsel %vm2092, %v3171, 0
        %v3195 = vsel %vm2146, %v3079, 0
        %3197 = vmatpush.bf16.msra.mxu0 0
        %3198 = vmatpush.bf16.msra.mxu0 0
        %3199 = vmatpush.bf16.msra.mxu0 0
        %3200 = vmatpush.bf16.msra.mxu0 0
        %3201 = vmatpush.bf16.msra.mxu0 0
        %3202 = vmatpush.bf16.msra.mxu0 0
        %3203 = vmatpush.bf16.msra.mxu0 0
        %3204 = vmatpush.bf16.msra.mxu0 %v3195
        %3205 = vmatmul.bf16.gmra.mxu0 %v3192
        %v3206 = vpop.f32.mrf.mxu0
        %v3207 = vadd.f32 0.0, %v3206
        %v3208 = vpop.f32.mrf.mxu0
        %3209 = vdwg.mxu0
        %v3210 = vpack.c.bf16 %v3207, %v3188
        %v3212 = vunpack.c.l.b16 %v3074
        %v3213 = vpack.c.b16 %v3212, %v3212
        %3214 = vrot.lane.b32.xlu0 %v3213, 96
        %v3215 = vpop.permute.xlu0 %3214
        %v3217 = vunpack.c.l.b16 %v3076
        %v3218 = vpack.c.b16 %v3217, %v3217
        %3219 = vrot.lane.b32.xlu0 %v3218, 96
        %v3220 = vpop.permute.xlu0 %3219
        %v3222 = vsel %vm2049, %v3215, 0
        %v3225 = vsel %vm2049, %v3220, 0
        %3227 = vmatpush.bf16.xpose.msra.mxu0 0
        %3228 = vmatpush.bf16.xpose.msra.mxu0 0
        %3229 = vmatpush.bf16.xpose.msra.mxu0 0
        %3230 = vmatpush.bf16.xpose.msra.mxu0 0
        %3231 = vmatpush.bf16.xpose.msra.mxu0 0
        %3232 = vmatpush.bf16.xpose.msra.mxu0 0
        %3233 = vmatpush.bf16.xpose.msra.mxu0 0
        %3234 = vmatpush.bf16.xpose.msra.mxu0 %v3225
        %3235 = vmatmul.bf16.gmra.mxu0 %v3222
        %v3236 = vpop.f32.mrf.mxu0
        %v3237 = vadd.f32 0.0, %v3236
        %v3238 = vpop.f32.mrf.mxu0
        %3239 = vdwg.mxu0
        %v3241 = vunpack.c.l.b16 %v3075
        %v3242 = vpack.c.b16 %v3241, %v3241
        %3243 = vrot.lane.b32.xlu0 %v3242, 96
        %v3244 = vpop.permute.xlu0 %3243
        %v3246 = vunpack.c.l.b16 %v3077
        %v3247 = vpack.c.b16 %v3246, %v3246
        %3248 = vrot.lane.b32.xlu0 %v3247, 96
        %v3249 = vpop.permute.xlu0 %3248
        %v3251 = vsel %vm2049, %v3244, 0
        %v3254 = vsel %vm2049, %v3249, 0
        %3256 = vmatpush.bf16.xpose.msra.mxu0 0
        %3257 = vmatpush.bf16.xpose.msra.mxu0 0
        %3258 = vmatpush.bf16.xpose.msra.mxu0 0
        %3259 = vmatpush.bf16.xpose.msra.mxu0 0
        %3260 = vmatpush.bf16.xpose.msra.mxu0 0
        %3261 = vmatpush.bf16.xpose.msra.mxu0 0
        %3262 = vmatpush.bf16.xpose.msra.mxu0 0
        %3263 = vmatpush.bf16.xpose.msra.mxu0 %v3254
        %3264 = vmatmul.bf16.gmra.mxu0 %v3251
        %v3265 = vpop.f32.mrf.mxu0
        %v3266 = vadd.f32 0.0, %v3265
        %v3267 = vpop.f32.mrf.mxu0
        %3268 = vdwg.mxu0
        %v3269 = vmul.f32 %v3237, 0.17677669
        %v3270 = vmul.f32 %v3266, 0.17677669
        %v3271 = vadd.f32 %v3269, %v1719
        %v3272 = vadd.f32 %v3270, %v1719
        %v3273 = vsel %vm2092, %v3271, -inf
        %3274 = vmax.xlane.f32.xlu0 %v3273
        %v3275 = vpop.xlane.xlu0 %3274
        %v3276 = vsel %vm2092, %v3272, -inf
        %3277 = vmax.xlane.f32.xlu0 %v3276
        %v3278 = vpop.xlane.xlu0 %3277
        %v3279 = vsub.f32 %v3271, %v3275
        %v3280 = vsub.f32 %v3272, %v3278
        %v3281 = vmul.f32 %v3279, 1.442695
        %v3282 = vpow.pop %v3281
        %v3283 = vmul.f32 %v3280, 1.442695
        %v3284 = vpow.pop %v3283
        %v3285 = vsel %vm2092, %v3282, 0.0
        %3286 = vadd.xlane.f32.xlu0 %v3285
        %v3287 = vpop.xlane.xlu0 %3286
        %v3288 = vsel %vm2092, %v3284, 0.0
        %3289 = vadd.xlane.f32.xlu0 %v3288
        %v3290 = vpop.xlane.xlu0 %3289
        %v3291 = vrcp.pop %v3287
        %v3292 = vmul.f32 %v3287, %v3291
        %v3293 = vsub.f32 1.0, %v3292
        %v3294 = vmul.f32 %v3291, %v3293
        %v3295 = vadd.f32 %v3291, %v3294
        %vm3296 = vweird.f32 %v3287
        %vm3297 = vweird.f32 %v3291
        %vm3298 = vmor %vm3296, %vm3297
        %v3299 = vsel %vm3298, %v3291, %v3295
        %v3300 = vand.u32 2147483647, %v3287
        %vm3301 = vcmp.eq.f32.partialorder %v3300, 8.507059e+37
        %v3302 = vand.u32 %v3287, 2147483648
        %v3303 = vor.u32 1.1754944e-38, %v3302
        %v3304 = vsel %vm3301, %v3303, %v3299
        %v3305 = vmul.f32 %v3282, %v3304
        %v3306 = vrcp.pop %v3290
        %v3307 = vmul.f32 %v3290, %v3306
        %v3308 = vsub.f32 1.0, %v3307
        %v3309 = vmul.f32 %v3306, %v3308
        %v3310 = vadd.f32 %v3306, %v3309
        %vm3311 = vweird.f32 %v3290
        %vm3312 = vweird.f32 %v3306
        %vm3313 = vmor %vm3311, %vm3312
        %v3314 = vsel %vm3313, %v3306, %v3310
        %v3315 = vand.u32 2147483647, %v3290
        %vm3316 = vcmp.eq.f32.partialorder %v3315, 8.507059e+37
        %v3317 = vand.u32 %v3290, 2147483648
        %v3318 = vor.u32 1.1754944e-38, %v3317
        %v3319 = vsel %vm3316, %v3318, %v3314
        %v3320 = vmul.f32 %v3284, %v3319
        %v3321 = vpack.c.bf16 %v3305, %v3305
        %v3322 = vpack.c.bf16 %v3320, %v3320
        %v3324 = vunpack.c.l.b16 %v3078
        %v3325 = vpack.c.b16 %v3324, %v3324
        %3326 = vrot.lane.b32.xlu0 %v3325, 96
        %v3327 = vpop.permute.xlu0 %3326
        %v3329 = vsel %vm2092, %v3321, 0
        %v3332 = vsel %vm2146, %v3327, 0
        %3334 = vmatpush.bf16.msra.mxu0 0
        %3335 = vmatpush.bf16.msra.mxu0 0
        %3336 = vmatpush.bf16.msra.mxu0 0
        %3337 = vmatpush.bf16.msra.mxu0 0
        %3338 = vmatpush.bf16.msra.mxu0 0
        %3339 = vmatpush.bf16.msra.mxu0 0
        %3340 = vmatpush.bf16.msra.mxu0 0
        %3341 = vmatpush.bf16.msra.mxu0 %v3332
        %3342 = vmatmul.bf16.gmra.mxu0 %v3329
        %v3343 = vpop.f32.mrf.mxu0
        %v3344 = vadd.f32 0.0, %v3343
        %v3345 = vpop.f32.mrf.mxu0
        %3346 = vdwg.mxu0
        %v3348 = vunpack.c.l.b16 %v3079
        %v3349 = vpack.c.b16 %v3348, %v3348
        %3350 = vrot.lane.b32.xlu0 %v3349, 96
        %v3351 = vpop.permute.xlu0 %3350
        %v3353 = vsel %vm2092, %v3322, 0
        %v3356 = vsel %vm2146, %v3351, 0
        %3358 = vmatpush.bf16.msra.mxu0 0
        %3359 = vmatpush.bf16.msra.mxu0 0
        %3360 = vmatpush.bf16.msra.mxu0 0
        %3361 = vmatpush.bf16.msra.mxu0 0
        %3362 = vmatpush.bf16.msra.mxu0 0
        %3363 = vmatpush.bf16.msra.mxu0 0
        %3364 = vmatpush.bf16.msra.mxu0 0
        %3365 = vmatpush.bf16.msra.mxu0 %v3356
        %3366 = vmatmul.bf16.gmra.mxu0 %v3353
        %v3367 = vpop.f32.mrf.mxu0
        %v3368 = vadd.f32 0.0, %v3367
        %v3369 = vpop.f32.mrf.mxu0
        %3370 = vdwg.mxu0
        %v3371 = vpack.c.bf16 %v3368, %v3344
        %v3376 = vunpack.c.l.b16 %v2864
        %v3377 = vunpack.c.l.b16 %v2865
        %v3378 = vunpack.c.l.b16 %v2866
        %v3379 = vunpack.c.l.b16 %v2867
        %v3380 = vpack.c.b16 %v3377, %v3376
        %v3381 = vpack.c.b16 %v3379, %v3378
        %v3385 = vsel %vm2049, %v3371, 0
        %3387 = vmatpush.bf16.msra.mxu0 0
        %3388 = vmatpush.bf16.msra.mxu0 0
        %3389 = vmatpush.bf16.msra.mxu0 0
        %3390 = vmatpush.bf16.msra.mxu0 0
        %3391 = vmatpush.bf16.msra.mxu0 0
        %3392 = vmatpush.bf16.msra.mxu0 0
        %3393 = vmatpush.bf16.msra.mxu0 %v3381
        %3394 = vmatpush.bf16.msra.mxu0 %v3380
        %3395 = vmatmul.bf16.gmra.mxu0 %v3385
        %v3396 = vpop.f32.mrf.mxu0
        %v3397 = vadd.f32 0.0, %v3396
        %v3398 = vpop.f32.mrf.mxu0
        %v3399 = vadd.f32 0.0, %v3398
        %3400 = vdwg.mxu0
        %v3405 = vunpack.c.l.b16 %v2860
        %v3406 = vunpack.c.l.b16 %v2861
        %v3407 = vunpack.c.l.b16 %v2862
        %v3408 = vunpack.c.l.b16 %v2863
        %v3409 = vpack.c.b16 %v3406, %v3405
        %v3410 = vpack.c.b16 %v3408, %v3407
        %v3414 = vsel %vm2049, %v3210, 0
        %3416 = vmatpush.bf16.msra.mxu0 0
        %3417 = vmatpush.bf16.msra.mxu0 0
        %3418 = vmatpush.bf16.msra.mxu0 0
        %3419 = vmatpush.bf16.msra.mxu0 0
        %3420 = vmatpush.bf16.msra.mxu0 0
        %3421 = vmatpush.bf16.msra.mxu0 0
        %3422 = vmatpush.bf16.msra.mxu0 %v3410
        %3423 = vmatpush.bf16.msra.mxu0 %v3409
        %3424 = vmatmul.bf16.gmra.mxu0 %v3414
        %v3425 = vpop.f32.mrf.mxu0
        %v3426 = vadd.f32 %v3397, %v3425
        %v3427 = vpop.f32.mrf.mxu0
        %v3428 = vadd.f32 %v3399, %v3427
        %3429 = vdwg.mxu0
        %3430 = vrot.lane.b32.xlu0 %v3213, 64
        %v3431 = vpop.permute.xlu0 %3430
        %3432 = vrot.lane.b32.xlu0 %v3218, 64
        %v3433 = vpop.permute.xlu0 %3432
        %v3435 = vsel %vm2049, %v3431, 0
        %v3438 = vsel %vm2049, %v3433, 0
        %3440 = vmatpush.bf16.xpose.msra.mxu0 0
        %3441 = vmatpush.bf16.xpose.msra.mxu0 0
        %3442 = vmatpush.bf16.xpose.msra.mxu0 0
        %3443 = vmatpush.bf16.xpose.msra.mxu0 0
        %3444 = vmatpush.bf16.xpose.msra.mxu0 0
        %3445 = vmatpush.bf16.xpose.msra.mxu0 0
        %3446 = vmatpush.bf16.xpose.msra.mxu0 0
        %3447 = vmatpush.bf16.xpose.msra.mxu0 %v3438
        %3448 = vmatmul.bf16.gmra.mxu0 %v3435
        %v3449 = vpop.f32.mrf.mxu0
        %v3450 = vadd.f32 0.0, %v3449
        %v3451 = vpop.f32.mrf.mxu0
        %3452 = vdwg.mxu0
        %3453 = vrot.lane.b32.xlu0 %v3242, 64
        %v3454 = vpop.permute.xlu0 %3453
        %3455 = vrot.lane.b32.xlu0 %v3247, 64
        %v3456 = vpop.permute.xlu0 %3455
        %v3458 = vsel %vm2049, %v3454, 0
        %v3461 = vsel %vm2049, %v3456, 0
        %3463 = vmatpush.bf16.xpose.msra.mxu0 0
        %3464 = vmatpush.bf16.xpose.msra.mxu0 0
        %3465 = vmatpush.bf16.xpose.msra.mxu0 0
        %3466 = vmatpush.bf16.xpose.msra.mxu0 0
        %3467 = vmatpush.bf16.xpose.msra.mxu0 0
        %3468 = vmatpush.bf16.xpose.msra.mxu0 0
        %3469 = vmatpush.bf16.xpose.msra.mxu0 0
        %3470 = vmatpush.bf16.xpose.msra.mxu0 %v3461
        %3471 = vmatmul.bf16.gmra.mxu0 %v3458
        %v3472 = vpop.f32.mrf.mxu0
        %v3473 = vadd.f32 0.0, %v3472
        %v3474 = vpop.f32.mrf.mxu0
        %3475 = vdwg.mxu0
        %v3476 = vmul.f32 %v3450, 0.17677669
        %v3477 = vmul.f32 %v3473, 0.17677669
        %v3478 = vadd.f32 %v3476, %v1719
        %v3479 = vadd.f32 %v3477, %v1719
        %v3480 = vsel %vm2092, %v3478, -inf
        %3481 = vmax.xlane.f32.xlu0 %v3480
        %v3482 = vpop.xlane.xlu0 %3481
        %v3483 = vsel %vm2092, %v3479, -inf
        %3484 = vmax.xlane.f32.xlu0 %v3483
        %v3485 = vpop.xlane.xlu0 %3484
        %v3486 = vsub.f32 %v3478, %v3482
        %v3487 = vsub.f32 %v3479, %v3485
        %v3488 = vmul.f32 %v3486, 1.442695
        %v3489 = vpow.pop %v3488
        %v3490 = vmul.f32 %v3487, 1.442695
        %v3491 = vpow.pop %v3490
        %v3492 = vsel %vm2092, %v3489, 0.0
        %3493 = vadd.xlane.f32.xlu0 %v3492
        %v3494 = vpop.xlane.xlu0 %3493
        %v3495 = vsel %vm2092, %v3491, 0.0
        %3496 = vadd.xlane.f32.xlu0 %v3495
        %v3497 = vpop.xlane.xlu0 %3496
        %v3498 = vrcp.pop %v3494
        %v3499 = vmul.f32 %v3494, %v3498
        %v3500 = vsub.f32 1.0, %v3499
        %v3501 = vmul.f32 %v3498, %v3500
        %v3502 = vadd.f32 %v3498, %v3501
        %vm3503 = vweird.f32 %v3494
        %vm3504 = vweird.f32 %v3498
        %vm3505 = vmor %vm3503, %vm3504
        %v3506 = vsel %vm3505, %v3498, %v3502
        %v3507 = vand.u32 2147483647, %v3494
        %vm3508 = vcmp.eq.f32.partialorder %v3507, 8.507059e+37
        %v3509 = vand.u32 %v3494, 2147483648
        %v3510 = vor.u32 1.1754944e-38, %v3509
        %v3511 = vsel %vm3508, %v3510, %v3506
        %v3512 = vmul.f32 %v3489, %v3511
        %v3513 = vrcp.pop %v3497
        %v3514 = vmul.f32 %v3497, %v3513
        %v3515 = vsub.f32 1.0, %v3514
        %v3516 = vmul.f32 %v3513, %v3515
        %v3517 = vadd.f32 %v3513, %v3516
        %vm3518 = vweird.f32 %v3497
        %vm3519 = vweird.f32 %v3513
        %vm3520 = vmor %vm3518, %vm3519
        %v3521 = vsel %vm3520, %v3513, %v3517
        %v3522 = vand.u32 2147483647, %v3497
        %vm3523 = vcmp.eq.f32.partialorder %v3522, 8.507059e+37
        %v3524 = vand.u32 %v3497, 2147483648
        %v3525 = vor.u32 1.1754944e-38, %v3524
        %v3526 = vsel %vm3523, %v3525, %v3521
        %v3527 = vmul.f32 %v3491, %v3526
        %v3528 = vpack.c.bf16 %v3512, %v3512
        %v3529 = vpack.c.bf16 %v3527, %v3527
        %3530 = vrot.lane.b32.xlu0 %v3325, 64
        %v3531 = vpop.permute.xlu0 %3530
        %v3533 = vsel %vm2092, %v3528, 0
        %v3536 = vsel %vm2146, %v3531, 0
        %3538 = vmatpush.bf16.msra.mxu0 0
        %3539 = vmatpush.bf16.msra.mxu0 0
        %3540 = vmatpush.bf16.msra.mxu0 0
        %3541 = vmatpush.bf16.msra.mxu0 0
        %3542 = vmatpush.bf16.msra.mxu0 0
        %3543 = vmatpush.bf16.msra.mxu0 0
        %3544 = vmatpush.bf16.msra.mxu0 0
        %3545 = vmatpush.bf16.msra.mxu0 %v3536
        %3546 = vmatmul.bf16.gmra.mxu0 %v3533
        %v3547 = vpop.f32.mrf.mxu0
        %v3548 = vadd.f32 0.0, %v3547
        %v3549 = vpop.f32.mrf.mxu0
        %3550 = vdwg.mxu0
        %3551 = vrot.lane.b32.xlu0 %v3349, 64
        %v3552 = vpop.permute.xlu0 %3551
        %v3554 = vsel %vm2092, %v3529, 0
        %v3557 = vsel %vm2146, %v3552, 0
        %3559 = vmatpush.bf16.msra.mxu0 0
        %3560 = vmatpush.bf16.msra.mxu0 0
        %3561 = vmatpush.bf16.msra.mxu0 0
        %3562 = vmatpush.bf16.msra.mxu0 0
        %3563 = vmatpush.bf16.msra.mxu0 0
        %3564 = vmatpush.bf16.msra.mxu0 0
        %3565 = vmatpush.bf16.msra.mxu0 0
        %3566 = vmatpush.bf16.msra.mxu0 %v3557
        %3567 = vmatmul.bf16.gmra.mxu0 %v3554
        %v3568 = vpop.f32.mrf.mxu0
        %v3569 = vadd.f32 0.0, %v3568
        %v3570 = vpop.f32.mrf.mxu0
        %3571 = vdwg.mxu0
        %v3572 = vpack.c.bf16 %v3569, %v3548
        %v3577 = vunpack.c.l.b16 %v2868
        %v3578 = vunpack.c.l.b16 %v2869
        %v3579 = vunpack.c.l.b16 %v2870
        %v3580 = vunpack.c.l.b16 %v2871
        %v3581 = vpack.c.b16 %v3578, %v3577
        %v3582 = vpack.c.b16 %v3580, %v3579
        %v3586 = vsel %vm2049, %v3572, 0
        %3588 = vmatpush.bf16.msra.mxu0 0
        %3589 = vmatpush.bf16.msra.mxu0 0
        %3590 = vmatpush.bf16.msra.mxu0 0
        %3591 = vmatpush.bf16.msra.mxu0 0
        %3592 = vmatpush.bf16.msra.mxu0 0
        %3593 = vmatpush.bf16.msra.mxu0 0
        %3594 = vmatpush.bf16.msra.mxu0 %v3582
        %3595 = vmatpush.bf16.msra.mxu0 %v3581
        %3596 = vmatmul.bf16.gmra.mxu0 %v3586
        %v3597 = vpop.f32.mrf.mxu0
        %v3598 = vadd.f32 0.0, %v3597
        %v3599 = vpop.f32.mrf.mxu0
        %v3600 = vadd.f32 0.0, %v3599
        %3601 = vdwg.mxu0
        %v3602 = vadd.f32 %v3426, %v3598
        %v3603 = vadd.f32 %v3428, %v3600
        %3604 = vrot.lane.b32.xlu0 %v3213, 32
        %v3605 = vpop.permute.xlu0 %3604
        %3606 = vrot.lane.b32.xlu0 %v3218, 32
        %v3607 = vpop.permute.xlu0 %3606
        %v3609 = vsel %vm2049, %v3605, 0
        %v3612 = vsel %vm2049, %v3607, 0
        %3614 = vmatpush.bf16.xpose.msra.mxu0 0
        %3615 = vmatpush.bf16.xpose.msra.mxu0 0
        %3616 = vmatpush.bf16.xpose.msra.mxu0 0
        %3617 = vmatpush.bf16.xpose.msra.mxu0 0
        %3618 = vmatpush.bf16.xpose.msra.mxu0 0
        %3619 = vmatpush.bf16.xpose.msra.mxu0 0
        %3620 = vmatpush.bf16.xpose.msra.mxu0 0
        %3621 = vmatpush.bf16.xpose.msra.mxu0 %v3612
        %3622 = vmatmul.bf16.gmra.mxu0 %v3609
        %v3623 = vpop.f32.mrf.mxu0
        %v3624 = vadd.f32 0.0, %v3623
        %v3625 = vpop.f32.mrf.mxu0
        %3626 = vdwg.mxu0
        %3627 = vrot.lane.b32.xlu0 %v3242, 32
        %v3628 = vpop.permute.xlu0 %3627
        %3629 = vrot.lane.b32.xlu0 %v3247, 32
        %v3630 = vpop.permute.xlu0 %3629
        %v3632 = vsel %vm2049, %v3628, 0
        %v3635 = vsel %vm2049, %v3630, 0
        %3637 = vmatpush.bf16.xpose.msra.mxu0 0
        %3638 = vmatpush.bf16.xpose.msra.mxu0 0
        %3639 = vmatpush.bf16.xpose.msra.mxu0 0
        %3640 = vmatpush.bf16.xpose.msra.mxu0 0
        %3641 = vmatpush.bf16.xpose.msra.mxu0 0
        %3642 = vmatpush.bf16.xpose.msra.mxu0 0
        %3643 = vmatpush.bf16.xpose.msra.mxu0 0
        %3644 = vmatpush.bf16.xpose.msra.mxu0 %v3635
        %3645 = vmatmul.bf16.gmra.mxu0 %v3632
        %v3646 = vpop.f32.mrf.mxu0
        %v3647 = vadd.f32 0.0, %v3646
        %v3648 = vpop.f32.mrf.mxu0
        %3649 = vdwg.mxu0
        %v3650 = vmul.f32 %v3624, 0.17677669
        %v3651 = vmul.f32 %v3647, 0.17677669
        %v3652 = vadd.f32 %v3650, %v1719
        %v3653 = vadd.f32 %v3651, %v1719
        %v3654 = vsel %vm2092, %v3652, -inf
        %3655 = vmax.xlane.f32.xlu0 %v3654
        %v3656 = vpop.xlane.xlu0 %3655
        %v3657 = vsel %vm2092, %v3653, -inf
        %3658 = vmax.xlane.f32.xlu0 %v3657
        %v3659 = vpop.xlane.xlu0 %3658
        %v3660 = vsub.f32 %v3652, %v3656
        %v3661 = vsub.f32 %v3653, %v3659
        %v3662 = vmul.f32 %v3660, 1.442695
        %v3663 = vpow.pop %v3662
        %v3664 = vmul.f32 %v3661, 1.442695
        %v3665 = vpow.pop %v3664
        %v3666 = vsel %vm2092, %v3663, 0.0
        %3667 = vadd.xlane.f32.xlu0 %v3666
        %v3668 = vpop.xlane.xlu0 %3667
        %v3669 = vsel %vm2092, %v3665, 0.0
        %3670 = vadd.xlane.f32.xlu0 %v3669
        %v3671 = vpop.xlane.xlu0 %3670
        %v3672 = vrcp.pop %v3668
        %v3673 = vmul.f32 %v3668, %v3672
        %v3674 = vsub.f32 1.0, %v3673
        %v3675 = vmul.f32 %v3672, %v3674
        %v3676 = vadd.f32 %v3672, %v3675
        %vm3677 = vweird.f32 %v3668
        %vm3678 = vweird.f32 %v3672
        %vm3679 = vmor %vm3677, %vm3678
        %v3680 = vsel %vm3679, %v3672, %v3676
        %v3681 = vand.u32 2147483647, %v3668
        %vm3682 = vcmp.eq.f32.partialorder %v3681, 8.507059e+37
        %v3683 = vand.u32 %v3668, 2147483648
        %v3684 = vor.u32 1.1754944e-38, %v3683
        %v3685 = vsel %vm3682, %v3684, %v3680
        %v3686 = vmul.f32 %v3663, %v3685
        %v3687 = vrcp.pop %v3671
        %v3688 = vmul.f32 %v3671, %v3687
        %v3689 = vsub.f32 1.0, %v3688
        %v3690 = vmul.f32 %v3687, %v3689
        %v3691 = vadd.f32 %v3687, %v3690
        %vm3692 = vweird.f32 %v3671
        %vm3693 = vweird.f32 %v3687
        %vm3694 = vmor %vm3692, %vm3693
        %v3695 = vsel %vm3694, %v3687, %v3691
        %v3696 = vand.u32 2147483647, %v3671
        %vm3697 = vcmp.eq.f32.partialorder %v3696, 8.507059e+37
        %v3698 = vand.u32 %v3671, 2147483648
        %v3699 = vor.u32 1.1754944e-38, %v3698
        %v3700 = vsel %vm3697, %v3699, %v3695
        %v3701 = vmul.f32 %v3665, %v3700
        %v3702 = vpack.c.bf16 %v3686, %v3686
        %v3703 = vpack.c.bf16 %v3701, %v3701
        %3704 = vrot.lane.b32.xlu0 %v3325, 32
        %v3705 = vpop.permute.xlu0 %3704
        %v3707 = vsel %vm2092, %v3702, 0
        %v3710 = vsel %vm2146, %v3705, 0
        %3712 = vmatpush.bf16.msra.mxu0 0
        %3713 = vmatpush.bf16.msra.mxu0 0
        %3714 = vmatpush.bf16.msra.mxu0 0
        %3715 = vmatpush.bf16.msra.mxu0 0
        %3716 = vmatpush.bf16.msra.mxu0 0
        %3717 = vmatpush.bf16.msra.mxu0 0
        %3718 = vmatpush.bf16.msra.mxu0 0
        %3719 = vmatpush.bf16.msra.mxu0 %v3710
        %3720 = vmatmul.bf16.gmra.mxu0 %v3707
        %v3721 = vpop.f32.mrf.mxu0
        %v3722 = vadd.f32 0.0, %v3721
        %v3723 = vpop.f32.mrf.mxu0
        %3724 = vdwg.mxu0
        %3725 = vrot.lane.b32.xlu0 %v3349, 32
        %v3726 = vpop.permute.xlu0 %3725
        %v3728 = vsel %vm2092, %v3703, 0
        %v3731 = vsel %vm2146, %v3726, 0
        %3733 = vmatpush.bf16.msra.mxu0 0
        %3734 = vmatpush.bf16.msra.mxu0 0
        %3735 = vmatpush.bf16.msra.mxu0 0
        %3736 = vmatpush.bf16.msra.mxu0 0
        %3737 = vmatpush.bf16.msra.mxu0 0
        %3738 = vmatpush.bf16.msra.mxu0 0
        %3739 = vmatpush.bf16.msra.mxu0 0
        %3740 = vmatpush.bf16.msra.mxu0 %v3731
        %3741 = vmatmul.bf16.gmra.mxu0 %v3728
        %v3742 = vpop.f32.mrf.mxu0
        %v3743 = vadd.f32 0.0, %v3742
        %v3744 = vpop.f32.mrf.mxu0
        %3745 = vdwg.mxu0
        %v3746 = vpack.c.bf16 %v3743, %v3722
        %v3751 = vunpack.c.l.b16 %v2872
        %v3752 = vunpack.c.l.b16 %v2873
        %v3753 = vunpack.c.l.b16 %v2874
        %v3754 = vunpack.c.l.b16 %v2875
        %v3755 = vpack.c.b16 %v3752, %v3751
        %v3756 = vpack.c.b16 %v3754, %v3753
        %v3760 = vsel %vm2049, %v3746, 0
        %3762 = vmatpush.bf16.msra.mxu0 0
        %3763 = vmatpush.bf16.msra.mxu0 0
        %3764 = vmatpush.bf16.msra.mxu0 0
        %3765 = vmatpush.bf16.msra.mxu0 0
        %3766 = vmatpush.bf16.msra.mxu0 0
        %3767 = vmatpush.bf16.msra.mxu0 0
        %3768 = vmatpush.bf16.msra.mxu0 %v3756
        %3769 = vmatpush.bf16.msra.mxu0 %v3755
        %3770 = vmatmul.bf16.gmra.mxu0 %v3760
        %v3771 = vpop.f32.mrf.mxu0
        %v3772 = vadd.f32 0.0, %v3771
        %v3773 = vpop.f32.mrf.mxu0
        %v3774 = vadd.f32 0.0, %v3773
        %3775 = vdwg.mxu0
        %v3776 = vadd.f32 %v3602, %v3772
        %v3777 = vadd.f32 %v3603, %v3774
        %v3779 = vperm.slane %v2876, 0
        %v3781 = vadd.f32 %v3776, %v3779
        %v3782 = vadd.f32 %v3777, %v3779
        %v3783 = vadd.f32 %v2807, %v3781
        %v3784 = vadd.f32 %v2808, %v3782
        %v3785 = vld [vmem:[%s1393] sm:$0x1]
        %v3786 = vld [vmem:[%s1673] sm:$0x1]
        %3787 = vadd.xlane.f32.xlu0 %v3783
        %v3788 = vpop.xlane.xlu0 %3787
        %3789 = vadd.xlane.f32.xlu0 %v3784
        %v3790 = vpop.xlane.xlu0 %3789
        %v3791 = vmul.f32 %v3788, %v1732
        %v3792 = vmul.f32 %v3790, %v1732
        %v3793 = vsub.f32 %v3783, %v3791
        %v3794 = vsub.f32 %v3784, %v3792
        %v3795 = vmul.f32 %v3793, %v3793
        %v3796 = vmul.f32 %v3794, %v3794
        %3797 = vadd.xlane.f32.xlu0 %v3795
        %v3798 = vpop.xlane.xlu0 %3797
        %3799 = vadd.xlane.f32.xlu0 %v3796
        %v3800 = vpop.xlane.xlu0 %3799
        %v3801 = vmul.f32 %v3798, %v1732
        %v3802 = vmul.f32 %v3800, %v1732
        %v3803 = vadd.f32 %v3801, 1e-05
        %v3804 = vadd.f32 %v3802, 1e-05
        %v3805 = vrsqrt.pop %v3803
        %v3806 = vmul.f32 %v3805, %v3803
        %v3807 = vmul.f32 %v3806, %v3805
        %v3808 = vmul.f32 0.5, %v3807
        %v3809 = vsub.f32 1.5, %v3808
        %v3810 = vmul.f32 %v3805, %v3809
        %vm3811 = vweird.f32 %v3803
        %vm3812 = vweird.f32 %v3805
        %vm3813 = vmor %vm3811, %vm3812
        %v3814 = vsel %vm3813, %v3805, %v3810
        %v3815 = vrsqrt.pop %v3804
        %v3816 = vmul.f32 %v3815, %v3804
        %v3817 = vmul.f32 %v3816, %v3815
        %v3818 = vmul.f32 0.5, %v3817
        %v3819 = vsub.f32 1.5, %v3818
        %v3820 = vmul.f32 %v3815, %v3819
        %vm3821 = vweird.f32 %v3804
        %vm3822 = vweird.f32 %v3815
        %vm3823 = vmor %vm3821, %vm3822
        %v3824 = vsel %vm3823, %v3815, %v3820
        %v3825 = vmul.f32 %v3793, %v3814
        %v3826 = vmul.f32 %v3794, %v3824
        %v3828 = vperm.slane %v3785, 0
        %v3830 = vmul.f32 %v3825, %v3828
        %v3831 = vmul.f32 %v3826, %v3828
        %v3833 = vperm.slane %v3786, 0
        %v3835 = vadd.f32 %v3830, %v3833
        %v3836 = vadd.f32 %v3831, %v3833
        %v3837 = vld [vmem:[%s1483] sm:$0xff]
        %v3838 = vld [vmem:[%s1483 + $0x8] sm:$0xff]
        %v3839 = vld [vmem:[%s1483 + $0x10] sm:$0xff]
        %v3840 = vld [vmem:[%s1483 + $0x18] sm:$0xff]
        %v3841 = vld [vmem:[%s1483 + $0x20] sm:$0xff]
        %v3842 = vld [vmem:[%s1483 + $0x28] sm:$0xff]
        %v3843 = vld [vmem:[%s1483 + $0x30] sm:$0xff]
        %v3844 = vld [vmem:[%s1483 + $0x38] sm:$0xff]
        %v3845 = vld [vmem:[%s1483 + $0x40] sm:$0xff]
        %v3846 = vld [vmem:[%s1483 + $0x48] sm:$0xff]
        %v3847 = vld [vmem:[%s1483 + $0x50] sm:$0xff]
        %v3848 = vld [vmem:[%s1483 + $0x58] sm:$0xff]
        %v3849 = vld [vmem:[%s1483 + $0x60] sm:$0xff]
        %v3850 = vld [vmem:[%s1483 + $0x68] sm:$0xff]
        %v3851 = vld [vmem:[%s1483 + $0x70] sm:$0xff]
        %v3852 = vld [vmem:[%s1483 + $0x78] sm:$0xff]
        %v3853 = vpack.c.bf16 %v3836, %v3835
        %v3854 = vld [vmem:[%s1701] sm:$0x3]
        %v3856 = vperm.slane %v3854, 0
        %v3857 = vperm.slane %v3854, 1
        %v3876 = vunpack.c.l.b16 %v3837
        %v3877 = vunpack.c.h.b16 %v3837
        %v3878 = vunpack.c.l.b16 %v3838
        %v3879 = vunpack.c.h.b16 %v3838
        %v3880 = vunpack.c.l.b16 %v3839
        %v3881 = vunpack.c.h.b16 %v3839
        %v3882 = vunpack.c.l.b16 %v3840
        %v3883 = vunpack.c.h.b16 %v3840
        %v3884 = vunpack.c.l.b16 %v3841
        %v3885 = vunpack.c.h.b16 %v3841
        %v3886 = vunpack.c.l.b16 %v3842
        %v3887 = vunpack.c.h.b16 %v3842
        %v3888 = vunpack.c.l.b16 %v3843
        %v3889 = vunpack.c.h.b16 %v3843
        %v3890 = vunpack.c.l.b16 %v3844
        %v3891 = vunpack.c.h.b16 %v3844
        %v3892 = vunpack.c.l.b16 %v3845
        %v3893 = vunpack.c.h.b16 %v3845
        %v3894 = vunpack.c.l.b16 %v3846
        %v3895 = vunpack.c.h.b16 %v3846
        %v3896 = vunpack.c.l.b16 %v3847
        %v3897 = vunpack.c.h.b16 %v3847
        %v3898 = vunpack.c.l.b16 %v3848
        %v3899 = vunpack.c.h.b16 %v3848
        %v3900 = vunpack.c.l.b16 %v3849
        %v3901 = vunpack.c.h.b16 %v3849
        %v3902 = vunpack.c.l.b16 %v3850
        %v3903 = vunpack.c.h.b16 %v3850
        %v3904 = vunpack.c.l.b16 %v3851
        %v3905 = vunpack.c.h.b16 %v3851
        %v3906 = vunpack.c.l.b16 %v3852
        %v3907 = vunpack.c.h.b16 %v3852
        %v3908 = vpack.c.b16 %v3878, %v3876
        %v3909 = vpack.c.b16 %v3879, %v3877
        %v3910 = vpack.c.b16 %v3882, %v3880
        %v3911 = vpack.c.b16 %v3883, %v3881
        %v3912 = vpack.c.b16 %v3886, %v3884
        %v3913 = vpack.c.b16 %v3887, %v3885
        %v3914 = vpack.c.b16 %v3890, %v3888
        %v3915 = vpack.c.b16 %v3891, %v3889
        %v3916 = vpack.c.b16 %v3894, %v3892
        %v3917 = vpack.c.b16 %v3895, %v3893
        %v3918 = vpack.c.b16 %v3898, %v3896
        %v3919 = vpack.c.b16 %v3899, %v3897
        %v3920 = vpack.c.b16 %v3902, %v3900
        %v3921 = vpack.c.b16 %v3903, %v3901
        %v3922 = vpack.c.b16 %v3906, %v3904
        %v3923 = vpack.c.b16 %v3907, %v3905
        %3940 = vmatpush.bf16.msra.mxu0 %v3922
        %3941 = vmatpush.bf16.msra.mxu0 %v3920
        %3942 = vmatpush.bf16.msra.mxu0 %v3918
        %3943 = vmatpush.bf16.msra.mxu0 %v3916
        %3944 = vmatpush.bf16.msra.mxu0 %v3914
        %3945 = vmatpush.bf16.msra.mxu0 %v3912
        %3946 = vmatpush.bf16.msra.mxu0 %v3910
        %3947 = vmatpush.bf16.msra.mxu0 %v3908
        %3948 = vmatmul.bf16.gmra.mxu0 %v3853
        %v3949 = vpop.f32.mrf.mxu0
        %v3950 = vadd.f32 %v3856, %v3949
        %v3951 = vpop.f32.mrf.mxu0
        %v3952 = vadd.f32 %v3856, %v3951
        %3953 = vdwg.mxu0
        %3954 = vmatpush.bf16.msra.mxu0 %v3923
        %3955 = vmatpush.bf16.msra.mxu0 %v3921
        %3956 = vmatpush.bf16.msra.mxu0 %v3919
        %3957 = vmatpush.bf16.msra.mxu0 %v3917
        %3958 = vmatpush.bf16.msra.mxu0 %v3915
        %3959 = vmatpush.bf16.msra.mxu0 %v3913
        %3960 = vmatpush.bf16.msra.mxu0 %v3911
        %3961 = vmatpush.bf16.msra.mxu0 %v3909
        %3962 = vmatmul.bf16.gmra.mxu0 %v3853
        %v3963 = vpop.f32.mrf.mxu0
        %v3964 = vadd.f32 %v3857, %v3963
        %v3965 = vpop.f32.mrf.mxu0
        %v3966 = vadd.f32 %v3857, %v3965
        %3967 = vdwg.mxu0
        %v3968 = vmax.f32 %v3950, 0.0
        %v3969 = vmax.f32 %v3964, 0.0
        %v3970 = vmax.f32 %v3952, 0.0
        %v3971 = vmax.f32 %v3966, 0.0
        %v3972 = vld [vmem:[%s1493] sm:$0xf]
        %v3973 = vld [vmem:[%s1493 + $0x4] sm:$0xf]
        %v3974 = vld [vmem:[%s1493 + $0x8] sm:$0xf]
        %v3975 = vld [vmem:[%s1493 + $0xc] sm:$0xf]
        %v3976 = vld [vmem:[%s1493 + $0x10] sm:$0xf]
        %v3977 = vld [vmem:[%s1493 + $0x14] sm:$0xf]
        %v3978 = vld [vmem:[%s1493 + $0x18] sm:$0xf]
        %v3979 = vld [vmem:[%s1493 + $0x1c] sm:$0xf]
        %v3980 = vld [vmem:[%s1493 + $0x20] sm:$0xf]
        %v3981 = vld [vmem:[%s1493 + $0x24] sm:$0xf]
        %v3982 = vld [vmem:[%s1493 + $0x28] sm:$0xf]
        %v3983 = vld [vmem:[%s1493 + $0x2c] sm:$0xf]
        %v3984 = vld [vmem:[%s1493 + $0x30] sm:$0xf]
        %v3985 = vld [vmem:[%s1493 + $0x34] sm:$0xf]
        %v3986 = vld [vmem:[%s1493 + $0x38] sm:$0xf]
        %v3987 = vld [vmem:[%s1493 + $0x3c] sm:$0xf]
        %v3988 = vld [vmem:[%s1493 + $0x40] sm:$0xf]
        %v3989 = vld [vmem:[%s1493 + $0x44] sm:$0xf]
        %v3990 = vld [vmem:[%s1493 + $0x48] sm:$0xf]
        %v3991 = vld [vmem:[%s1493 + $0x4c] sm:$0xf]
        %v3992 = vld [vmem:[%s1493 + $0x50] sm:$0xf]
        %v3993 = vld [vmem:[%s1493 + $0x54] sm:$0xf]
        %v3994 = vld [vmem:[%s1493 + $0x58] sm:$0xf]
        %v3995 = vld [vmem:[%s1493 + $0x5c] sm:$0xf]
        %v3996 = vld [vmem:[%s1493 + $0x60] sm:$0xf]
        %v3997 = vld [vmem:[%s1493 + $0x64] sm:$0xf]
        %v3998 = vld [vmem:[%s1493 + $0x68] sm:$0xf]
        %v3999 = vld [vmem:[%s1493 + $0x6c] sm:$0xf]
        %v4000 = vld [vmem:[%s1493 + $0x70] sm:$0xf]
        %v4001 = vld [vmem:[%s1493 + $0x74] sm:$0xf]
        %v4002 = vld [vmem:[%s1493 + $0x78] sm:$0xf]
        %v4003 = vld [vmem:[%s1493 + $0x7c] sm:$0xf]
        %v4004 = vpack.c.bf16 %v3970, %v3968
        %v4005 = vpack.c.bf16 %v3971, %v3969
        %v4038 = vunpack.c.l.b16 %v3972
        %v4039 = vunpack.c.l.b16 %v3973
        %v4040 = vunpack.c.l.b16 %v3974
        %v4041 = vunpack.c.l.b16 %v3975
        %v4042 = vunpack.c.l.b16 %v3976
        %v4043 = vunpack.c.l.b16 %v3977
        %v4044 = vunpack.c.l.b16 %v3978
        %v4045 = vunpack.c.l.b16 %v3979
        %v4046 = vunpack.c.l.b16 %v3980
        %v4047 = vunpack.c.l.b16 %v3981
        %v4048 = vunpack.c.l.b16 %v3982
        %v4049 = vunpack.c.l.b16 %v3983
        %v4050 = vunpack.c.l.b16 %v3984
        %v4051 = vunpack.c.l.b16 %v3985
        %v4052 = vunpack.c.l.b16 %v3986
        %v4053 = vunpack.c.l.b16 %v3987
        %v4054 = vunpack.c.l.b16 %v3988
        %v4055 = vunpack.c.l.b16 %v3989
        %v4056 = vunpack.c.l.b16 %v3990
        %v4057 = vunpack.c.l.b16 %v3991
        %v4058 = vunpack.c.l.b16 %v3992
        %v4059 = vunpack.c.l.b16 %v3993
        %v4060 = vunpack.c.l.b16 %v3994
        %v4061 = vunpack.c.l.b16 %v3995
        %v4062 = vunpack.c.l.b16 %v3996
        %v4063 = vunpack.c.l.b16 %v3997
        %v4064 = vunpack.c.l.b16 %v3998
        %v4065 = vunpack.c.l.b16 %v3999
        %v4066 = vunpack.c.l.b16 %v4000
        %v4067 = vunpack.c.l.b16 %v4001
        %v4068 = vunpack.c.l.b16 %v4002
        %v4069 = vunpack.c.l.b16 %v4003
        %v4070 = vpack.c.b16 %v4039, %v4038
        %v4071 = vpack.c.b16 %v4041, %v4040
        %v4072 = vpack.c.b16 %v4043, %v4042
        %v4073 = vpack.c.b16 %v4045, %v4044
        %v4074 = vpack.c.b16 %v4047, %v4046
        %v4075 = vpack.c.b16 %v4049, %v4048
        %v4076 = vpack.c.b16 %v4051, %v4050
        %v4077 = vpack.c.b16 %v4053, %v4052
        %v4078 = vpack.c.b16 %v4055, %v4054
        %v4079 = vpack.c.b16 %v4057, %v4056
        %v4080 = vpack.c.b16 %v4059, %v4058
        %v4081 = vpack.c.b16 %v4061, %v4060
        %v4082 = vpack.c.b16 %v4063, %v4062
        %v4083 = vpack.c.b16 %v4065, %v4064
        %v4084 = vpack.c.b16 %v4067, %v4066
        %v4085 = vpack.c.b16 %v4069, %v4068
        %4102 = vmatpush.bf16.msra.mxu0 %v4077
        %4103 = vmatpush.bf16.msra.mxu0 %v4076
        %4104 = vmatpush.bf16.msra.mxu0 %v4075
        %4105 = vmatpush.bf16.msra.mxu0 %v4074
        %4106 = vmatpush.bf16.msra.mxu0 %v4073
        %4107 = vmatpush.bf16.msra.mxu0 %v4072
        %4108 = vmatpush.bf16.msra.mxu0 %v4071
        %4109 = vmatpush.bf16.msra.mxu0 %v4070
        %4110 = vmatmul.bf16.gmra.mxu0 %v4004
        %v4111 = vpop.f32.mrf.mxu0
        %v4112 = vadd.f32 0.0, %v4111
        %v4113 = vpop.f32.mrf.mxu0
        %v4114 = vadd.f32 0.0, %v4113
        %4115 = vdwg.mxu0
        %4116 = vmatpush.bf16.msra.mxu0 %v4085
        %4117 = vmatpush.bf16.msra.mxu0 %v4084
        %4118 = vmatpush.bf16.msra.mxu0 %v4083
        %4119 = vmatpush.bf16.msra.mxu0 %v4082
        %4120 = vmatpush.bf16.msra.mxu0 %v4081
        %4121 = vmatpush.bf16.msra.mxu0 %v4080
        %4122 = vmatpush.bf16.msra.mxu0 %v4079
        %4123 = vmatpush.bf16.msra.mxu0 %v4078
        %4124 = vmatmul.bf16.gmra.mxu0 %v4005
        %v4125 = vpop.f32.mrf.mxu0
        %v4126 = vadd.f32 %v4112, %v4125
        %v4127 = vpop.f32.mrf.mxu0
        %v4128 = vadd.f32 %v4114, %v4127
        %4129 = vdwg.mxu0
        %v4130 = vadd.f32 %v3835, %v4126
        %v4131 = vadd.f32 %v3836, %v4128
        %v4132 = vld [vmem:[%s1704] sm:$0x1]
        %v4134 = vperm.slane %v4132, 0
        %v4136 = vadd.f32 %v4130, %v4134
        %v4137 = vadd.f32 %v4131, %v4134
        %p4138 = scmp.ne.s32.totalorder %s80, 1
        // Predicated region
        $region225: #{tpu_custom_call.1} parent=147 // pred_check
          %p4139 = pneg %p4138
        $region226: #{tpu_custom_call.1} parent=147 // pred_check_branch
          %4141 = sbr.rel (%p4139) target = $region228
        $region227: #{tpu_custom_call.1} parent=147 // pred_region
          %4142 = vst [vmem:[#allocation24] sm:$0xff] %v4136
          %4143 = vst [vmem:[#allocation24 + $0x8] sm:$0xff] %v4137
        $region228: #{tpu_custom_call.1} parent=147 // pred_fallthru
          _
        %p4144 = scmp.eq.s32.totalorder %s80, 1
        // Predicated region
        $region229: #{tpu_custom_call.1} parent=147 // pred_check
          %p4145 = pneg %p4144
        $region230: #{tpu_custom_call.1} parent=147 // pred_check_branch
          %4147 = sbr.rel (%p4145) target = $region232
        $region231: #{tpu_custom_call.1} parent=147 // pred_region
          %v4148 = vld [vmem:[%s61] sm:$0x1]
          %v4149 = vld [vmem:[%s63] sm:$0x1]
          %4150 = vadd.xlane.f32.xlu0 %v4136
          %v4151 = vpop.xlane.xlu0 %4150
          %4152 = vadd.xlane.f32.xlu0 %v4137
          %v4153 = vpop.xlane.xlu0 %4152
          %v4154 = vmul.f32 %v4151, %v1732
          %v4155 = vmul.f32 %v4153, %v1732
          %v4156 = vsub.f32 %v4136, %v4154
          %v4157 = vsub.f32 %v4137, %v4155
          %v4158 = vmul.f32 %v4156, %v4156
          %v4159 = vmul.f32 %v4157, %v4157
          %4160 = vadd.xlane.f32.xlu0 %v4158
          %v4161 = vpop.xlane.xlu0 %4160
          %4162 = vadd.xlane.f32.xlu0 %v4159
          %v4163 = vpop.xlane.xlu0 %4162
          %v4164 = vmul.f32 %v4161, %v1732
          %v4165 = vmul.f32 %v4163, %v1732
          %v4166 = vadd.f32 %v4164, 1e-05
          %v4167 = vadd.f32 %v4165, 1e-05
          %v4168 = vrsqrt.pop %v4166
          %v4169 = vmul.f32 %v4168, %v4166
          %v4170 = vmul.f32 %v4169, %v4168
          %v4171 = vmul.f32 0.5, %v4170
          %v4172 = vsub.f32 1.5, %v4171
          %v4173 = vmul.f32 %v4168, %v4172
          %vm4174 = vweird.f32 %v4166
          %vm4175 = vweird.f32 %v4168
          %vm4176 = vmor %vm4174, %vm4175
          %v4177 = vsel %vm4176, %v4168, %v4173
          %v4178 = vrsqrt.pop %v4167
          %v4179 = vmul.f32 %v4178, %v4167
          %v4180 = vmul.f32 %v4179, %v4178
          %v4181 = vmul.f32 0.5, %v4180
          %v4182 = vsub.f32 1.5, %v4181
          %v4183 = vmul.f32 %v4178, %v4182
          %vm4184 = vweird.f32 %v4167
          %vm4185 = vweird.f32 %v4178
          %vm4186 = vmor %vm4184, %vm4185
          %v4187 = vsel %vm4186, %v4178, %v4183
          %v4188 = vmul.f32 %v4156, %v4177
          %v4189 = vmul.f32 %v4157, %v4187
          %v4191 = vperm.slane %v4148, 0
          %v4193 = vmul.f32 %v4188, %v4191
          %v4194 = vmul.f32 %v4189, %v4191
          %v4196 = vperm.slane %v4149, 0
          %v4198 = vadd.f32 %v4193, %v4196
          %v4199 = vadd.f32 %v4194, %v4196
          %4200 = vst [vmem:[#allocation24] sm:$0xff] %v4198
          %4201 = vst [vmem:[#allocation24 + $0x8] sm:$0xff] %v4199
        $region232: #{tpu_custom_call.1} parent=147 // pred_fallthru
          _
        // Predicated region
        $region233: #{tpu_custom_call.1} parent=147 // pred_check
          %p4202 = pneg %p895
        $region234: #{tpu_custom_call.1} parent=147 // pred_check_branch
          %4204 = sbr.rel (%p4202) target = $region236
        $region235: #{tpu_custom_call.1} parent=147 // pred_region
          %4206 = vsyncadd [#allocation4], 0
          %s4207 = sshll.u32 [#allocation24], 4
          %s4208 = int_to_ptr.vmem [resolvable:$true] %s4207
          %s4209 = sshll.u32 %s65, 4
          %s4210 = int_to_ptr.hbm [resolvable:$true] %s4209
          %4215 = dma.vmem_to_hbm [thread:$0]  %s4208, 256, %s4210, [#allocation4], 128, 128, 8
        $region236: #{tpu_custom_call.1} parent=147 // pred_fallthru
          _
        // Predicated region
        $region237: #{tpu_custom_call.1} parent=147 // pred_check
          %p4216 = pneg %p895
        $region238: #{tpu_custom_call.1} parent=147 // pred_check_branch
          %4218 = sbr.rel (%p4216) target = $region240
        $region239: #{tpu_custom_call.1} parent=147 // pred_region
          %4220 = dma.done [#allocation4], 256
        $region240: #{tpu_custom_call.1} parent=147 // pred_fallthru
          _
      $region148: #{tpu_custom_call.1} parent=5 // pred_fallthru
        _
      %p4221 = scmp.le.s32.totalorder 2, %s75
      // Predicated region
      $region241: #{tpu_custom_call.1} parent=5 // pred_check
        %p4222 = pneg %p4221
      $region242: #{tpu_custom_call.1} parent=5 // pred_check_branch
        %4224 = sbr.rel (%p4222) target = $region244
      $region243: #{tpu_custom_call.1} parent=5 // pred_region
        %s4225 = ssub.s32 %s75, 2
      $region244: #{tpu_custom_call.1} parent=5 // pred_fallthru
        _
    $region6: #{tpu_custom_call.1} parent=1 // loop_footer
      %s79 = sadd.s32 1, %s75
    $region7: #{tpu_custom_call.1} parent=1 // loop_footer_branch
      %74 = sbr.rel target = $region3
    $region8: #{tpu_custom_call.1} parent=1 // loop_exit
      _
    %4226 = vsyncpa [#allocation3], 1
    %s4227 = scalar_lea.sflag [#allocation3], 1
    %4228 = vsyncpa %s4227, 1
    %4229 = vsyncpa [#allocation6], 1
    %4230 = vsyncpa [#allocation9], 1
    %4231 = vsyncpa [#allocation4], 1
    %s4232 = scalar_lea.sflag [#allocation4], 1
    %4233 = vsyncpa %s4232, 1

</llo_original>
